<compile_context>
chip_gen: v7x
topology: tpu7x:2x2x1
jax: 0.10.0
libtpu: 0.0.40
codegen_flags: <defaults>
</compile_context>

<pallas_src>
import jax
import jax.numpy as jnp
from jax import lax
from jax.experimental import pallas as pl
from jax.experimental.pallas import tpu as pltpu


def _round_up(x, m):
    return ((x + m - 1) // m) * m


# ---------------- fused sample-context CNN + KNRM scoring kernel ----------------

def _sample_score_kernel(qe_ref, de_ref, qm_ref, dm_ref, w_ref, b_ref,
                         mu_ref, nis_ref, alpha_ref, bww_ref, bwb_ref, o_ref):
    BS, Qp = qm_ref.shape
    Ep = dm_ref.shape[1]
    H = b_ref.shape[1]

    def conv_relu_norm(x, S):
        # x: (BS*S, H) bf16, rows grouped per sample (length S each).
        # Conv1d(k=3) after ConstantPad1d((0,2)): out[t] = W0 x[t] + W1 x[t+1] + W2 x[t+2].
        M = x.shape[0]
        t0 = jnp.dot(x, w_ref[0], preferred_element_type=jnp.float32)
        u1 = jnp.dot(x, w_ref[1], preferred_element_type=jnp.float32)
        u2 = jnp.dot(x, w_ref[2], preferred_element_type=jnp.float32)
        # Shifted taps via XLU sublane rolls of the f32 outputs:
        #   roll(u, M-k, axis=0)[t] == u[t+k]  (jnp.roll semantics).
        # The wrap-around rows are exactly the positions masked by m1/m2 below, which also
        # reproduces the zero right-pad of the reference conv.
        t1 = pltpu.roll(u1, M - 1, 0)
        t2 = pltpu.roll(u2, M - 2, 0)
        t0 = t0.reshape(BS, S, H)
        t1 = t1.reshape(BS, S, H)
        t2 = t2.reshape(BS, S, H)
        pos = lax.broadcasted_iota(jnp.int32, (1, S, 1), 1)
        m1 = (pos < S - 1).astype(jnp.float32)
        m2 = (pos < S - 2).astype(jnp.float32)
        y = t0 + t1 * m1 + t2 * m2 + b_ref[...]             # Conv1d(k=3), pad=(0,2)
        y = jnp.maximum(y, 0.0)                              # ReLU
        nrm = jnp.sqrt(jnp.sum(y * y, axis=-1, keepdims=True))
        return y / jnp.maximum(nrm, 1e-12)                   # F.normalize(p=2, dim=-1)

    q_ctx = conv_relu_norm(qe_ref[...], Qp)                  # (BS, Qp, H) f32
    d_ctx = conv_relu_norm(de_ref[...], Ep)                  # (BS, Ep, H) f32

    # Batched cosine matrix (normalized vectors -> plain bmm).  Kept in f32 (review: bf16
    # error on cos is amplified by |cos - mu| / sigma^2 inside the Gaussian).
    cos = jnp.einsum('bqh,beh->bqe', q_ctx, d_ctx,
                     preferred_element_type=jnp.float32)     # (BS, Qp, Ep)
    # Single doc-mask select instead of 11 per-bin multiplies: exp of the huge negative
    # exponent underflows to exactly 0 at masked positions.
    cos = jnp.where(dm_ref[...][:, None, :] > 0.0, cos, -1e4)

    # Lane-dense Gaussian kernel pooling: static loop over the 11 bins, doc axis (Ep) stays
    # on the lane dimension.
    acc = jnp.zeros((BS, Qp), jnp.float32)
    for k in range(11):
        t = cos - mu_ref[k]
        ksum = jnp.sum(jnp.exp(t * t * nis_ref[k]), axis=2)  # (BS, Qp)
        acc = acc + jnp.log(jnp.maximum(ksum * alpha_ref[k], 1e-4)) * bww_ref[k]
    acc = acc * qm_ref[...]                                  # query mask, folded out of loop

    # Sum over query positions and transpose to a lane-dense (1, BS) row via the MXU.
    ones_q = jnp.ones((1, Qp), jnp.float32)
    score = lax.dot_general(ones_q, acc, (((1,), (1,)), ((), ())),
                            preferred_element_type=jnp.float32)    # (1, BS)
    o_ref[0] = score + bwb_ref[0]


def sample_patch_scores(q_emb, d_emb, q_mask, d_mask, params, BS):
    """q_emb:(Np,Qp,H) bf16  d_emb:(Np,Ep,H) bf16  masks:(Np,*) f32 -> (Np,) scores."""
    N_pad, Qp, H = q_emb.shape
    Ep = d_emb.shape[1]
    nblk = N_pad // BS
    qe = q_emb.reshape(N_pad * Qp, H)
    de = d_emb.reshape(N_pad * Ep, H)
    conv_w = params['conv_w'].astype(jnp.bfloat16)           # (3, H, H) [k, in, out]
    mu = params['mu'].reshape(-1)                            # (11,)
    neg_inv_2sig2 = (-0.5 / jnp.square(params['sigma'])).reshape(-1)
    alpha = params['kernel_alpha'].reshape(-1)
    bw_w = params['binweights_w'].reshape(-1)
    bw_b = params['binweights_b'].reshape(-1)
    smem = pl.BlockSpec(memory_space=pltpu.MemorySpace.SMEM)
    out = pl.pallas_call(
        _sample_score_kernel,
        out_shape=jax.ShapeDtypeStruct((nblk, 1, BS), jnp.float32),
        grid=(nblk,),
        in_specs=[
            pl.BlockSpec((BS * Qp, H), lambda n: (n, 0)),    # query embeddings (bf16)
            pl.BlockSpec((BS * Ep, H), lambda n: (n, 0)),    # doc embeddings (bf16)
            pl.BlockSpec((BS, Qp), lambda n: (n, 0)),        # query mask (f32)
            pl.BlockSpec((BS, Ep), lambda n: (n, 0)),        # doc mask (f32)
            pl.BlockSpec((3, H, H), lambda n: (0, 0, 0)),    # conv weights (bf16)
            pl.BlockSpec((1, H), lambda n: (0, 0)),          # conv bias (f32)
            smem, smem, smem, smem, smem,                    # flat 1-D scalar tables
        ],
        out_specs=pl.BlockSpec((1, 1, BS), lambda n: (n, 0, 0)),
        compiler_params=pltpu.CompilerParams(
            # TODO(synk): on v7x confirm the single "parallel" axis is actually sharded
            # across both TensorCores; if not, switch to CORE_PARALLEL / a leading core axis.
            dimension_semantics=("parallel",),
            vmem_limit_bytes=48 * 1024 * 1024),
    )(qe, de, q_mask, d_mask, conv_w, params['conv_b'],
      mu, neg_inv_2sig2, alpha, bw_w, bw_b)
    return out.reshape(-1)


# ---------------- (synthetic) BERT pooled representation + classification ----------------

def _bert_cls_kernel(emb_ref, m_ref, wb_ref, bb_ref, wc_ref, bc_ref, o_ref):
    emb = emb_ref[...]                                       # (BN, L, H) bf16
    m = m_ref[...]                                           # (BN, L) f32
    denom = jnp.maximum(jnp.sum(m, axis=1, keepdims=True), 1.0)
    # TODO(synk): review suggests einsum('blh,bl->bh') to bound the rank-3 live footprint;
    # kept as multiply+reduce here for robust Mosaic lowering at these shapes.
    ctx = jnp.sum(emb.astype(jnp.float32) * m[:, :, None], axis=1) / denom
    x0 = emb[:, 0, :].astype(jnp.float32)                    # CLS-position embedding
    h = jnp.tanh(jnp.dot((x0 + ctx).astype(jnp.bfloat16), wb_ref[...],
                         preferred_element_type=jnp.float32) + bb_ref[...])
    score = lax.dot_general(wc_ref[...], h, (((1,), (1,)), ((), ())),
                            preferred_element_type=jnp.float32)     # (1, BN)
    o_ref[0] = score + bc_ref[0]


def bert_cls_scores(cat_emb, cat_mask, params, BN):
    """cat_emb:(N2p,L,H) bf16, cat_mask:(N2p,L) f32 -> (N2p,) chunk scores."""
    N2p, L, H = cat_emb.shape
    nblk = N2p // BN
    out = pl.pallas_call(
        _bert_cls_kernel,
        out_shape=jax.ShapeDtypeStruct((nblk, 1, BN), jnp.float32),
        grid=(nblk,),
        in_specs=[pl.BlockSpec((BN, L, H), lambda i: (i, 0, 0)),
                  pl.BlockSpec((BN, L), lambda i: (i, 0)),
                  pl.BlockSpec((H, H), lambda i: (0, 0)),
                  pl.BlockSpec((1, H), lambda i: (0, 0)),
                  pl.BlockSpec((1, H), lambda i: (0, 0)),
                  pl.BlockSpec(memory_space=pltpu.MemorySpace.SMEM)],   # cls bias (1,)
        out_specs=pl.BlockSpec((1, 1, BN), lambda i: (i, 0, 0)),
        compiler_params=pltpu.CompilerParams(
            dimension_semantics=("parallel",),
            # NOTE: at real DistilBERT sizes (H=768, L~Q+ext) cap BN (~32 on v7x) so the
            # (BN,L,H) block stays double-bufferable inside this limit.
            vmem_limit_bytes=48 * 1024 * 1024),
    )(cat_emb, cat_mask, params['bert_wb'].astype(jnp.bfloat16), params['bert_bb'],
      params['cls_w'], params['cls_b'].reshape(-1))
    return out.reshape(-1)


# ------------------------------- glue (JAX, fully jittable) --------------------------------

def bert_embeddings(ids, params):
    """DistilBERT-style embeddings: word + position, then LayerNorm."""
    L = ids.shape[1]
    x = params['word_emb'][ids] + params['pos_emb'][:L][None, :, :]
    m = jnp.mean(x, axis=-1, keepdims=True)
    v = jnp.mean(jnp.square(x - m), axis=-1, keepdims=True)
    return (x - m) / jnp.sqrt(v + 1e-12) * params['ln_g'] + params['ln_b']


def bert_patch_forward(params, query_ids, query_mask, doc_token_ids,
                       chunk_size, overlap, sample_n, top_k_chunks, padding_idx=0):
    """Eval-mode Bert_patch forward (sample_context='ck', no cache, no mult-pos)."""
    ext = chunk_size + 2 * overlap
    document_ids = doc_token_ids[:, 1:]
    doc_len = document_ids.shape[1]
    if doc_len > overlap:
        needed_padding = ext - (doc_len % chunk_size - overlap)
    else:
        needed_padding = ext - overlap - doc_len
    document_ids = jnp.pad(document_ids, ((0, 0), (overlap, needed_padding)),
                           constant_values=padding_idx)
    total_len = document_ids.shape[1]
    P = (total_len - ext) // chunk_size + 1
    chunked_ids = jnp.stack(
        [document_ids[:, s * chunk_size: s * chunk_size + ext] for s in range(P)],
        axis=1)                                               # unfold -> (B, P, ext)
    B = chunked_ids.shape[0]
    N = B * P
    chunked_unrolled = chunked_ids.reshape(N, ext)
    packed_indices = jnp.any(chunked_unrolled[:, overlap:-overlap] != padding_idx,
                             axis=-1)                         # (N,) bool, fixed shape

    Q = query_ids.shape[1]
    q_ids_exp = jnp.broadcast_to(query_ids[:, None, :], (B, P, Q)).reshape(N, Q)
    q_mask_exp = jnp.broadcast_to(query_mask[:, None, :], (B, P, Q)
                                  ).reshape(N, Q).astype(jnp.float32)
    d_mask = (chunked_unrolled != padding_idx).astype(jnp.float32)

    # fixed-shape padding: sequence dims to multiples of 8, chunk dim to BS-sized blocks
    Qp, Ep = _round_up(Q, 8), _round_up(ext, 8)
    BS = min(128, _round_up(N, 8))                            # lane-dense output rows
    N_pad = _round_up(N, BS)

    q_ids_p = jnp.pad(q_ids_exp, ((0, N_pad - N), (0, Qp - Q)),
                      constant_values=padding_idx)
    d_ids_p = jnp.pad(chunked_unrolled, ((0, N_pad - N), (0, Ep - ext)),
                      constant_values=padding_idx)
    q_mask_p = jnp.pad(q_mask_exp, ((0, N_pad - N), (0, Qp - Q)))
    d_mask_p = jnp.pad(d_mask, ((0, N_pad - N), (0, Ep - ext)))

    # rows beyond the original lengths are zeroed so the in-kernel conv sees the same zeros
    # as ConstantPad1d((0,2)); embeddings ship as bf16 (only used as bf16 MXU operands).
    q_emb = (bert_embeddings(q_ids_p, params)
             * (jnp.arange(Qp) < Q)[None, :, None]).astype(jnp.bfloat16)
    d_emb = (bert_embeddings(d_ids_p, params)
             * (jnp.arange(Ep) < ext)[None, :, None]).astype(jnp.bfloat16)

    # ---- fused CNN-context + KNRM kernel pooling + sampling_binweights (Pallas) ----
    sampling_all = sample_patch_scores(q_emb, d_emb, q_mask_p, d_mask_p, params, BS)[:N]
    sampling_all = jnp.where(packed_indices, sampling_all, 0.0)
    sampling_scores = sampling_all.reshape(B, P)
    sampling_scores_orig = sampling_scores

    masked_sampling = jnp.where(sampling_scores == 0, -9000.0, sampling_scores)
    sort_idx = jnp.argsort(-masked_sampling, axis=-1)
    sampled_flat = (sort_idx[:, :sample_n] + (jnp.arange(B) * P)[:, None]).reshape(-1)
    sampled_indices_mask = jnp.zeros((N,), bool).at[sampled_flat].set(True)

    # ---- BERT part: fixed-shape gather of the top sample_n chunks per document ----
    N2 = sampled_flat.shape[0]
    sel_d_ids = jnp.take(chunked_unrolled, sampled_flat, axis=0)
    sel_d_mask = (sel_d_ids != padding_idx).astype(jnp.float32)
    sel_q_ids = jnp.take(q_ids_exp, sampled_flat, axis=0)
    sel_q_mask = jnp.take(q_mask_exp, sampled_flat, axis=0)
    cat_ids = jnp.concatenate([sel_q_ids, sel_d_ids], axis=1)
    cat_mask = jnp.concatenate([sel_q_mask, sel_d_mask], axis=1)

    BN = min(128, _round_up(N2, 8))
    N2_pad = _round_up(N2, BN)
    cat_ids = jnp.pad(cat_ids, ((0, N2_pad - N2), (0, 0)), constant_values=padding_idx)
    cat_mask = jnp.pad(cat_mask, ((0, N2_pad - N2), (0, 0)))
    # TODO(synk): the pretrained (Distil)BERT transformer stack is replaced here by a
    # deterministic synthetic pooled representation (masked-mean mix + tanh projection).
    cat_emb = bert_embeddings(cat_ids, params).astype(jnp.bfloat16)
    bert_sel = bert_cls_scores(cat_emb, cat_mask, params, BN)[:N2]

    scores_all = jnp.zeros((N,), jnp.float32).at[sampled_flat].set(bert_sel)
    scores_all = jnp.where(packed_indices, scores_all, 0.0)   # sampled AND packed only
    scores_per_doc = scores_all.reshape(B, P)
    scores_per_doc_orig = scores_per_doc

    # sample_n > -1 and not gumbel: keep only sampled chunks
    scores_per_doc = scores_per_doc * sampled_indices_mask.reshape(B, P).astype(jnp.float32)
    if P < top_k_chunks:
        scores_per_doc = jnp.pad(scores_per_doc, ((0, 0), (0, top_k_chunks - P)))
    scores_per_doc = jnp.where(scores_per_doc == 0, -9000.0, scores_per_doc)
    score_sorted = -jnp.sort(-scores_per_doc, axis=-1)         # sort descending
    score_sorted = jnp.where(score_sorted <= -8900.0, 0.0, score_sorted)
    score = jnp.sum(score_sorted[:, :top_k_chunks] * params['top_k_scoring'], axis=1)

    return (score, scores_per_doc_orig, sampling_scores_orig,
            packed_indices.reshape(B, P))


# --------------------------------- main -------------------------------------

if __name__ == "__main__":
    key = jax.random.PRNGKey(0)
    V, H, MAXPOS = 64, 32, 64                 # vocab, hidden (bert_model.config.dim)
    chunk_size, overlap, sample_n, top_k = 8, 2, 1, 3
    B, QLEN, DLEN = 2, 8, 21
    keys = jax.random.split(key, 12)

    params = {
        'word_emb': 0.02 * jax.random.normal(keys[0], (V, H), jnp.float32),
        'pos_emb': 0.02 * jax.random.normal(keys[1], (MAXPOS, H), jnp.float32),
        'ln_g': jnp.ones((H,), jnp.float32),
        'ln_b': jnp.zeros((H,), jnp.float32),
        # Conv1d weights pre-arranged as [k, in, out]
        'conv_w': 0.05 * jax.random.normal(keys[2], (3, H, H), jnp.float32),
        'conv_b': 0.05 * jax.random.normal(keys[3], (1, H), jnp.float32),
        'binweights_w': jax.random.uniform(keys[4], (1, 11), jnp.float32, -0.01, 0.01),
        'binweights_b': jax.random.uniform(keys[5], (1, 1), jnp.float32, -0.3, 0.3),
        'kernel_alpha': jnp.ones((1, 11), jnp.float32),
        'mu': jnp.array([[1.0, 0.9, 0.7, 0.5, 0.3, 0.1, -0.1, -0.3, -0.5, -0.7, -0.9]],
                        jnp.float32),
        'sigma': jnp.full((1, 11), 0.1, jnp.float32),
        'bert_wb': 0.05 * jax.random.normal(keys[6], (H, H), jnp.float32),
        'bert_bb': 0.05 * jax.random.normal(keys[7], (1, H), jnp.float32),
        'cls_w': 0.1 * jax.random.normal(keys[8], (1, H), jnp.float32),
        'cls_b': 0.1 * jax.random.normal(keys[9], (1, 1), jnp.float32),
        'top_k_scoring': jnp.ones((1, top_k), jnp.float32),
    }

    query_ids = jax.random.randint(keys[10], (B, QLEN), 1, V).astype(jnp.int32)
    query_mask = jnp.ones((B, QLEN), jnp.float32)
    doc_ids = jax.random.randint(keys[11], (B, DLEN), 1, V).astype(jnp.int32)
    lengths = jnp.array([21, 13])                               # variable doc lengths
    doc_ids = jnp.where(jnp.arange(DLEN)[None, :] < lengths[:, None], doc_ids, 0)

    fwd = jax.jit(bert_patch_forward,
                  static_argnames=('chunk_size', 'overlap', 'sample_n',
                                   'top_k_chunks', 'padding_idx'))
    score, bert_scores, sampling_scores, packed = fwd(
        params, query_ids, query_mask, doc_ids,
        chunk_size=chunk_size, overlap=overlap,
        sample_n=sample_n, top_k_chunks=top_k)
    jax.block_until_ready(score)
    print("KERNEL_OK")
</pallas_src>

<mosaic_0001>
module attributes {stable_mosaic.version = 11 : i64} {
  func.func @_sample_score_kernel(%arg0: i32, %arg1: memref<64x32xbf16, #tpu.memory_space<vmem>>, %arg2: memref<128x32xbf16, #tpu.memory_space<vmem>>, %arg3: memref<8x8xf32, #tpu.memory_space<vmem>>, %arg4: memref<8x16xf32, #tpu.memory_space<vmem>>, %arg5: memref<3x32x32xbf16, #tpu.memory_space<vmem>>, %arg6: memref<1x32xf32, #tpu.memory_space<vmem>>, %arg7: memref<11xf32, #tpu.memory_space<smem>>, %arg8: memref<11xf32, #tpu.memory_space<smem>>, %arg9: memref<11xf32, #tpu.memory_space<smem>>, %arg10: memref<11xf32, #tpu.memory_space<smem>>, %arg11: memref<1xf32, #tpu.memory_space<smem>>, %arg12: memref<1x1x8xf32, #tpu.memory_space<vmem>>) attributes {dimension_semantics = [#tpu.dimension_semantics<parallel>], iteration_bounds = array<i64: 1>, scalar_prefetch = 0 : i64, scratch_operands = 0 : i64, tpu.core_type = #tpu.core_type<tc>, window_params = [{transform_indices = @transform_0, window_bounds = array<i64: 64, 32>}, {transform_indices = @transform_1, window_bounds = array<i64: 128, 32>}, {transform_indices = @transform_2, window_bounds = array<i64: 8, 8>}, {transform_indices = @transform_3, window_bounds = array<i64: 8, 16>}, {pipeline_mode = #tpu.pipeline_mode<synchronous>, transform_indices = @transform_4, window_bounds = array<i64: 3, 32, 32>}, {pipeline_mode = #tpu.pipeline_mode<synchronous>, transform_indices = @transform_5, window_bounds = array<i64: 1, 32>}, {transform_indices = @transform_6, window_bounds = array<i64: 11>}, {transform_indices = @transform_7, window_bounds = array<i64: 11>}, {transform_indices = @transform_8, window_bounds = array<i64: 11>}, {transform_indices = @transform_9, window_bounds = array<i64: 11>}, {transform_indices = @transform_10, window_bounds = array<i64: 1>}, {transform_indices = @transform_11, window_bounds = array<i64: 1, 1, 8>}]} {
    %c0 = arith.constant 0 : index
    %c0_0 = arith.constant 0 : index
    %0 = vector.load %arg1[%c0, %c0_0] : memref<64x32xbf16, #tpu.memory_space<vmem>>, vector<64x32xbf16>
    %c0_1 = arith.constant 0 : index
    %c0_2 = arith.constant 0 : index
    %c0_3 = arith.constant 0 : index
    %1 = vector.load %arg5[%c0_1, %c0_2, %c0_3] : memref<3x32x32xbf16, #tpu.memory_space<vmem>>, vector<1x32x32xbf16>
    %2 = vector.shape_cast %1 : vector<1x32x32xbf16> to vector<32x32xbf16>
    %cst = arith.constant dense<0.000000e+00> : vector<64x32xf32>
    %3 = tpu.matmul %0, %2, %cst {dimension_numbers = #tpu.dot_dimension_numbers<[1], [0], [0], [1], [0, 0, 1, 1], [], []>} : vector<64x32xbf16>, vector<32x32xbf16>, vector<64x32xf32> -> vector<64x32xf32>
    %c1 = arith.constant 1 : index
    %c0_4 = arith.constant 0 : index
    %c0_5 = arith.constant 0 : index
    %4 = vector.load %arg5[%c1, %c0_4, %c0_5] : memref<3x32x32xbf16, #tpu.memory_space<vmem>>, vector<1x32x32xbf16>
    %5 = vector.shape_cast %4 : vector<1x32x32xbf16> to vector<32x32xbf16>
    %cst_6 = arith.constant dense<0.000000e+00> : vector<64x32xf32>
    %6 = tpu.matmul %0, %5, %cst_6 {dimension_numbers = #tpu.dot_dimension_numbers<[1], [0], [0], [1], [0, 0, 1, 1], [], []>} : vector<64x32xbf16>, vector<32x32xbf16>, vector<64x32xf32> -> vector<64x32xf32>
    %c2 = arith.constant 2 : index
    %c0_7 = arith.constant 0 : index
    %c0_8 = arith.constant 0 : index
    %7 = vector.load %arg5[%c2, %c0_7, %c0_8] : memref<3x32x32xbf16, #tpu.memory_space<vmem>>, vector<1x32x32xbf16>
    %8 = vector.shape_cast %7 : vector<1x32x32xbf16> to vector<32x32xbf16>
    %cst_9 = arith.constant dense<0.000000e+00> : vector<64x32xf32>
    %9 = tpu.matmul %0, %8, %cst_9 {dimension_numbers = #tpu.dot_dimension_numbers<[1], [0], [0], [1], [0, 0, 1, 1], [], []>} : vector<64x32xbf16>, vector<32x32xbf16>, vector<64x32xf32> -> vector<64x32xf32>
    %c63_i32 = arith.constant 63 : i32
    %10 = tpu.dynamic_rotate %6 by %c63_i32 dim 0 : vector<64x32xf32>, i32 -> vector<64x32xf32>
    %c62_i32 = arith.constant 62 : i32
    %11 = tpu.dynamic_rotate %9 by %c62_i32 dim 0 : vector<64x32xf32>, i32 -> vector<64x32xf32>
    %12 = vector.shape_cast %3 : vector<64x32xf32> to vector<8x8x32xf32>
    %13 = vector.shape_cast %10 : vector<64x32xf32> to vector<8x8x32xf32>
    %14 = vector.shape_cast %11 : vector<64x32xf32> to vector<8x8x32xf32>
    %15 = tpu.iota {dimensions = array<i32: 1>} : vector<1x8x1xi32>
    %c7_i32 = arith.constant 7 : i32
    %16 = vector.broadcast %c7_i32 : i32 to vector<1x8x1xi32>
    %17 = arith.cmpi slt, %15, %16 : vector<1x8x1xi32>
    %18 = arith.extui %17 : vector<1x8x1xi1> to vector<1x8x1xi32>
    %19 = arith.sitofp %18 : vector<1x8x1xi32> to vector<1x8x1xf32>
    %c6_i32 = arith.constant 6 : i32
    %20 = vector.broadcast %c6_i32 : i32 to vector<1x8x1xi32>
    %21 = arith.cmpi slt, %15, %20 : vector<1x8x1xi32>
    %22 = arith.extui %21 : vector<1x8x1xi1> to vector<1x8x1xi32>
    %23 = arith.sitofp %22 : vector<1x8x1xi32> to vector<1x8x1xf32>
    %24 = vector.broadcast %19 : vector<1x8x1xf32> to vector<8x8x32xf32>
    %25 = arith.mulf %13, %24 : vector<8x8x32xf32>
    %26 = arith.addf %12, %25 : vector<8x8x32xf32>
    %27 = vector.broadcast %23 : vector<1x8x1xf32> to vector<8x8x32xf32>
    %28 = arith.mulf %14, %27 : vector<8x8x32xf32>
    %29 = arith.addf %26, %28 : vector<8x8x32xf32>
    %c0_10 = arith.constant 0 : index
    %c0_11 = arith.constant 0 : index
    %30 = vector.load %arg6[%c0_10, %c0_11] : memref<1x32xf32, #tpu.memory_space<vmem>>, vector<1x32xf32>
    %31 = vector.shape_cast %30 : vector<1x32xf32> to vector<1x1x32xf32>
    %32 = vector.broadcast %31 : vector<1x1x32xf32> to vector<8x8x32xf32>
    %33 = arith.addf %29, %32 : vector<8x8x32xf32>
    %cst_12 = arith.constant 0.000000e+00 : f32
    %34 = vector.broadcast %cst_12 : f32 to vector<8x8x32xf32>
    %35 = arith.maximumf %33, %34 : vector<8x8x32xf32>
    %36 = arith.mulf %35, %35 : vector<8x8x32xf32>
    %cst_13 = arith.constant dense<0.000000e+00> : vector<8x8xf32>
    %37 = vector.multi_reduction <add>, %36, %cst_13 [2] : vector<8x8x32xf32> to vector<8x8xf32>
    %38 = vector.shape_cast %37 : vector<8x8xf32> to vector<8x8x1xf32>
    %39 = math.sqrt %38 : vector<8x8x1xf32>
    %cst_14 = arith.constant 9.99999996E-13 : f32
    %40 = vector.broadcast %cst_14 : f32 to vector<8x8x1xf32>
    %41 = arith.maximumf %39, %40 : vector<8x8x1xf32>
    %42 = vector.broadcast %41 : vector<8x8x1xf32> to vector<8x8x32xf32>
    %43 = arith.divf %35, %42 : vector<8x8x32xf32>
    %c0_15 = arith.constant 0 : index
    %c0_16 = arith.constant 0 : index
    %44 = vector.load %arg2[%c0_15, %c0_16] : memref<128x32xbf16, #tpu.memory_space<vmem>>, vector<128x32xbf16>
    %c0_17 = arith.constant 0 : index
    %c0_18 = arith.constant 0 : index
    %c0_19 = arith.constant 0 : index
    %45 = vector.load %arg5[%c0_17, %c0_18, %c0_19] : memref<3x32x32xbf16, #tpu.memory_space<vmem>>, vector<1x32x32xbf16>
    %46 = vector.shape_cast %45 : vector<1x32x32xbf16> to vector<32x32xbf16>
    %cst_20 = arith.constant dense<0.000000e+00> : vector<128x32xf32>
    %47 = tpu.matmul %44, %46, %cst_20 {dimension_numbers = #tpu.dot_dimension_numbers<[1], [0], [0], [1], [0, 0, 1, 1], [], []>} : vector<128x32xbf16>, vector<32x32xbf16>, vector<128x32xf32> -> vector<128x32xf32>
    %c1_21 = arith.constant 1 : index
    %c0_22 = arith.constant 0 : index
    %c0_23 = arith.constant 0 : index
    %48 = vector.load %arg5[%c1_21, %c0_22, %c0_23] : memref<3x32x32xbf16, #tpu.memory_space<vmem>>, vector<1x32x32xbf16>
    %49 = vector.shape_cast %48 : vector<1x32x32xbf16> to vector<32x32xbf16>
    %cst_24 = arith.constant dense<0.000000e+00> : vector<128x32xf32>
    %50 = tpu.matmul %44, %49, %cst_24 {dimension_numbers = #tpu.dot_dimension_numbers<[1], [0], [0], [1], [0, 0, 1, 1], [], []>} : vector<128x32xbf16>, vector<32x32xbf16>, vector<128x32xf32> -> vector<128x32xf32>
    %c2_25 = arith.constant 2 : index
    %c0_26 = arith.constant 0 : index
    %c0_27 = arith.constant 0 : index
    %51 = vector.load %arg5[%c2_25, %c0_26, %c0_27] : memref<3x32x32xbf16, #tpu.memory_space<vmem>>, vector<1x32x32xbf16>
    %52 = vector.shape_cast %51 : vector<1x32x32xbf16> to vector<32x32xbf16>
    %cst_28 = arith.constant dense<0.000000e+00> : vector<128x32xf32>
    %53 = tpu.matmul %44, %52, %cst_28 {dimension_numbers = #tpu.dot_dimension_numbers<[1], [0], [0], [1], [0, 0, 1, 1], [], []>} : vector<128x32xbf16>, vector<32x32xbf16>, vector<128x32xf32> -> vector<128x32xf32>
    %c127_i32 = arith.constant 127 : i32
    %54 = tpu.dynamic_rotate %50 by %c127_i32 dim 0 : vector<128x32xf32>, i32 -> vector<128x32xf32>
    %c126_i32 = arith.constant 126 : i32
    %55 = tpu.dynamic_rotate %53 by %c126_i32 dim 0 : vector<128x32xf32>, i32 -> vector<128x32xf32>
    %56 = vector.shape_cast %47 : vector<128x32xf32> to vector<8x16x32xf32>
    %57 = vector.shape_cast %54 : vector<128x32xf32> to vector<8x16x32xf32>
    %58 = vector.shape_cast %55 : vector<128x32xf32> to vector<8x16x32xf32>
    %59 = tpu.iota {dimensions = array<i32: 1>} : vector<1x16x1xi32>
    %c15_i32 = arith.constant 15 : i32
    %60 = vector.broadcast %c15_i32 : i32 to vector<1x16x1xi32>
    %61 = arith.cmpi slt, %59, %60 : vector<1x16x1xi32>
    %62 = arith.extui %61 : vector<1x16x1xi1> to vector<1x16x1xi32>
    %63 = arith.sitofp %62 : vector<1x16x1xi32> to vector<1x16x1xf32>
    %c14_i32 = arith.constant 14 : i32
    %64 = vector.broadcast %c14_i32 : i32 to vector<1x16x1xi32>
    %65 = arith.cmpi slt, %59, %64 : vector<1x16x1xi32>
    %66 = arith.extui %65 : vector<1x16x1xi1> to vector<1x16x1xi32>
    %67 = arith.sitofp %66 : vector<1x16x1xi32> to vector<1x16x1xf32>
    %68 = vector.broadcast %63 : vector<1x16x1xf32> to vector<8x16x32xf32>
    %69 = arith.mulf %57, %68 : vector<8x16x32xf32>
    %70 = arith.addf %56, %69 : vector<8x16x32xf32>
    %71 = vector.broadcast %67 : vector<1x16x1xf32> to vector<8x16x32xf32>
    %72 = arith.mulf %58, %71 : vector<8x16x32xf32>
    %73 = arith.addf %70, %72 : vector<8x16x32xf32>
    %c0_29 = arith.constant 0 : index
    %c0_30 = arith.constant 0 : index
    %74 = vector.load %arg6[%c0_29, %c0_30] : memref<1x32xf32, #tpu.memory_space<vmem>>, vector<1x32xf32>
    %75 = vector.shape_cast %74 : vector<1x32xf32> to vector<1x1x32xf32>
    %76 = vector.broadcast %75 : vector<1x1x32xf32> to vector<8x16x32xf32>
    %77 = arith.addf %73, %76 : vector<8x16x32xf32>
    %cst_31 = arith.constant 0.000000e+00 : f32
    %78 = vector.broadcast %cst_31 : f32 to vector<8x16x32xf32>
    %79 = arith.maximumf %77, %78 : vector<8x16x32xf32>
    %80 = arith.mulf %79, %79 : vector<8x16x32xf32>
    %cst_32 = arith.constant dense<0.000000e+00> : vector<8x16xf32>
    %81 = vector.multi_reduction <add>, %80, %cst_32 [2] : vector<8x16x32xf32> to vector<8x16xf32>
    %82 = vector.shape_cast %81 : vector<8x16xf32> to vector<8x16x1xf32>
    %83 = math.sqrt %82 : vector<8x16x1xf32>
    %cst_33 = arith.constant 9.99999996E-13 : f32
    %84 = vector.broadcast %cst_33 : f32 to vector<8x16x1xf32>
    %85 = arith.maximumf %83, %84 : vector<8x16x1xf32>
    %86 = vector.broadcast %85 : vector<8x16x1xf32> to vector<8x16x32xf32>
    %87 = arith.divf %79, %86 : vector<8x16x32xf32>
    "tpu.trace_start"() <{level = 10 : i32, message = "bqh,beh->bqe"}> : () -> ()
    %cst_34 = arith.constant dense<0.000000e+00> : vector<8x8x16xf32>
    %88 = tpu.matmul %43, %87, %cst_34 {dimension_numbers = #tpu.dot_dimension_numbers<[2], [2], [1], [1], [0, 0, 0, 1, 1, 1], [0], [0]>} : vector<8x8x32xf32>, vector<8x16x32xf32>, vector<8x8x16xf32> -> vector<8x8x16xf32>
    "tpu.trace_stop"() : () -> ()
    %c0_35 = arith.constant 0 : index
    %c0_36 = arith.constant 0 : index
    %89 = vector.load %arg4[%c0_35, %c0_36] : memref<8x16xf32, #tpu.memory_space<vmem>>, vector<8x16xf32>
    %90 = vector.shape_cast %89 : vector<8x16xf32> to vector<8x1x16xf32>
    %cst_37 = arith.constant 0.000000e+00 : f32
    %91 = vector.broadcast %cst_37 : f32 to vector<8x1x16xf32>
    %92 = arith.cmpf ogt, %90, %91 : vector<8x1x16xf32>
    %cst_38 = arith.constant -1.000000e+04 : f32
    %93 = vector.shape_cast %92 : vector<8x1x16xi1> to vector<8x1x16xi1>
    %94 = vector.broadcast %93 : vector<8x1x16xi1> to vector<8x8x16xi1>
    %95 = vector.broadcast %cst_38 : f32 to vector<8x8x16xf32>
    %96 = arith.select %94, %88, %95 : vector<8x8x16xi1>, vector<8x8x16xf32>
    %cst_39 = arith.constant 0.000000e+00 : f32
    %97 = vector.broadcast %cst_39 : f32 to vector<8x8xf32>
    %c0_40 = arith.constant 0 : index
    %98 = memref.load %arg7[%c0_40] : memref<11xf32, #tpu.memory_space<smem>>
    %99 = vector.broadcast %98 : f32 to vector<8x8x16xf32>
    %100 = arith.subf %96, %99 : vector<8x8x16xf32>
    %101 = arith.mulf %100, %100 : vector<8x8x16xf32>
    %c0_41 = arith.constant 0 : index
    %102 = memref.load %arg8[%c0_41] : memref<11xf32, #tpu.memory_space<smem>>
    %103 = vector.broadcast %102 : f32 to vector<8x8x16xf32>
    %104 = arith.mulf %101, %103 : vector<8x8x16xf32>
    %105 = math.exp %104 : vector<8x8x16xf32>
    %cst_42 = arith.constant dense<0.000000e+00> : vector<8x8xf32>
    %106 = vector.multi_reduction <add>, %105, %cst_42 [2] : vector<8x8x16xf32> to vector<8x8xf32>
    %c0_43 = arith.constant 0 : index
    %107 = memref.load %arg9[%c0_43] : memref<11xf32, #tpu.memory_space<smem>>
    %108 = vector.broadcast %107 : f32 to vector<8x8xf32>
    %109 = arith.mulf %106, %108 : vector<8x8xf32>
    %cst_44 = arith.constant 9.99999974E-5 : f32
    %110 = vector.broadcast %cst_44 : f32 to vector<8x8xf32>
    %111 = arith.maximumf %109, %110 : vector<8x8xf32>
    %112 = math.log %111 : vector<8x8xf32>
    %c0_45 = arith.constant 0 : index
    %113 = memref.load %arg10[%c0_45] : memref<11xf32, #tpu.memory_space<smem>>
    %114 = vector.broadcast %113 : f32 to vector<8x8xf32>
    %115 = arith.mulf %112, %114 : vector<8x8xf32>
    %116 = arith.addf %97, %115 : vector<8x8xf32>
    %c1_46 = arith.constant 1 : index
    %117 = memref.load %arg7[%c1_46] : memref<11xf32, #tpu.memory_space<smem>>
    %118 = vector.broadcast %117 : f32 to vector<8x8x16xf32>
    %119 = arith.subf %96, %118 : vector<8x8x16xf32>
    %120 = arith.mulf %119, %119 : vector<8x8x16xf32>
    %c1_47 = arith.constant 1 : index
    %121 = memref.load %arg8[%c1_47] : memref<11xf32, #tpu.memory_space<smem>>
    %122 = vector.broadcast %121 : f32 to vector<8x8x16xf32>
    %123 = arith.mulf %120, %122 : vector<8x8x16xf32>
    %124 = math.exp %123 : vector<8x8x16xf32>
    %cst_48 = arith.constant dense<0.000000e+00> : vector<8x8xf32>
    %125 = vector.multi_reduction <add>, %124, %cst_48 [2] : vector<8x8x16xf32> to vector<8x8xf32>
    %c1_49 = arith.constant 1 : index
    %126 = memref.load %arg9[%c1_49] : memref<11xf32, #tpu.memory_space<smem>>
    %127 = vector.broadcast %126 : f32 to vector<8x8xf32>
    %128 = arith.mulf %125, %127 : vector<8x8xf32>
    %cst_50 = arith.constant 9.99999974E-5 : f32
    %129 = vector.broadcast %cst_50 : f32 to vector<8x8xf32>
    %130 = arith.maximumf %128, %129 : vector<8x8xf32>
    %131 = math.log %130 : vector<8x8xf32>
    %c1_51 = arith.constant 1 : index
    %132 = memref.load %arg10[%c1_51] : memref<11xf32, #tpu.memory_space<smem>>
    %133 = vector.broadcast %132 : f32 to vector<8x8xf32>
    %134 = arith.mulf %131, %133 : vector<8x8xf32>
    %135 = arith.addf %116, %134 : vector<8x8xf32>
    %c2_52 = arith.constant 2 : index
    %136 = memref.load %arg7[%c2_52] : memref<11xf32, #tpu.memory_space<smem>>
    %137 = vector.broadcast %136 : f32 to vector<8x8x16xf32>
    %138 = arith.subf %96, %137 : vector<8x8x16xf32>
    %139 = arith.mulf %138, %138 : vector<8x8x16xf32>
    %c2_53 = arith.constant 2 : index
    %140 = memref.load %arg8[%c2_53] : memref<11xf32, #tpu.memory_space<smem>>
    %141 = vector.broadcast %140 : f32 to vector<8x8x16xf32>
    %142 = arith.mulf %139, %141 : vector<8x8x16xf32>
    %143 = math.exp %142 : vector<8x8x16xf32>
    %cst_54 = arith.constant dense<0.000000e+00> : vector<8x8xf32>
    %144 = vector.multi_reduction <add>, %143, %cst_54 [2] : vector<8x8x16xf32> to vector<8x8xf32>
    %c2_55 = arith.constant 2 : index
    %145 = memref.load %arg9[%c2_55] : memref<11xf32, #tpu.memory_space<smem>>
    %146 = vector.broadcast %145 : f32 to vector<8x8xf32>
    %147 = arith.mulf %144, %146 : vector<8x8xf32>
    %cst_56 = arith.constant 9.99999974E-5 : f32
    %148 = vector.broadcast %cst_56 : f32 to vector<8x8xf32>
    %149 = arith.maximumf %147, %148 : vector<8x8xf32>
    %150 = math.log %149 : vector<8x8xf32>
    %c2_57 = arith.constant 2 : index
    %151 = memref.load %arg10[%c2_57] : memref<11xf32, #tpu.memory_space<smem>>
    %152 = vector.broadcast %151 : f32 to vector<8x8xf32>
    %153 = arith.mulf %150, %152 : vector<8x8xf32>
    %154 = arith.addf %135, %153 : vector<8x8xf32>
    %c3 = arith.constant 3 : index
    %155 = memref.load %arg7[%c3] : memref<11xf32, #tpu.memory_space<smem>>
    %156 = vector.broadcast %155 : f32 to vector<8x8x16xf32>
    %157 = arith.subf %96, %156 : vector<8x8x16xf32>
    %158 = arith.mulf %157, %157 : vector<8x8x16xf32>
    %c3_58 = arith.constant 3 : index
    %159 = memref.load %arg8[%c3_58] : memref<11xf32, #tpu.memory_space<smem>>
    %160 = vector.broadcast %159 : f32 to vector<8x8x16xf32>
    %161 = arith.mulf %158, %160 : vector<8x8x16xf32>
    %162 = math.exp %161 : vector<8x8x16xf32>
    %cst_59 = arith.constant dense<0.000000e+00> : vector<8x8xf32>
    %163 = vector.multi_reduction <add>, %162, %cst_59 [2] : vector<8x8x16xf32> to vector<8x8xf32>
    %c3_60 = arith.constant 3 : index
    %164 = memref.load %arg9[%c3_60] : memref<11xf32, #tpu.memory_space<smem>>
    %165 = vector.broadcast %164 : f32 to vector<8x8xf32>
    %166 = arith.mulf %163, %165 : vector<8x8xf32>
    %cst_61 = arith.constant 9.99999974E-5 : f32
    %167 = vector.broadcast %cst_61 : f32 to vector<8x8xf32>
    %168 = arith.maximumf %166, %167 : vector<8x8xf32>
    %169 = math.log %168 : vector<8x8xf32>
    %c3_62 = arith.constant 3 : index
    %170 = memref.load %arg10[%c3_62] : memref<11xf32, #tpu.memory_space<smem>>
    %171 = vector.broadcast %170 : f32 to vector<8x8xf32>
    %172 = arith.mulf %169, %171 : vector<8x8xf32>
    %173 = arith.addf %154, %172 : vector<8x8xf32>
    %c4 = arith.constant 4 : index
    %174 = memref.load %arg7[%c4] : memref<11xf32, #tpu.memory_space<smem>>
    %175 = vector.broadcast %174 : f32 to vector<8x8x16xf32>
    %176 = arith.subf %96, %175 : vector<8x8x16xf32>
    %177 = arith.mulf %176, %176 : vector<8x8x16xf32>
    %c4_63 = arith.constant 4 : index
    %178 = memref.load %arg8[%c4_63] : memref<11xf32, #tpu.memory_space<smem>>
    %179 = vector.broadcast %178 : f32 to vector<8x8x16xf32>
    %180 = arith.mulf %177, %179 : vector<8x8x16xf32>
    %181 = math.exp %180 : vector<8x8x16xf32>
    %cst_64 = arith.constant dense<0.000000e+00> : vector<8x8xf32>
    %182 = vector.multi_reduction <add>, %181, %cst_64 [2] : vector<8x8x16xf32> to vector<8x8xf32>
    %c4_65 = arith.constant 4 : index
    %183 = memref.load %arg9[%c4_65] : memref<11xf32, #tpu.memory_space<smem>>
    %184 = vector.broadcast %183 : f32 to vector<8x8xf32>
    %185 = arith.mulf %182, %184 : vector<8x8xf32>
    %cst_66 = arith.constant 9.99999974E-5 : f32
    %186 = vector.broadcast %cst_66 : f32 to vector<8x8xf32>
    %187 = arith.maximumf %185, %186 : vector<8x8xf32>
    %188 = math.log %187 : vector<8x8xf32>
    %c4_67 = arith.constant 4 : index
    %189 = memref.load %arg10[%c4_67] : memref<11xf32, #tpu.memory_space<smem>>
    %190 = vector.broadcast %189 : f32 to vector<8x8xf32>
    %191 = arith.mulf %188, %190 : vector<8x8xf32>
    %192 = arith.addf %173, %191 : vector<8x8xf32>
    %c5 = arith.constant 5 : index
    %193 = memref.load %arg7[%c5] : memref<11xf32, #tpu.memory_space<smem>>
    %194 = vector.broadcast %193 : f32 to vector<8x8x16xf32>
    %195 = arith.subf %96, %194 : vector<8x8x16xf32>
    %196 = arith.mulf %195, %195 : vector<8x8x16xf32>
    %c5_68 = arith.constant 5 : index
    %197 = memref.load %arg8[%c5_68] : memref<11xf32, #tpu.memory_space<smem>>
    %198 = vector.broadcast %197 : f32 to vector<8x8x16xf32>
    %199 = arith.mulf %196, %198 : vector<8x8x16xf32>
    %200 = math.exp %199 : vector<8x8x16xf32>
    %cst_69 = arith.constant dense<0.000000e+00> : vector<8x8xf32>
    %201 = vector.multi_reduction <add>, %200, %cst_69 [2] : vector<8x8x16xf32> to vector<8x8xf32>
    %c5_70 = arith.constant 5 : index
    %202 = memref.load %arg9[%c5_70] : memref<11xf32, #tpu.memory_space<smem>>
    %203 = vector.broadcast %202 : f32 to vector<8x8xf32>
    %204 = arith.mulf %201, %203 : vector<8x8xf32>
    %cst_71 = arith.constant 9.99999974E-5 : f32
    %205 = vector.broadcast %cst_71 : f32 to vector<8x8xf32>
    %206 = arith.maximumf %204, %205 : vector<8x8xf32>
    %207 = math.log %206 : vector<8x8xf32>
    %c5_72 = arith.constant 5 : index
    %208 = memref.load %arg10[%c5_72] : memref<11xf32, #tpu.memory_space<smem>>
    %209 = vector.broadcast %208 : f32 to vector<8x8xf32>
    %210 = arith.mulf %207, %209 : vector<8x8xf32>
    %211 = arith.addf %192, %210 : vector<8x8xf32>
    %c6 = arith.constant 6 : index
    %212 = memref.load %arg7[%c6] : memref<11xf32, #tpu.memory_space<smem>>
    %213 = vector.broadcast %212 : f32 to vector<8x8x16xf32>
    %214 = arith.subf %96, %213 : vector<8x8x16xf32>
    %215 = arith.mulf %214, %214 : vector<8x8x16xf32>
    %c6_73 = arith.constant 6 : index
    %216 = memref.load %arg8[%c6_73] : memref<11xf32, #tpu.memory_space<smem>>
    %217 = vector.broadcast %216 : f32 to vector<8x8x16xf32>
    %218 = arith.mulf %215, %217 : vector<8x8x16xf32>
    %219 = math.exp %218 : vector<8x8x16xf32>
    %cst_74 = arith.constant dense<0.000000e+00> : vector<8x8xf32>
    %220 = vector.multi_reduction <add>, %219, %cst_74 [2] : vector<8x8x16xf32> to vector<8x8xf32>
    %c6_75 = arith.constant 6 : index
    %221 = memref.load %arg9[%c6_75] : memref<11xf32, #tpu.memory_space<smem>>
    %222 = vector.broadcast %221 : f32 to vector<8x8xf32>
    %223 = arith.mulf %220, %222 : vector<8x8xf32>
    %cst_76 = arith.constant 9.99999974E-5 : f32
    %224 = vector.broadcast %cst_76 : f32 to vector<8x8xf32>
    %225 = arith.maximumf %223, %224 : vector<8x8xf32>
    %226 = math.log %225 : vector<8x8xf32>
    %c6_77 = arith.constant 6 : index
    %227 = memref.load %arg10[%c6_77] : memref<11xf32, #tpu.memory_space<smem>>
    %228 = vector.broadcast %227 : f32 to vector<8x8xf32>
    %229 = arith.mulf %226, %228 : vector<8x8xf32>
    %230 = arith.addf %211, %229 : vector<8x8xf32>
    %c7 = arith.constant 7 : index
    %231 = memref.load %arg7[%c7] : memref<11xf32, #tpu.memory_space<smem>>
    %232 = vector.broadcast %231 : f32 to vector<8x8x16xf32>
    %233 = arith.subf %96, %232 : vector<8x8x16xf32>
    %234 = arith.mulf %233, %233 : vector<8x8x16xf32>
    %c7_78 = arith.constant 7 : index
    %235 = memref.load %arg8[%c7_78] : memref<11xf32, #tpu.memory_space<smem>>
    %236 = vector.broadcast %235 : f32 to vector<8x8x16xf32>
    %237 = arith.mulf %234, %236 : vector<8x8x16xf32>
    %238 = math.exp %237 : vector<8x8x16xf32>
    %cst_79 = arith.constant dense<0.000000e+00> : vector<8x8xf32>
    %239 = vector.multi_reduction <add>, %238, %cst_79 [2] : vector<8x8x16xf32> to vector<8x8xf32>
    %c7_80 = arith.constant 7 : index
    %240 = memref.load %arg9[%c7_80] : memref<11xf32, #tpu.memory_space<smem>>
    %241 = vector.broadcast %240 : f32 to vector<8x8xf32>
    %242 = arith.mulf %239, %241 : vector<8x8xf32>
    %cst_81 = arith.constant 9.99999974E-5 : f32
    %243 = vector.broadcast %cst_81 : f32 to vector<8x8xf32>
    %244 = arith.maximumf %242, %243 : vector<8x8xf32>
    %245 = math.log %244 : vector<8x8xf32>
    %c7_82 = arith.constant 7 : index
    %246 = memref.load %arg10[%c7_82] : memref<11xf32, #tpu.memory_space<smem>>
    %247 = vector.broadcast %246 : f32 to vector<8x8xf32>
    %248 = arith.mulf %245, %247 : vector<8x8xf32>
    %249 = arith.addf %230, %248 : vector<8x8xf32>
    %c8 = arith.constant 8 : index
    %250 = memref.load %arg7[%c8] : memref<11xf32, #tpu.memory_space<smem>>
    %251 = vector.broadcast %250 : f32 to vector<8x8x16xf32>
    %252 = arith.subf %96, %251 : vector<8x8x16xf32>
    %253 = arith.mulf %252, %252 : vector<8x8x16xf32>
    %c8_83 = arith.constant 8 : index
    %254 = memref.load %arg8[%c8_83] : memref<11xf32, #tpu.memory_space<smem>>
    %255 = vector.broadcast %254 : f32 to vector<8x8x16xf32>
    %256 = arith.mulf %253, %255 : vector<8x8x16xf32>
    %257 = math.exp %256 : vector<8x8x16xf32>
    %cst_84 = arith.constant dense<0.000000e+00> : vector<8x8xf32>
    %258 = vector.multi_reduction <add>, %257, %cst_84 [2] : vector<8x8x16xf32> to vector<8x8xf32>
    %c8_85 = arith.constant 8 : index
    %259 = memref.load %arg9[%c8_85] : memref<11xf32, #tpu.memory_space<smem>>
    %260 = vector.broadcast %259 : f32 to vector<8x8xf32>
    %261 = arith.mulf %258, %260 : vector<8x8xf32>
    %cst_86 = arith.constant 9.99999974E-5 : f32
    %262 = vector.broadcast %cst_86 : f32 to vector<8x8xf32>
    %263 = arith.maximumf %261, %262 : vector<8x8xf32>
    %264 = math.log %263 : vector<8x8xf32>
    %c8_87 = arith.constant 8 : index
    %265 = memref.load %arg10[%c8_87] : memref<11xf32, #tpu.memory_space<smem>>
    %266 = vector.broadcast %265 : f32 to vector<8x8xf32>
    %267 = arith.mulf %264, %266 : vector<8x8xf32>
    %268 = arith.addf %249, %267 : vector<8x8xf32>
    %c9 = arith.constant 9 : index
    %269 = memref.load %arg7[%c9] : memref<11xf32, #tpu.memory_space<smem>>
    %270 = vector.broadcast %269 : f32 to vector<8x8x16xf32>
    %271 = arith.subf %96, %270 : vector<8x8x16xf32>
    %272 = arith.mulf %271, %271 : vector<8x8x16xf32>
    %c9_88 = arith.constant 9 : index
    %273 = memref.load %arg8[%c9_88] : memref<11xf32, #tpu.memory_space<smem>>
    %274 = vector.broadcast %273 : f32 to vector<8x8x16xf32>
    %275 = arith.mulf %272, %274 : vector<8x8x16xf32>
    %276 = math.exp %275 : vector<8x8x16xf32>
    %cst_89 = arith.constant dense<0.000000e+00> : vector<8x8xf32>
    %277 = vector.multi_reduction <add>, %276, %cst_89 [2] : vector<8x8x16xf32> to vector<8x8xf32>
    %c9_90 = arith.constant 9 : index
    %278 = memref.load %arg9[%c9_90] : memref<11xf32, #tpu.memory_space<smem>>
    %279 = vector.broadcast %278 : f32 to vector<8x8xf32>
    %280 = arith.mulf %277, %279 : vector<8x8xf32>
    %cst_91 = arith.constant 9.99999974E-5 : f32
    %281 = vector.broadcast %cst_91 : f32 to vector<8x8xf32>
    %282 = arith.maximumf %280, %281 : vector<8x8xf32>
    %283 = math.log %282 : vector<8x8xf32>
    %c9_92 = arith.constant 9 : index
    %284 = memref.load %arg10[%c9_92] : memref<11xf32, #tpu.memory_space<smem>>
    %285 = vector.broadcast %284 : f32 to vector<8x8xf32>
    %286 = arith.mulf %283, %285 : vector<8x8xf32>
    %287 = arith.addf %268, %286 : vector<8x8xf32>
    %c10 = arith.constant 10 : index
    %288 = memref.load %arg7[%c10] : memref<11xf32, #tpu.memory_space<smem>>
    %289 = vector.broadcast %288 : f32 to vector<8x8x16xf32>
    %290 = arith.subf %96, %289 : vector<8x8x16xf32>
    %291 = arith.mulf %290, %290 : vector<8x8x16xf32>
    %c10_93 = arith.constant 10 : index
    %292 = memref.load %arg8[%c10_93] : memref<11xf32, #tpu.memory_space<smem>>
    %293 = vector.broadcast %292 : f32 to vector<8x8x16xf32>
    %294 = arith.mulf %291, %293 : vector<8x8x16xf32>
    %295 = math.exp %294 : vector<8x8x16xf32>
    %cst_94 = arith.constant dense<0.000000e+00> : vector<8x8xf32>
    %296 = vector.multi_reduction <add>, %295, %cst_94 [2] : vector<8x8x16xf32> to vector<8x8xf32>
    %c10_95 = arith.constant 10 : index
    %297 = memref.load %arg9[%c10_95] : memref<11xf32, #tpu.memory_space<smem>>
    %298 = vector.broadcast %297 : f32 to vector<8x8xf32>
    %299 = arith.mulf %296, %298 : vector<8x8xf32>
    %cst_96 = arith.constant 9.99999974E-5 : f32
    %300 = vector.broadcast %cst_96 : f32 to vector<8x8xf32>
    %301 = arith.maximumf %299, %300 : vector<8x8xf32>
    %302 = math.log %301 : vector<8x8xf32>
    %c10_97 = arith.constant 10 : index
    %303 = memref.load %arg10[%c10_97] : memref<11xf32, #tpu.memory_space<smem>>
    %304 = vector.broadcast %303 : f32 to vector<8x8xf32>
    %305 = arith.mulf %302, %304 : vector<8x8xf32>
    %306 = arith.addf %287, %305 : vector<8x8xf32>
    %c0_98 = arith.constant 0 : index
    %c0_99 = arith.constant 0 : index
    %307 = vector.load %arg3[%c0_98, %c0_99] : memref<8x8xf32, #tpu.memory_space<vmem>>, vector<8x8xf32>
    %308 = arith.mulf %306, %307 : vector<8x8xf32>
    %cst_100 = arith.constant 1.000000e+00 : f32
    %309 = vector.broadcast %cst_100 : f32 to vector<1x8xf32>
    %cst_101 = arith.constant dense<0.000000e+00> : vector<1x8xf32>
    %310 = tpu.matmul %309, %308, %cst_101 {dimension_numbers = #tpu.dot_dimension_numbers<[1], [1], [0], [0], [0, 0, 1, 0], [], []>} : vector<1x8xf32>, vector<8x8xf32>, vector<1x8xf32> -> vector<1x8xf32>
    %c0_102 = arith.constant 0 : index
    %311 = memref.load %arg11[%c0_102] : memref<1xf32, #tpu.memory_space<smem>>
    %312 = vector.broadcast %311 : f32 to vector<1x8xf32>
    %313 = arith.addf %310, %312 : vector<1x8xf32>
    %c0_103 = arith.constant 0 : index
    %c0_104 = arith.constant 0 : index
    %c0_105 = arith.constant 0 : index
    %314 = vector.load %arg12[%c0_103, %c0_104, %c0_105] : memref<1x1x8xf32, #tpu.memory_space<vmem>>, vector<1x1x8xf32>
    %315 = vector.shape_cast %314 : vector<1x1x8xf32> to vector<1x8xf32>
    %316 = vector.shape_cast %313 : vector<1x8xf32> to vector<1x1x8xf32>
    tpu.vector_store %arg12[%c0_103, %c0_104, %c0_105], %316 {strides = array<i32>} : memref<1x1x8xf32, #tpu.memory_space<vmem>>, vector<1x1x8xf32>,
    return
  }
  func.func @transform_0(%arg0: i32) -> (i32, i32) {
    %c0_i32 = arith.constant 0 : i32
    %c0_i32_0 = arith.constant 0 : i32
    return %arg0, %c0_i32 : i32, i32
  }
  func.func @transform_1(%arg0: i32) -> (i32, i32) {
    %c0_i32 = arith.constant 0 : i32
    %c0_i32_0 = arith.constant 0 : i32
    return %arg0, %c0_i32 : i32, i32
  }
  func.func @transform_2(%arg0: i32) -> (i32, i32) {
    %c0_i32 = arith.constant 0 : i32
    %c0_i32_0 = arith.constant 0 : i32
    return %arg0, %c0_i32 : i32, i32
  }
  func.func @transform_3(%arg0: i32) -> (i32, i32) {
    %c0_i32 = arith.constant 0 : i32
    %c0_i32_0 = arith.constant 0 : i32
    return %arg0, %c0_i32 : i32, i32
  }
  func.func @transform_4(%arg0: i32) -> (i32, i32, i32) {
    %c0_i32 = arith.constant 0 : i32
    %c0_i32_0 = arith.constant 0 : i32
    %c0_i32_1 = arith.constant 0 : i32
    %c0_i32_2 = arith.constant 0 : i32
    return %c0_i32, %c0_i32_0, %c0_i32_1 : i32, i32, i32
  }
  func.func @transform_5(%arg0: i32) -> (i32, i32) {
    %c0_i32 = arith.constant 0 : i32
    %c0_i32_0 = arith.constant 0 : i32
    %c0_i32_1 = arith.constant 0 : i32
    return %c0_i32, %c0_i32_0 : i32, i32
  }
  func.func @transform_6(%arg0: i32) -> i32 {
    %c0_i32 = arith.constant 0 : i32
    %c0_i32_0 = arith.constant 0 : i32
    return %c0_i32 : i32
  }
  func.func @transform_7(%arg0: i32) -> i32 {
    %c0_i32 = arith.constant 0 : i32
    %c0_i32_0 = arith.constant 0 : i32
    return %c0_i32 : i32
  }
  func.func @transform_8(%arg0: i32) -> i32 {
    %c0_i32 = arith.constant 0 : i32
    %c0_i32_0 = arith.constant 0 : i32
    return %c0_i32 : i32
  }
  func.func @transform_9(%arg0: i32) -> i32 {
    %c0_i32 = arith.constant 0 : i32
    %c0_i32_0 = arith.constant 0 : i32
    return %c0_i32 : i32
  }
  func.func @transform_10(%arg0: i32) -> i32 {
    %c0_i32 = arith.constant 0 : i32
    %c0_i32_0 = arith.constant 0 : i32
    return %c0_i32 : i32
  }
  func.func @transform_11(%arg0: i32) -> (i32, i32, i32) {
    %c0_i32 = arith.constant 0 : i32
    %c0_i32_0 = arith.constant 0 : i32
    %c0_i32_1 = arith.constant 0 : i32
    return %arg0, %c0_i32, %c0_i32_0 : i32, i32, i32
  }
}

module attributes {stable_mosaic.version = 11 : i64} {
  func.func @_bert_cls_kernel(%arg0: i32, %arg1: memref<8x20x32xbf16, #tpu.memory_space<vmem>>, %arg2: memref<8x20xf32, #tpu.memory_space<vmem>>, %arg3: memref<32x32xbf16, #tpu.memory_space<vmem>>, %arg4: memref<1x32xf32, #tpu.memory_space<vmem>>, %arg5: memref<1x32xf32, #tpu.memory_space<vmem>>, %arg6: memref<1xf32, #tpu.memory_space<smem>>, %arg7: memref<1x1x8xf32, #tpu.memory_space<vmem>>) attributes {dimension_semantics = [#tpu.dimension_semantics<parallel>], iteration_bounds = array<i64: 1>, scalar_prefetch = 0 : i64, scratch_operands = 0 : i64, tpu.core_type = #tpu.core_type<tc>, window_params = [{transform_indices = @transform_0, window_bounds = array<i64: 8, 20, 32>}, {transform_indices = @transform_1, window_bounds = array<i64: 8, 20>}, {pipeline_mode = #tpu.pipeline_mode<synchronous>, transform_indices = @transform_2, window_bounds = array<i64: 32, 32>}, {pipeline_mode = #tpu.pipeline_mode<synchronous>, transform_indices = @transform_3, window_bounds = array<i64: 1, 32>}, {pipeline_mode = #tpu.pipeline_mode<synchronous>, transform_indices = @transform_4, window_bounds = array<i64: 1, 32>}, {transform_indices = @transform_5, window_bounds = array<i64: 1>}, {transform_indices = @transform_6, window_bounds = array<i64: 1, 1, 8>}]} {
    %c0 = arith.constant 0 : index
    %c0_0 = arith.constant 0 : index
    %c0_1 = arith.constant 0 : index
    %0 = vector.load %arg1[%c0, %c0_0, %c0_1] : memref<8x20x32xbf16, #tpu.memory_space<vmem>>, vector<8x20x32xbf16>
    %c0_2 = arith.constant 0 : index
    %c0_3 = arith.constant 0 : index
    %1 = vector.load %arg2[%c0_2, %c0_3] : memref<8x20xf32, #tpu.memory_space<vmem>>, vector<8x20xf32>
    %cst = arith.constant dense<0.000000e+00> : vector<8xf32>
    %2 = vector.multi_reduction <add>, %1, %cst [1] : vector<8x20xf32> to vector<8xf32>
    %3 = vector.shape_cast %2 : vector<8xf32> to vector<8x1xf32>
    %cst_4 = arith.constant 1.000000e+00 : f32
    %4 = vector.broadcast %cst_4 : f32 to vector<8x1xf32>
    %5 = arith.maximumf %3, %4 : vector<8x1xf32>
    %6 = arith.extf %0 : vector<8x20x32xbf16> to vector<8x20x32xf32>
    %7 = vector.shape_cast %1 : vector<8x20xf32> to vector<8x20x1xf32>
    %8 = vector.broadcast %7 : vector<8x20x1xf32> to vector<8x20x32xf32>
    %9 = arith.mulf %6, %8 : vector<8x20x32xf32>
    %cst_5 = arith.constant dense<0.000000e+00> : vector<8x32xf32>
    %10 = vector.multi_reduction <add>, %9, %cst_5 [1] : vector<8x20x32xf32> to vector<8x32xf32>
    %11 = vector.broadcast %5 : vector<8x1xf32> to vector<8x32xf32>
    %12 = arith.divf %10, %11 : vector<8x32xf32>
    %13 = vector.extract_strided_slice %0 {offsets = [0, 0, 0], sizes = [8, 1, 32], strides = [1, 1, 1]} : vector<8x20x32xbf16> to vector<8x1x32xbf16>
    %14 = vector.shape_cast %13 : vector<8x1x32xbf16> to vector<8x32xbf16>
    %15 = arith.extf %14 : vector<8x32xbf16> to vector<8x32xf32>
    %16 = arith.addf %15, %12 : vector<8x32xf32>
    %17 = arith.truncf %16 : vector<8x32xf32> to vector<8x32xbf16>
    %c0_6 = arith.constant 0 : index
    %c0_7 = arith.constant 0 : index
    %18 = vector.load %arg3[%c0_6, %c0_7] : memref<32x32xbf16, #tpu.memory_space<vmem>>, vector<32x32xbf16>
    %cst_8 = arith.constant dense<0.000000e+00> : vector<8x32xf32>
    %19 = tpu.matmul %17, %18, %cst_8 {dimension_numbers = #tpu.dot_dimension_numbers<[1], [0], [0], [1], [0, 0, 1, 1], [], []>} : vector<8x32xbf16>, vector<32x32xbf16>, vector<8x32xf32> -> vector<8x32xf32>
    %c0_9 = arith.constant 0 : index
    %c0_10 = arith.constant 0 : index
    %20 = vector.load %arg4[%c0_9, %c0_10] : memref<1x32xf32, #tpu.memory_space<vmem>>, vector<1x32xf32>
    %21 = vector.broadcast %20 : vector<1x32xf32> to vector<8x32xf32>
    %22 = arith.addf %19, %21 : vector<8x32xf32>
    %23 = math.tanh %22 : vector<8x32xf32>
    %c0_11 = arith.constant 0 : index
    %c0_12 = arith.constant 0 : index
    %24 = vector.load %arg5[%c0_11, %c0_12] : memref<1x32xf32, #tpu.memory_space<vmem>>, vector<1x32xf32>
    %cst_13 = arith.constant dense<0.000000e+00> : vector<1x8xf32>
    %25 = tpu.matmul %24, %23, %cst_13 {dimension_numbers = #tpu.dot_dimension_numbers<[1], [1], [0], [0], [0, 0, 1, 0], [], []>} : vector<1x32xf32>, vector<8x32xf32>, vector<1x8xf32> -> vector<1x8xf32>
    %c0_14 = arith.constant 0 : index
    %26 = memref.load %arg6[%c0_14] : memref<1xf32, #tpu.memory_space<smem>>
    %27 = vector.broadcast %26 : f32 to vector<1x8xf32>
    %28 = arith.addf %25, %27 : vector<1x8xf32>
    %c0_15 = arith.constant 0 : index
    %c0_16 = arith.constant 0 : index
    %c0_17 = arith.constant 0 : index
    %29 = vector.load %arg7[%c0_15, %c0_16, %c0_17] : memref<1x1x8xf32, #tpu.memory_space<vmem>>, vector<1x1x8xf32>
    %30 = vector.shape_cast %29 : vector<1x1x8xf32> to vector<1x8xf32>
    %31 = vector.shape_cast %28 : vector<1x8xf32> to vector<1x1x8xf32>
    tpu.vector_store %arg7[%c0_15, %c0_16, %c0_17], %31 {strides = array<i32>} : memref<1x1x8xf32, #tpu.memory_space<vmem>>, vector<1x1x8xf32>,
    return
  }
  func.func @transform_0(%arg0: i32) -> (i32, i32, i32) {
    %c0_i32 = arith.constant 0 : i32
    %c0_i32_0 = arith.constant 0 : i32
    %c0_i32_1 = arith.constant 0 : i32
    return %arg0, %c0_i32, %c0_i32_0 : i32, i32, i32
  }
  func.func @transform_1(%arg0: i32) -> (i32, i32) {
    %c0_i32 = arith.constant 0 : i32
    %c0_i32_0 = arith.constant 0 : i32
    return %arg0, %c0_i32 : i32, i32
  }
  func.func @transform_2(%arg0: i32) -> (i32, i32) {
    %c0_i32 = arith.constant 0 : i32
    %c0_i32_0 = arith.constant 0 : i32
    %c0_i32_1 = arith.constant 0 : i32
    return %c0_i32, %c0_i32_0 : i32, i32
  }
  func.func @transform_3(%arg0: i32) -> (i32, i32) {
    %c0_i32 = arith.constant 0 : i32
    %c0_i32_0 = arith.constant 0 : i32
    %c0_i32_1 = arith.constant 0 : i32
    return %c0_i32, %c0_i32_0 : i32, i32
  }
  func.func @transform_4(%arg0: i32) -> (i32, i32) {
    %c0_i32 = arith.constant 0 : i32
    %c0_i32_0 = arith.constant 0 : i32
    %c0_i32_1 = arith.constant 0 : i32
    return %c0_i32, %c0_i32_0 : i32, i32
  }
  func.func @transform_5(%arg0: i32) -> i32 {
    %c0_i32 = arith.constant 0 : i32
    %c0_i32_0 = arith.constant 0 : i32
    return %c0_i32 : i32
  }
  func.func @transform_6(%arg0: i32) -> (i32, i32, i32) {
    %c0_i32 = arith.constant 0 : i32
    %c0_i32_0 = arith.constant 0 : i32
    %c0_i32_1 = arith.constant 0 : i32
    return %arg0, %c0_i32, %c0_i32_0 : i32, i32, i32
  }
}

</mosaic_0001>

<llo_original>
// kernel: bert_patch_forward.3
$region0: #{bert_patch_forward.3}
  #allocation0 [shape = 'u32[]', space=smem, size = 0x4, offset = 0x4, fixed_abs, tag = 'smem constant byte address 0x4 - core index']
  #allocation1 [shape = 'u32[144,128]{1,0:T(1,128)}', space=vmem, size = 0x12000, scoped, tag = 'internal scratch']
  #allocation2 [shape = 'f32[1]{0:T(128)S(6)}', space=smem, size = 0x200, scoped, tag = 'scoped memory for bert_patch_forward.3']
  %s0 = inlined_call_operand.vmem [shape: bf16[8,20,32], index: 0, kind: input, shape index: {}]
  %s1 = inlined_call_operand.vmem [shape: f32[8,20], index: 1, kind: input, shape index: {}]
  %s2 = inlined_call_operand.vmem [shape: bf16[32,32], index: 2, kind: input, shape index: {}]
  %s3 = inlined_call_operand.vmem [shape: f32[1,32], index: 3, kind: input, shape index: {}]
  %s4 = inlined_call_operand.vmem [shape: f32[1,32], index: 4, kind: input, shape index: {}]
  %s5 = inlined_call_operand.<no memory space> [shape: f32[1], index: 5, kind: input, shape index: {}]
  %s6 = inlined_call_operand.vmem [shape: f32[1,1,8], index: 6, kind: output, shape index: {}]
  %s7 = sld [smem:[#allocation0]]
  $region34: #{bert_patch_forward.3} parent=0
    _
  %s9 = ssub.s32 1, %s7
  %s10 = scalar_select 0, %s9, %s7
  %11 = sst [smem:[#allocation2]] %s5
  // Predicated region
  $region2: #{bert_patch_forward.3} parent=0 // pred_check
    _
  $region3: #{bert_patch_forward.3} parent=0 // pred_check_branch
    %13 = sbr.rel (0) target = $region5
  $region4: #{bert_patch_forward.3} parent=0 // pred_region
    _
  $region5: #{bert_patch_forward.3} parent=0 // pred_fallthru
    _
  // Predicated region
  $region6: #{bert_patch_forward.3} parent=0 // pred_check
    _
  $region7: #{bert_patch_forward.3} parent=0 // pred_check_branch
    %15 = sbr.rel (0) target = $region9
  $region8: #{bert_patch_forward.3} parent=0 // pred_region
    _
  $region9: #{bert_patch_forward.3} parent=0 // pred_fallthru
    _
  // Predicated region
  $region10: #{bert_patch_forward.3} parent=0 // pred_check
    _
  $region11: #{bert_patch_forward.3} parent=0 // pred_check_branch
    %17 = sbr.rel (0) target = $region13
  $region12: #{bert_patch_forward.3} parent=0 // pred_region
    _
  $region13: #{bert_patch_forward.3} parent=0 // pred_fallthru
    _
  // Predicated region
  $region14: #{bert_patch_forward.3} parent=0 // pred_check
    _
  $region15: #{bert_patch_forward.3} parent=0 // pred_check_branch
    %19 = sbr.rel (0) target = $region17
  $region16: #{bert_patch_forward.3} parent=0 // pred_region
    _
  $region17: #{bert_patch_forward.3} parent=0 // pred_fallthru
    _
  // Predicated region
  $region18: #{bert_patch_forward.3} parent=0 // pred_check
    _
  $region19: #{bert_patch_forward.3} parent=0 // pred_check_branch
    %21 = sbr.rel (0) target = $region21
  $region20: #{bert_patch_forward.3} parent=0 // pred_region
    _
  $region21: #{bert_patch_forward.3} parent=0 // pred_fallthru
    _
  // Predicated region
  $region22: #{bert_patch_forward.3} parent=0 // pred_check
    _
  $region23: #{bert_patch_forward.3} parent=0 // pred_check_branch
    %23 = sbr.rel (0) target = $region25
  $region24: #{bert_patch_forward.3} parent=0 // pred_region
    _
  $region25: #{bert_patch_forward.3} parent=0 // pred_fallthru
    _
  %v25 = vld [vmem:[%s0] sm:$0xf]
  %v26 = vld [vmem:[%s0 + $0x4] sm:$0xf]
  %v27 = vld [vmem:[%s0 + $0x8] sm:$0x3]
  %v28 = vld [vmem:[%s0 + $0xc] sm:$0xf]
  %v29 = vld [vmem:[%s0 + $0x10] sm:$0xf]
  %v30 = vld [vmem:[%s0 + $0x14] sm:$0x3]
  %v31 = vld [vmem:[%s0 + $0x18] sm:$0xf]
  %v32 = vld [vmem:[%s0 + $0x1c] sm:$0xf]
  %v33 = vld [vmem:[%s0 + $0x20] sm:$0x3]
  %v34 = vld [vmem:[%s0 + $0x24] sm:$0xf]
  %v35 = vld [vmem:[%s0 + $0x28] sm:$0xf]
  %v36 = vld [vmem:[%s0 + $0x2c] sm:$0x3]
  %v37 = vld [vmem:[%s0 + $0x30] sm:$0xf]
  %v38 = vld [vmem:[%s0 + $0x34] sm:$0xf]
  %v39 = vld [vmem:[%s0 + $0x38] sm:$0x3]
  %v40 = vld [vmem:[%s0 + $0x3c] sm:$0xf]
  %v41 = vld [vmem:[%s0 + $0x40] sm:$0xf]
  %v42 = vld [vmem:[%s0 + $0x44] sm:$0x3]
  %v43 = vld [vmem:[%s0 + $0x48] sm:$0xf]
  %v44 = vld [vmem:[%s0 + $0x4c] sm:$0xf]
  %v45 = vld [vmem:[%s0 + $0x50] sm:$0x3]
  %v46 = vld [vmem:[%s0 + $0x54] sm:$0xf]
  %v47 = vld [vmem:[%s0 + $0x58] sm:$0xf]
  %v48 = vld [vmem:[%s0 + $0x5c] sm:$0x3]
  %v49 = vld [vmem:[%s1] sm:$0xff]
  %vm50 = vcmask 162816
  %v51 = vsel %vm50, %v49, 0.0
  %52 = vadd.xlane.f32.xlu0 %v51
  %v53 = vpop.xlane.xlu0 %52
  %v54 = vmax.f32 %v53, 1.0
  %v55 = vunpack.c.l.bf16 %v25
  %v56 = vunpack.c.l.bf16 %v26
  %v57 = vunpack.c.l.bf16 %v27
  %v58 = vunpack.c.l.bf16 %v28
  %v59 = vunpack.c.l.bf16 %v29
  %v60 = vunpack.c.l.bf16 %v30
  %v61 = vunpack.c.l.bf16 %v31
  %v62 = vunpack.c.l.bf16 %v32
  %v63 = vunpack.c.l.bf16 %v33
  %v64 = vunpack.c.l.bf16 %v34
  %v65 = vunpack.c.l.bf16 %v35
  %v66 = vunpack.c.l.bf16 %v36
  %v67 = vunpack.c.l.bf16 %v37
  %v68 = vunpack.c.l.bf16 %v38
  %v69 = vunpack.c.l.bf16 %v39
  %v70 = vunpack.c.l.bf16 %v40
  %v71 = vunpack.c.l.bf16 %v41
  %v72 = vunpack.c.l.bf16 %v42
  %v73 = vunpack.c.l.bf16 %v43
  %v74 = vunpack.c.l.bf16 %v44
  %v75 = vunpack.c.l.bf16 %v45
  %v76 = vunpack.c.l.bf16 %v46
  %v77 = vunpack.c.l.bf16 %v47
  %v78 = vunpack.c.l.bf16 %v48
  %v79 = vlaneseq
  %v80 = vshrl.u32 %v79, 7
  %v81 = vsub.s32 0, %v80
  %v82 = vrot.slane %v49, %v81
  %84 = vbcast.lane.b32.xlu0 %v82, 256
  %v85 = vpop.permute.xlu0 %84
  %s87 = sor.u32 256, 8
  %88 = vbcast.lane.b32.xlu0 %v82, %s87
  %v89 = vpop.permute.xlu0 %88
  %s91 = sor.u32 256, 16
  %92 = vbcast.lane.b32.xlu0 %v82, %s91
  %v93 = vpop.permute.xlu0 %92
  %v94 = vlaneseq
  %v95 = vshrl.u32 %v94, 7
  %v96 = vsub.s32 1, %v95
  %v97 = vrot.slane %v49, %v96
  %99 = vbcast.lane.b32.xlu0 %v97, 256
  %v100 = vpop.permute.xlu0 %99
  %s102 = sor.u32 256, 8
  %103 = vbcast.lane.b32.xlu0 %v97, %s102
  %v104 = vpop.permute.xlu0 %103
  %s106 = sor.u32 256, 16
  %107 = vbcast.lane.b32.xlu0 %v97, %s106
  %v108 = vpop.permute.xlu0 %107
  %v109 = vlaneseq
  %v110 = vshrl.u32 %v109, 7
  %v111 = vsub.s32 2, %v110
  %v112 = vrot.slane %v49, %v111
  %114 = vbcast.lane.b32.xlu0 %v112, 256
  %v115 = vpop.permute.xlu0 %114
  %s117 = sor.u32 256, 8
  %118 = vbcast.lane.b32.xlu0 %v112, %s117
  %v119 = vpop.permute.xlu0 %118
  %s121 = sor.u32 256, 16
  %122 = vbcast.lane.b32.xlu0 %v112, %s121
  %v123 = vpop.permute.xlu0 %122
  %v124 = vlaneseq
  %v125 = vshrl.u32 %v124, 7
  %v126 = vsub.s32 3, %v125
  %v127 = vrot.slane %v49, %v126
  %129 = vbcast.lane.b32.xlu0 %v127, 256
  %v130 = vpop.permute.xlu0 %129
  %s132 = sor.u32 256, 8
  %133 = vbcast.lane.b32.xlu0 %v127, %s132
  %v134 = vpop.permute.xlu0 %133
  %s136 = sor.u32 256, 16
  %137 = vbcast.lane.b32.xlu0 %v127, %s136
  %v138 = vpop.permute.xlu0 %137
  %v139 = vlaneseq
  %v140 = vshrl.u32 %v139, 7
  %v141 = vsub.s32 4, %v140
  %v142 = vrot.slane %v49, %v141
  %144 = vbcast.lane.b32.xlu0 %v142, 256
  %v145 = vpop.permute.xlu0 %144
  %s147 = sor.u32 256, 8
  %148 = vbcast.lane.b32.xlu0 %v142, %s147
  %v149 = vpop.permute.xlu0 %148
  %s151 = sor.u32 256, 16
  %152 = vbcast.lane.b32.xlu0 %v142, %s151
  %v153 = vpop.permute.xlu0 %152
  %v154 = vlaneseq
  %v155 = vshrl.u32 %v154, 7
  %v156 = vsub.s32 5, %v155
  %v157 = vrot.slane %v49, %v156
  %159 = vbcast.lane.b32.xlu0 %v157, 256
  %v160 = vpop.permute.xlu0 %159
  %s162 = sor.u32 256, 8
  %163 = vbcast.lane.b32.xlu0 %v157, %s162
  %v164 = vpop.permute.xlu0 %163
  %s166 = sor.u32 256, 16
  %167 = vbcast.lane.b32.xlu0 %v157, %s166
  %v168 = vpop.permute.xlu0 %167
  %v169 = vlaneseq
  %v170 = vshrl.u32 %v169, 7
  %v171 = vsub.s32 6, %v170
  %v172 = vrot.slane %v49, %v171
  %174 = vbcast.lane.b32.xlu0 %v172, 256
  %v175 = vpop.permute.xlu0 %174
  %s177 = sor.u32 256, 8
  %178 = vbcast.lane.b32.xlu0 %v172, %s177
  %v179 = vpop.permute.xlu0 %178
  %s181 = sor.u32 256, 16
  %182 = vbcast.lane.b32.xlu0 %v172, %s181
  %v183 = vpop.permute.xlu0 %182
  %v184 = vlaneseq
  %v185 = vshrl.u32 %v184, 7
  %v186 = vsub.s32 7, %v185
  %v187 = vrot.slane %v49, %v186
  %189 = vbcast.lane.b32.xlu0 %v187, 256
  %v190 = vpop.permute.xlu0 %189
  %s192 = sor.u32 256, 8
  %193 = vbcast.lane.b32.xlu0 %v187, %s192
  %v194 = vpop.permute.xlu0 %193
  %s196 = sor.u32 256, 16
  %197 = vbcast.lane.b32.xlu0 %v187, %s196
  %v198 = vpop.permute.xlu0 %197
  %v199 = vmul.f32 %v55, %v85
  %v200 = vmul.f32 %v56, %v89
  %v201 = vmul.f32 %v57, %v93
  %v202 = vmul.f32 %v58, %v100
  %v203 = vmul.f32 %v59, %v104
  %v204 = vmul.f32 %v60, %v108
  %v205 = vmul.f32 %v61, %v115
  %v206 = vmul.f32 %v62, %v119
  %v207 = vmul.f32 %v63, %v123
  %v208 = vmul.f32 %v64, %v130
  %v209 = vmul.f32 %v65, %v134
  %v210 = vmul.f32 %v66, %v138
  %v211 = vmul.f32 %v67, %v145
  %v212 = vmul.f32 %v68, %v149
  %v213 = vmul.f32 %v69, %v153
  %v214 = vmul.f32 %v70, %v160
  %v215 = vmul.f32 %v71, %v164
  %v216 = vmul.f32 %v72, %v168
  %v217 = vmul.f32 %v73, %v175
  %v218 = vmul.f32 %v74, %v179
  %v219 = vmul.f32 %v75, %v183
  %v220 = vmul.f32 %v76, %v190
  %v221 = vmul.f32 %v77, %v194
  %v222 = vmul.f32 %v78, %v198
  %vm223 = vcmask 261120
  %v224 = vsel %vm223, %v199, 0.0
  %v225 = vsel %vm223, %v200, 0.0
  %v226 = vadd.f32 %v224, %v225
  %vm227 = vcmask 257024
  %v228 = vsel %vm227, %v201, 0.0
  %v229 = vadd.f32 %v226, %v228
  %v230 = vrot.slane %v229, 4
  %v231 = vadd.f32 %v229, %v230
  %v232 = vrot.slane %v231, 2
  %v233 = vadd.f32 %v231, %v232
  %v234 = vrot.slane %v233, 1
  %v235 = vadd.f32 %v233, %v234
  %v236 = vsel %vm223, %v202, 0.0
  %v237 = vsel %vm223, %v203, 0.0
  %v238 = vadd.f32 %v236, %v237
  %v239 = vsel %vm227, %v204, 0.0
  %v240 = vadd.f32 %v238, %v239
  %v241 = vrot.slane %v240, 4
  %v242 = vadd.f32 %v240, %v241
  %v243 = vrot.slane %v242, 2
  %v244 = vadd.f32 %v242, %v243
  %v245 = vrot.slane %v244, 1
  %v246 = vadd.f32 %v244, %v245
  %v247 = vsel %vm223, %v205, 0.0
  %v248 = vsel %vm223, %v206, 0.0
  %v249 = vadd.f32 %v247, %v248
  %v250 = vsel %vm227, %v207, 0.0
  %v251 = vadd.f32 %v249, %v250
  %v252 = vrot.slane %v251, 4
  %v253 = vadd.f32 %v251, %v252
  %v254 = vrot.slane %v253, 2
  %v255 = vadd.f32 %v253, %v254
  %v256 = vrot.slane %v255, 1
  %v257 = vadd.f32 %v255, %v256
  %v258 = vsel %vm223, %v208, 0.0
  %v259 = vsel %vm223, %v209, 0.0
  %v260 = vadd.f32 %v258, %v259
  %v261 = vsel %vm227, %v210, 0.0
  %v262 = vadd.f32 %v260, %v261
  %v263 = vrot.slane %v262, 4
  %v264 = vadd.f32 %v262, %v263
  %v265 = vrot.slane %v264, 2
  %v266 = vadd.f32 %v264, %v265
  %v267 = vrot.slane %v266, 1
  %v268 = vadd.f32 %v266, %v267
  %v269 = vsel %vm223, %v211, 0.0
  %v270 = vsel %vm223, %v212, 0.0
  %v271 = vadd.f32 %v269, %v270
  %v272 = vsel %vm227, %v213, 0.0
  %v273 = vadd.f32 %v271, %v272
  %v274 = vrot.slane %v273, 4
  %v275 = vadd.f32 %v273, %v274
  %v276 = vrot.slane %v275, 2
  %v277 = vadd.f32 %v275, %v276
  %v278 = vrot.slane %v277, 1
  %v279 = vadd.f32 %v277, %v278
  %v280 = vsel %vm223, %v214, 0.0
  %v281 = vsel %vm223, %v215, 0.0
  %v282 = vadd.f32 %v280, %v281
  %v283 = vsel %vm227, %v216, 0.0
  %v284 = vadd.f32 %v282, %v283
  %v285 = vrot.slane %v284, 4
  %v286 = vadd.f32 %v284, %v285
  %v287 = vrot.slane %v286, 2
  %v288 = vadd.f32 %v286, %v287
  %v289 = vrot.slane %v288, 1
  %v290 = vadd.f32 %v288, %v289
  %v291 = vsel %vm223, %v217, 0.0
  %v292 = vsel %vm223, %v218, 0.0
  %v293 = vadd.f32 %v291, %v292
  %v294 = vsel %vm227, %v219, 0.0
  %v295 = vadd.f32 %v293, %v294
  %v296 = vrot.slane %v295, 4
  %v297 = vadd.f32 %v295, %v296
  %v298 = vrot.slane %v297, 2
  %v299 = vadd.f32 %v297, %v298
  %v300 = vrot.slane %v299, 1
  %v301 = vadd.f32 %v299, %v300
  %v302 = vsel %vm223, %v220, 0.0
  %v303 = vsel %vm223, %v221, 0.0
  %v304 = vadd.f32 %v302, %v303
  %v305 = vsel %vm227, %v222, 0.0
  %v306 = vadd.f32 %v304, %v305
  %v307 = vrot.slane %v306, 4
  %v308 = vadd.f32 %v306, %v307
  %v309 = vrot.slane %v308, 2
  %v310 = vadd.f32 %v308, %v309
  %v311 = vrot.slane %v310, 1
  %v312 = vadd.f32 %v310, %v311
  %v314 = vrot.slane %v54, 1
  %v315 = vrot.slane %v54, 2
  %v316 = vrot.slane %v54, 3
  %v317 = vrot.slane %v54, 4
  %v318 = vrot.slane %v54, 5
  %v319 = vrot.slane %v54, 6
  %v320 = vrot.slane %v54, 7
  %v329 = vrcp.pop %v54
  %v330 = vmul.f32 %v235, %v329
  %v331 = vrcp.pop %v314
  %v332 = vmul.f32 %v246, %v331
  %v333 = vrcp.pop %v315
  %v334 = vmul.f32 %v257, %v333
  %v335 = vrcp.pop %v316
  %v336 = vmul.f32 %v268, %v335
  %v337 = vrcp.pop %v317
  %v338 = vmul.f32 %v279, %v337
  %v339 = vrcp.pop %v318
  %v340 = vmul.f32 %v290, %v339
  %v341 = vrcp.pop %v319
  %v342 = vmul.f32 %v301, %v341
  %v343 = vrcp.pop %v320
  %v344 = vmul.f32 %v312, %v343
  %v345 = vadd.f32 %v55, %v330
  %v346 = vadd.f32 %v58, %v332
  %v347 = vadd.f32 %v61, %v334
  %v348 = vadd.f32 %v64, %v336
  %v349 = vadd.f32 %v67, %v338
  %v350 = vadd.f32 %v70, %v340
  %v351 = vadd.f32 %v73, %v342
  %v352 = vadd.f32 %v76, %v344
  %v353 = vpack.c.bf16 %v345, %v345
  %v354 = vpack.c.bf16 %v346, %v346
  %v355 = vpack.c.bf16 %v347, %v347
  %v356 = vpack.c.bf16 %v348, %v348
  %v357 = vpack.c.bf16 %v349, %v349
  %v358 = vpack.c.bf16 %v350, %v350
  %v359 = vpack.c.bf16 %v351, %v351
  %v360 = vpack.c.bf16 %v352, %v352
  %v361 = vld [vmem:[%s2] sm:$0xf]
  %v362 = vld [vmem:[%s2 + $0x4] sm:$0xf]
  %v363 = vld [vmem:[%s2 + $0x8] sm:$0xf]
  %v364 = vld [vmem:[%s2 + $0xc] sm:$0xf]
  %v365 = vld [vmem:[%s3] sm:$0x1]
  %v367 = vlaneseq
  %v368 = vshrl.u32 %v367, 7
  %v369 = vsub.s32 0, %v368
  %v370 = vrot.slane %v365, %v369
  %v380 = vunpack.c.l.b16 %v353
  %v381 = vunpack.c.l.b16 %v354
  %v382 = vunpack.c.l.b16 %v355
  %v383 = vunpack.c.l.b16 %v356
  %v384 = vunpack.c.l.b16 %v357
  %v385 = vunpack.c.l.b16 %v358
  %v386 = vunpack.c.l.b16 %v359
  %v387 = vunpack.c.l.b16 %v360
  %v388 = vrot.slane %v381, 7
  %vm389 = vcmask 1041409
  %v390 = vsel %vm389, %v388, %v380
  %v391 = vrot.slane %v382, 6
  %vm392 = vcmask 1042434
  %v393 = vsel %vm392, %v391, %v390
  %v394 = vrot.slane %v383, 5
  %vm395 = vcmask 1043459
  %v396 = vsel %vm395, %v394, %v393
  %v397 = vrot.slane %v384, 4
  %vm398 = vcmask 1044484
  %v399 = vsel %vm398, %v397, %v396
  %v400 = vrot.slane %v385, 3
  %vm401 = vcmask 1045509
  %v402 = vsel %vm401, %v400, %v399
  %v403 = vrot.slane %v386, 2
  %vm404 = vcmask 1046534
  %v405 = vsel %vm404, %v403, %v402
  %v406 = vrot.slane %v387, 1
  %vm407 = vcmask 1047559
  %v408 = vsel %vm407, %v406, %v405
  %v409 = vpack.c.b16 %v408, %v408
  %v414 = vunpack.c.l.b16 %v361
  %v415 = vunpack.c.l.b16 %v362
  %v416 = vunpack.c.l.b16 %v363
  %v417 = vunpack.c.l.b16 %v364
  %v418 = vpack.c.b16 %v415, %v414
  %v419 = vpack.c.b16 %v417, %v416
  %v423 = vsel %vm223, %v409, 0
  %425 = vmatprep.subr.bf16.mxu0 0
  %426 = vmatpush1.bf16.msra.mxu0 %v418
  %427 = vmatprep.subr.bf16.mxu0 0
  %428 = vmatpush1.bf16.msra.mxu0 %v419
  %429 = vmatprep.subr.bf16.mxu0 0
  %430 = vmatpush1.bf16.msra.mxu0 0
  %431 = vmatprep.subr.bf16.mxu0 0
  %432 = vmatpush1.bf16.msra.mxu0 0
  %433 = vmatprep.subr.bf16.mxu0 0
  %434 = vmatpush1.bf16.msra.mxu0 0
  %435 = vmatprep.subr.bf16.mxu0 0
  %436 = vmatpush1.bf16.msra.mxu0 0
  %437 = vmatprep.subr.bf16.mxu0 0
  %438 = vmatpush1.bf16.msra.mxu0 0
  %439 = vmatprep.subr.bf16.mxu0 0
  %440 = vmatpush1.bf16.msra.mxu0 0
  %441 = vmatprep.subr.bf16.mxu0 0
  %442 = vmatpush1.bf16.msra.mxu0 0
  %443 = vmatprep.subr.bf16.mxu0 0
  %444 = vmatpush1.bf16.msra.mxu0 0
  %445 = vmatprep.subr.bf16.mxu0 0
  %446 = vmatpush1.bf16.msra.mxu0 0
  %447 = vmatprep.subr.bf16.mxu0 0
  %448 = vmatpush1.bf16.msra.mxu0 0
  %449 = vmatprep.subr.bf16.mxu0 0
  %450 = vmatpush1.bf16.msra.mxu0 0
  %451 = vmatprep.subr.bf16.mxu0 0
  %452 = vmatpush1.bf16.msra.mxu0 0
  %453 = vmatprep.subr.bf16.mxu0 0
  %454 = vmatpush1.bf16.msra.mxu0 0
  %455 = vmatprep.subr.bf16.mxu0 0
  %456 = vmatpush1.bf16.msra.mxu0 0
  %457 = vmatprep.mubr.bf16.mxu0 0
  %458 = vmatmul.mubr.bf16.gmra.mrb[0].mxu0 %v423
  %v459 = vpop.f32.mrb[0].mxu0
  %v460 = vadd.f32 %v370, %v459
  %v461 = vpop.f32.mrb[0].mxu0
  %v462 = vpop.f32.mrb[0].mxu0
  %v463 = vpop.f32.mrb[0].mxu0
  %464 = vdwg.mxu0
  %v465 = vtanh.pop %v460
  %v466 = vld [vmem:[%s4] sm:$0x1]
  %s467 = sld [smem:[#allocation2]]
  %v468 = vstv %s467
  %v470 = vsel %vm223, %v466, 0
  %v473 = vsel %vm223, %v465, 0
  %475 = vmatprep.subr.mxu0 0.0
  %476 = vmatpush1.xpose.msra.mxu0 %v473
  %477 = vmatprep.subr.mxu0 0.0
  %478 = vmatpush1.xpose.msra.mxu0 0.0
  %479 = vmatprep.subr.mxu0 0.0
  %480 = vmatpush1.xpose.msra.mxu0 0.0
  %481 = vmatprep.subr.mxu0 0.0
  %482 = vmatpush1.xpose.msra.mxu0 0.0
  %483 = vmatprep.subr.mxu0 0.0
  %484 = vmatpush1.xpose.msra.mxu0 0.0
  %485 = vmatprep.subr.mxu0 0.0
  %486 = vmatpush1.xpose.msra.mxu0 0.0
  %487 = vmatprep.subr.mxu0 0.0
  %488 = vmatpush1.xpose.msra.mxu0 0.0
  %489 = vmatprep.subr.mxu0 0.0
  %490 = vmatpush1.xpose.msra.mxu0 0.0
  %491 = vmatprep.subr.mxu0 0.0
  %492 = vmatpush1.xpose.msra.mxu0 0.0
  %493 = vmatprep.subr.mxu0 0.0
  %494 = vmatpush1.xpose.msra.mxu0 0.0
  %495 = vmatprep.subr.mxu0 0.0
  %496 = vmatpush1.xpose.msra.mxu0 0.0
  %497 = vmatprep.subr.mxu0 0.0
  %498 = vmatpush1.xpose.msra.mxu0 0.0
  %499 = vmatprep.subr.mxu0 0.0
  %500 = vmatpush1.xpose.msra.mxu0 0.0
  %501 = vmatprep.subr.mxu0 0.0
  %502 = vmatpush1.xpose.msra.mxu0 0.0
  %503 = vmatprep.subr.mxu0 0.0
  %504 = vmatpush1.xpose.msra.mxu0 0.0
  %505 = vmatprep.subr.mxu0 0.0
  %506 = vmatpush1.xpose.msra.mxu0 0.0
  %507 = vmatprep.subr.mxu0 0.0
  %508 = vmatpush1.xpose.msra.mxu0 0.0
  %509 = vmatprep.subr.mxu0 0.0
  %510 = vmatpush1.xpose.msra.mxu0 0.0
  %511 = vmatprep.subr.mxu0 0.0
  %512 = vmatpush1.xpose.msra.mxu0 0.0
  %513 = vmatprep.subr.mxu0 0.0
  %514 = vmatpush1.xpose.msra.mxu0 0.0
  %515 = vmatprep.subr.mxu0 0.0
  %516 = vmatpush1.xpose.msra.mxu0 0.0
  %517 = vmatprep.subr.mxu0 0.0
  %518 = vmatpush1.xpose.msra.mxu0 0.0
  %519 = vmatprep.subr.mxu0 0.0
  %520 = vmatpush1.xpose.msra.mxu0 0.0
  %521 = vmatprep.subr.mxu0 0.0
  %522 = vmatpush1.xpose.msra.mxu0 0.0
  %523 = vmatprep.subr.mxu0 0.0
  %524 = vmatpush1.xpose.msra.mxu0 0.0
  %525 = vmatprep.subr.mxu0 0.0
  %526 = vmatpush1.xpose.msra.mxu0 0.0
  %527 = vmatprep.subr.mxu0 0.0
  %528 = vmatpush1.xpose.msra.mxu0 0.0
  %529 = vmatprep.subr.mxu0 0.0
  %530 = vmatpush1.xpose.msra.mxu0 0.0
  %531 = vmatprep.subr.mxu0 0.0
  %532 = vmatpush1.xpose.msra.mxu0 0.0
  %533 = vmatprep.subr.mxu0 0.0
  %534 = vmatpush1.xpose.msra.mxu0 0.0
  %535 = vmatprep.subr.mxu0 0.0
  %536 = vmatpush1.xpose.msra.mxu0 0.0
  %537 = vmatprep.subr.mxu0 0.0
  %538 = vmatpush1.xpose.msra.mxu0 0.0
  %539 = vmatprep.mubr.f32.mxu0 0.0
  %540 = vmatmul.mubr.f32.gmra.mrb[0].mxu0 %v470
  %v541 = vpop.f32.mrb[0].mxu0
  %v542 = vadd.f32 %v468, %v541
  %v543 = vpop.f32.mrb[0].mxu0
  %544 = vdwg.mxu0
  %vm545 = vcmask 57344
  %546 = vst.msk [vmem:[%s6] sm:$0x1] %vm545, %v542
  // Predicated region
  $region26: #{bert_patch_forward.3} parent=0 // pred_check
    _
  $region27: #{bert_patch_forward.3} parent=0 // pred_check_branch
    %548 = sbr.rel (0) target = $region29
  $region28: #{bert_patch_forward.3} parent=0 // pred_region
    _
  $region29: #{bert_patch_forward.3} parent=0 // pred_fallthru
    _
  // Predicated region
  $region30: #{bert_patch_forward.3} parent=0 // pred_check
    _
  $region31: #{bert_patch_forward.3} parent=0 // pred_check_branch
    %550 = sbr.rel (0) target = $region33
  $region32: #{bert_patch_forward.3} parent=0 // pred_region
    _
  $region33: #{bert_patch_forward.3} parent=0 // pred_fallthru
    _

// kernel: bert_patch_forward.2
$region0: #{bert_patch_forward.2}
  #allocation0 [shape = 'u32[]', space=smem, size = 0x4, offset = 0x4, fixed_abs, tag = 'smem constant byte address 0x4 - core index']
  #allocation1 [shape = 'u32[144,128]{1,0:T(1,128)}', space=vmem, size = 0x12000, scoped, tag = 'internal scratch']
  #allocation2 [shape = 'f32[1]{0:T(128)S(6)}', space=smem, size = 0x200, scoped, tag = 'scoped memory for bert_patch_forward.2']
  %s0 = inlined_call_operand.vmem [shape: bf16[64,32], index: 0, kind: input, shape index: {}]
  %s1 = inlined_call_operand.vmem [shape: bf16[128,32], index: 1, kind: input, shape index: {}]
  %s2 = inlined_call_operand.vmem [shape: f32[8,8], index: 2, kind: input, shape index: {}]
  %s3 = inlined_call_operand.vmem [shape: f32[8,16], index: 3, kind: input, shape index: {}]
  %s4 = inlined_call_operand.vmem [shape: bf16[3,32,32], index: 4, kind: input, shape index: {}]
  %s5 = inlined_call_operand.vmem [shape: f32[1,32], index: 5, kind: input, shape index: {}]
  %s6 = inlined_call_operand.vmem [shape: f32[11], index: 6, kind: input, shape index: {}]
  %s7 = inlined_call_operand.vmem [shape: f32[11], index: 7, kind: input, shape index: {}]
  %s8 = inlined_call_operand.vmem [shape: f32[11], index: 8, kind: input, shape index: {}]
  %s9 = inlined_call_operand.vmem [shape: f32[11], index: 9, kind: input, shape index: {}]
  %s10 = inlined_call_operand.<no memory space> [shape: f32[1], index: 10, kind: input, shape index: {}]
  %s11 = inlined_call_operand.vmem [shape: f32[1,1,8], index: 11, kind: output, shape index: {}]
  %s12 = sld [smem:[#allocation0]]
  $region70: #{bert_patch_forward.2} parent=0
    _
  %s14 = ssub.s32 1, %s12
  %s15 = scalar_select 0, %s14, %s12
  %16 = sst [smem:[#allocation2]] %s10
  $region1: #{bert_patch_forward.2} parent=0
    #allocation3 [shape = 'u8[512]{0}', space=smem, size = 0x200, scoped, tag = 'input window, operand 6, single buffered']
    #allocation4 [shape = 's32[1]{0}', space=sflag, size = 0x4, scoped, tag = 'scoped memory for bert_patch_forward.2']
    #allocation5 [shape = 'u8[512]{0}', space=smem, size = 0x200, scoped, tag = 'input window, operand 7, single buffered']
    #allocation6 [shape = 's32[1]{0}', space=sflag, size = 0x4, scoped, tag = 'scoped memory for bert_patch_forward.2']
    #allocation7 [shape = 'u8[512]{0}', space=smem, size = 0x200, scoped, tag = 'input window, operand 8, single buffered']
    #allocation8 [shape = 'u8[512]{0}', space=smem, size = 0x200, scoped, tag = 'input window, operand 9, single buffered']
    #allocation9 [shape = 's32[1]{0}', space=sflag, size = 0x4, scoped, tag = 'scoped memory for bert_patch_forward.2']
    %17 = vsyncpa [#allocation4], 0
    %18 = vsyncpa [#allocation6], 0
    %19 = vsyncpa [#allocation9], 0
    // Predicated region
    $region2: #{bert_patch_forward.2} parent=1 // pred_check
      _
    $region3: #{bert_patch_forward.2} parent=1 // pred_check_branch
      %21 = sbr.rel (0) target = $region5
    $region4: #{bert_patch_forward.2} parent=1 // pred_region
      _
    $region5: #{bert_patch_forward.2} parent=1 // pred_fallthru
      _
    // Predicated region
    $region6: #{bert_patch_forward.2} parent=1 // pred_check
      _
    $region7: #{bert_patch_forward.2} parent=1 // pred_check_branch
      %23 = sbr.rel (0) target = $region9
    $region8: #{bert_patch_forward.2} parent=1 // pred_region
      _
    $region9: #{bert_patch_forward.2} parent=1 // pred_fallthru
      _
    // Predicated region
    $region10: #{bert_patch_forward.2} parent=1 // pred_check
      _
    $region11: #{bert_patch_forward.2} parent=1 // pred_check_branch
      %25 = sbr.rel (0) target = $region13
    $region12: #{bert_patch_forward.2} parent=1 // pred_region
      _
    $region13: #{bert_patch_forward.2} parent=1 // pred_fallthru
      _
    // Predicated region
    $region14: #{bert_patch_forward.2} parent=1 // pred_check
      _
    $region15: #{bert_patch_forward.2} parent=1 // pred_check_branch
      %27 = sbr.rel (0) target = $region17
    $region16: #{bert_patch_forward.2} parent=1 // pred_region
      _
    $region17: #{bert_patch_forward.2} parent=1 // pred_fallthru
      _
    // Predicated region
    $region18: #{bert_patch_forward.2} parent=1 // pred_check
      _
    $region19: #{bert_patch_forward.2} parent=1 // pred_check_branch
      %29 = sbr.rel (0) target = $region21
    $region20: #{bert_patch_forward.2} parent=1 // pred_region
      _
    $region21: #{bert_patch_forward.2} parent=1 // pred_fallthru
      _
    // Predicated region
    $region22: #{bert_patch_forward.2} parent=1 // pred_check
      _
    $region23: #{bert_patch_forward.2} parent=1 // pred_check_branch
      %31 = sbr.rel (0) target = $region25
    $region24: #{bert_patch_forward.2} parent=1 // pred_region
      _
    $region25: #{bert_patch_forward.2} parent=1 // pred_fallthru
      _
    // Predicated region
    $region26: #{bert_patch_forward.2} parent=1 // pred_check
      _
    $region27: #{bert_patch_forward.2} parent=1 // pred_check_branch
      %33 = sbr.rel (0) target = $region29
    $region28: #{bert_patch_forward.2} parent=1 // pred_region
      %s35 = ssub.s32 16, 16
      %36 = vsyncadd [#allocation4], %s35
      %s38 = sshll.u32 %s6, 4
      %s39 = int_to_ptr.vmem [resolvable:$true] %s38
      %41 = dma.vmem_to_smem %s39, 16, [#allocation3], [#allocation4]
    $region29: #{bert_patch_forward.2} parent=1 // pred_fallthru
      _
    // Predicated region
    $region30: #{bert_patch_forward.2} parent=1 // pred_check
      _
    $region31: #{bert_patch_forward.2} parent=1 // pred_check_branch
      %43 = sbr.rel (0) target = $region33
    $region32: #{bert_patch_forward.2} parent=1 // pred_region
      %s45 = ssub.s32 16, 16
      %46 = vsyncadd [#allocation6], %s45
      %s48 = sshll.u32 %s7, 4
      %s49 = int_to_ptr.vmem [resolvable:$true] %s48
      %51 = dma.vmem_to_smem %s49, 16, [#allocation5], [#allocation6]
    $region33: #{bert_patch_forward.2} parent=1 // pred_fallthru
      _
    // Predicated region
    $region34: #{bert_patch_forward.2} parent=1 // pred_check
      _
    $region35: #{bert_patch_forward.2} parent=1 // pred_check_branch
      %53 = sbr.rel (0) target = $region37
    $region36: #{bert_patch_forward.2} parent=1 // pred_region
      %s55 = ssub.s32 16, 16
      %56 = vsyncadd [#allocation6], %s55
      %s58 = sshll.u32 %s8, 4
      %s59 = int_to_ptr.vmem [resolvable:$true] %s58
      %61 = dma.vmem_to_smem %s59, 16, [#allocation7], [#allocation6]
    $region37: #{bert_patch_forward.2} parent=1 // pred_fallthru
      _
    // Predicated region
    $region38: #{bert_patch_forward.2} parent=1 // pred_check
      _
    $region39: #{bert_patch_forward.2} parent=1 // pred_check_branch
      %63 = sbr.rel (0) target = $region41
    $region40: #{bert_patch_forward.2} parent=1 // pred_region
      %s65 = ssub.s32 16, 16
      %66 = vsyncadd [#allocation9], %s65
      %s68 = sshll.u32 %s9, 4
      %s69 = int_to_ptr.vmem [resolvable:$true] %s68
      %71 = dma.vmem_to_smem %s69, 16, [#allocation8], [#allocation9]
    $region41: #{bert_patch_forward.2} parent=1 // pred_fallthru
      _
    // Predicated region
    $region42: #{bert_patch_forward.2} parent=1 // pred_check
      _
    $region43: #{bert_patch_forward.2} parent=1 // pred_check_branch
      %73 = sbr.rel (0) target = $region45
    $region44: #{bert_patch_forward.2} parent=1 // pred_region
      _
    $region45: #{bert_patch_forward.2} parent=1 // pred_fallthru
      _
    // Predicated region
    $region46: #{bert_patch_forward.2} parent=1 // pred_check
      _
    $region47: #{bert_patch_forward.2} parent=1 // pred_check_branch
      %75 = sbr.rel (0) target = $region49
    $region48: #{bert_patch_forward.2} parent=1 // pred_region
      %76 = dma.done [#allocation4], 16
    $region49: #{bert_patch_forward.2} parent=1 // pred_fallthru
      _
    // Predicated region
    $region50: #{bert_patch_forward.2} parent=1 // pred_check
      _
    $region51: #{bert_patch_forward.2} parent=1 // pred_check_branch
      %78 = sbr.rel (0) target = $region53
    $region52: #{bert_patch_forward.2} parent=1 // pred_region
      %79 = dma.done [#allocation6], 16
    $region53: #{bert_patch_forward.2} parent=1 // pred_fallthru
      _
    // Predicated region
    $region54: #{bert_patch_forward.2} parent=1 // pred_check
      _
    $region55: #{bert_patch_forward.2} parent=1 // pred_check_branch
      %81 = sbr.rel (0) target = $region57
    $region56: #{bert_patch_forward.2} parent=1 // pred_region
      %82 = dma.done [#allocation6], 16
    $region57: #{bert_patch_forward.2} parent=1 // pred_fallthru
      _
    // Predicated region
    $region58: #{bert_patch_forward.2} parent=1 // pred_check
      _
    $region59: #{bert_patch_forward.2} parent=1 // pred_check_branch
      %84 = sbr.rel (0) target = $region61
    $region60: #{bert_patch_forward.2} parent=1 // pred_region
      %85 = dma.done [#allocation9], 16
    $region61: #{bert_patch_forward.2} parent=1 // pred_fallthru
      _
    %86 = sfence
    %v88 = vld [vmem:[%s0] sm:$0xf]
    %v89 = vld [vmem:[%s0 + $0x4] sm:$0xf]
    %v90 = vld [vmem:[%s0 + $0x8] sm:$0xf]
    %v91 = vld [vmem:[%s0 + $0xc] sm:$0xf]
    %v92 = vld [vmem:[%s0 + $0x10] sm:$0xf]
    %v93 = vld [vmem:[%s0 + $0x14] sm:$0xf]
    %v94 = vld [vmem:[%s0 + $0x18] sm:$0xf]
    %v95 = vld [vmem:[%s0 + $0x1c] sm:$0xf]
    %v96 = vld [vmem:[%s4] sm:$0xf]
    %v97 = vld [vmem:[%s4 + $0x4] sm:$0xf]
    %v98 = vld [vmem:[%s4 + $0x8] sm:$0xf]
    %v99 = vld [vmem:[%s4 + $0xc] sm:$0xf]
    %v108 = vunpack.c.l.b16 %v88
    %v109 = vunpack.c.l.b16 %v89
    %v110 = vunpack.c.l.b16 %v90
    %v111 = vunpack.c.l.b16 %v91
    %v112 = vunpack.c.l.b16 %v92
    %v113 = vunpack.c.l.b16 %v93
    %v114 = vunpack.c.l.b16 %v94
    %v115 = vunpack.c.l.b16 %v95
    %v116 = vpack.c.b16 %v109, %v108
    %v117 = vpack.c.b16 %v111, %v110
    %v118 = vpack.c.b16 %v113, %v112
    %v119 = vpack.c.b16 %v115, %v114
    %v124 = vunpack.c.l.b16 %v96
    %v125 = vunpack.c.l.b16 %v97
    %v126 = vunpack.c.l.b16 %v98
    %v127 = vunpack.c.l.b16 %v99
    %v128 = vpack.c.b16 %v125, %v124
    %v129 = vpack.c.b16 %v127, %v126
    %vm132 = vcmask 261120
    %v134 = vsel %vm132, %v116, 0
    %v137 = vsel %vm132, %v117, 0
    %v140 = vsel %vm132, %v118, 0
    %v143 = vsel %vm132, %v119, 0
    %145 = vmatprep.subr.bf16.mxu0 0
    %146 = vmatpush1.bf16.msra.mxu0 %v128
    %147 = vmatprep.subr.bf16.mxu0 0
    %148 = vmatpush1.bf16.msra.mxu0 %v129
    %149 = vmatprep.subr.bf16.mxu0 0
    %150 = vmatpush1.bf16.msra.mxu0 0
    %151 = vmatprep.subr.bf16.mxu0 0
    %152 = vmatpush1.bf16.msra.mxu0 0
    %153 = vmatprep.subr.bf16.mxu0 0
    %154 = vmatpush1.bf16.msra.mxu0 0
    %155 = vmatprep.subr.bf16.mxu0 0
    %156 = vmatpush1.bf16.msra.mxu0 0
    %157 = vmatprep.subr.bf16.mxu0 0
    %158 = vmatpush1.bf16.msra.mxu0 0
    %159 = vmatprep.subr.bf16.mxu0 0
    %160 = vmatpush1.bf16.msra.mxu0 0
    %161 = vmatprep.subr.bf16.mxu0 0
    %162 = vmatpush1.bf16.msra.mxu0 0
    %163 = vmatprep.subr.bf16.mxu0 0
    %164 = vmatpush1.bf16.msra.mxu0 0
    %165 = vmatprep.subr.bf16.mxu0 0
    %166 = vmatpush1.bf16.msra.mxu0 0
    %167 = vmatprep.subr.bf16.mxu0 0
    %168 = vmatpush1.bf16.msra.mxu0 0
    %169 = vmatprep.subr.bf16.mxu0 0
    %170 = vmatpush1.bf16.msra.mxu0 0
    %171 = vmatprep.subr.bf16.mxu0 0
    %172 = vmatpush1.bf16.msra.mxu0 0
    %173 = vmatprep.subr.bf16.mxu0 0
    %174 = vmatpush1.bf16.msra.mxu0 0
    %175 = vmatprep.subr.bf16.mxu0 0
    %176 = vmatpush1.bf16.msra.mxu0 0
    %177 = vmatprep.mubr.bf16.mxu0 0
    %178 = vmatmul.mubr.bf16.gmra.mrb[0].mxu0 %v134
    %v179 = vpop.f32.mrb[0].mxu0
    %v180 = vadd.f32 0.0, %v179
    %v181 = vpop.f32.mrb[0].mxu0
    %v182 = vpop.f32.mrb[0].mxu0
    %v183 = vadd.f32 0.0, %v182
    %v184 = vpop.f32.mrb[0].mxu0
    %185 = vmatprep.mubr.bf16.mxu0 0
    %186 = vmatmul.mubr.bf16.gmra.mrb[0].mxu0 %v137
    %v187 = vpop.f32.mrb[0].mxu0
    %v188 = vadd.f32 0.0, %v187
    %v189 = vpop.f32.mrb[0].mxu0
    %v190 = vpop.f32.mrb[0].mxu0
    %v191 = vadd.f32 0.0, %v190
    %v192 = vpop.f32.mrb[0].mxu0
    %193 = vmatprep.mubr.bf16.mxu0 0
    %194 = vmatmul.mubr.bf16.gmra.mrb[0].mxu0 %v140
    %v195 = vpop.f32.mrb[0].mxu0
    %v196 = vadd.f32 0.0, %v195
    %v197 = vpop.f32.mrb[0].mxu0
    %v198 = vpop.f32.mrb[0].mxu0
    %v199 = vadd.f32 0.0, %v198
    %v200 = vpop.f32.mrb[0].mxu0
    %201 = vmatprep.mubr.bf16.mxu0 0
    %202 = vmatmul.mubr.bf16.gmra.mrb[0].mxu0 %v143
    %v203 = vpop.f32.mrb[0].mxu0
    %v204 = vadd.f32 0.0, %v203
    %v205 = vpop.f32.mrb[0].mxu0
    %v206 = vpop.f32.mrb[0].mxu0
    %v207 = vadd.f32 0.0, %v206
    %v208 = vpop.f32.mrb[0].mxu0
    %209 = vdwg.mxu0
    %s210 = scalar_lea.vmem %s4, 16
    %v211 = vld [vmem:[%s210] sm:$0xf]
    %v212 = vld [vmem:[%s210 + $0x4] sm:$0xf]
    %v213 = vld [vmem:[%s210 + $0x8] sm:$0xf]
    %v214 = vld [vmem:[%s210 + $0xc] sm:$0xf]
    %v219 = vunpack.c.l.b16 %v211
    %v220 = vunpack.c.l.b16 %v212
    %v221 = vunpack.c.l.b16 %v213
    %v222 = vunpack.c.l.b16 %v214
    %v223 = vpack.c.b16 %v220, %v219
    %v224 = vpack.c.b16 %v222, %v221
    %227 = vmatprep.subr.bf16.mxu0 0
    %228 = vmatpush1.bf16.msra.mxu0 %v223
    %229 = vmatprep.subr.bf16.mxu0 0
    %230 = vmatpush1.bf16.msra.mxu0 %v224
    %231 = vmatprep.subr.bf16.mxu0 0
    %232 = vmatpush1.bf16.msra.mxu0 0
    %233 = vmatprep.subr.bf16.mxu0 0
    %234 = vmatpush1.bf16.msra.mxu0 0
    %235 = vmatprep.subr.bf16.mxu0 0
    %236 = vmatpush1.bf16.msra.mxu0 0
    %237 = vmatprep.subr.bf16.mxu0 0
    %238 = vmatpush1.bf16.msra.mxu0 0
    %239 = vmatprep.subr.bf16.mxu0 0
    %240 = vmatpush1.bf16.msra.mxu0 0
    %241 = vmatprep.subr.bf16.mxu0 0
    %242 = vmatpush1.bf16.msra.mxu0 0
    %243 = vmatprep.subr.bf16.mxu0 0
    %244 = vmatpush1.bf16.msra.mxu0 0
    %245 = vmatprep.subr.bf16.mxu0 0
    %246 = vmatpush1.bf16.msra.mxu0 0
    %247 = vmatprep.subr.bf16.mxu0 0
    %248 = vmatpush1.bf16.msra.mxu0 0
    %249 = vmatprep.subr.bf16.mxu0 0
    %250 = vmatpush1.bf16.msra.mxu0 0
    %251 = vmatprep.subr.bf16.mxu0 0
    %252 = vmatpush1.bf16.msra.mxu0 0
    %253 = vmatprep.subr.bf16.mxu0 0
    %254 = vmatpush1.bf16.msra.mxu0 0
    %255 = vmatprep.subr.bf16.mxu0 0
    %256 = vmatpush1.bf16.msra.mxu0 0
    %257 = vmatprep.subr.bf16.mxu0 0
    %258 = vmatpush1.bf16.msra.mxu0 0
    %259 = vmatprep.mubr.bf16.mxu0 0
    %260 = vmatmul.mubr.bf16.gmra.mrb[0].mxu0 %v134
    %v261 = vpop.f32.mrb[0].mxu0
    %v262 = vadd.f32 0.0, %v261
    %v263 = vpop.f32.mrb[0].mxu0
    %v264 = vpop.f32.mrb[0].mxu0
    %v265 = vadd.f32 0.0, %v264
    %v266 = vpop.f32.mrb[0].mxu0
    %267 = vmatprep.mubr.bf16.mxu0 0
    %268 = vmatmul.mubr.bf16.gmra.mrb[0].mxu0 %v137
    %v269 = vpop.f32.mrb[0].mxu0
    %v270 = vadd.f32 0.0, %v269
    %v271 = vpop.f32.mrb[0].mxu0
    %v272 = vpop.f32.mrb[0].mxu0
    %v273 = vadd.f32 0.0, %v272
    %v274 = vpop.f32.mrb[0].mxu0
    %275 = vmatprep.mubr.bf16.mxu0 0
    %276 = vmatmul.mubr.bf16.gmra.mrb[0].mxu0 %v140
    %v277 = vpop.f32.mrb[0].mxu0
    %v278 = vadd.f32 0.0, %v277
    %v279 = vpop.f32.mrb[0].mxu0
    %v280 = vpop.f32.mrb[0].mxu0
    %v281 = vadd.f32 0.0, %v280
    %v282 = vpop.f32.mrb[0].mxu0
    %283 = vmatprep.mubr.bf16.mxu0 0
    %284 = vmatmul.mubr.bf16.gmra.mrb[0].mxu0 %v143
    %v285 = vpop.f32.mrb[0].mxu0
    %v286 = vadd.f32 0.0, %v285
    %v287 = vpop.f32.mrb[0].mxu0
    %v288 = vpop.f32.mrb[0].mxu0
    %v289 = vadd.f32 0.0, %v288
    %v290 = vpop.f32.mrb[0].mxu0
    %291 = vdwg.mxu0
    %s292 = scalar_lea.vmem %s4, 32
    %v293 = vld [vmem:[%s292] sm:$0xf]
    %v294 = vld [vmem:[%s292 + $0x4] sm:$0xf]
    %v295 = vld [vmem:[%s292 + $0x8] sm:$0xf]
    %v296 = vld [vmem:[%s292 + $0xc] sm:$0xf]
    %v301 = vunpack.c.l.b16 %v293
    %v302 = vunpack.c.l.b16 %v294
    %v303 = vunpack.c.l.b16 %v295
    %v304 = vunpack.c.l.b16 %v296
    %v305 = vpack.c.b16 %v302, %v301
    %v306 = vpack.c.b16 %v304, %v303
    %309 = vmatprep.subr.bf16.mxu0 0
    %310 = vmatpush1.bf16.msra.mxu0 %v305
    %311 = vmatprep.subr.bf16.mxu0 0
    %312 = vmatpush1.bf16.msra.mxu0 %v306
    %313 = vmatprep.subr.bf16.mxu0 0
    %314 = vmatpush1.bf16.msra.mxu0 0
    %315 = vmatprep.subr.bf16.mxu0 0
    %316 = vmatpush1.bf16.msra.mxu0 0
    %317 = vmatprep.subr.bf16.mxu0 0
    %318 = vmatpush1.bf16.msra.mxu0 0
    %319 = vmatprep.subr.bf16.mxu0 0
    %320 = vmatpush1.bf16.msra.mxu0 0
    %321 = vmatprep.subr.bf16.mxu0 0
    %322 = vmatpush1.bf16.msra.mxu0 0
    %323 = vmatprep.subr.bf16.mxu0 0
    %324 = vmatpush1.bf16.msra.mxu0 0
    %325 = vmatprep.subr.bf16.mxu0 0
    %326 = vmatpush1.bf16.msra.mxu0 0
    %327 = vmatprep.subr.bf16.mxu0 0
    %328 = vmatpush1.bf16.msra.mxu0 0
    %329 = vmatprep.subr.bf16.mxu0 0
    %330 = vmatpush1.bf16.msra.mxu0 0
    %331 = vmatprep.subr.bf16.mxu0 0
    %332 = vmatpush1.bf16.msra.mxu0 0
    %333 = vmatprep.subr.bf16.mxu0 0
    %334 = vmatpush1.bf16.msra.mxu0 0
    %335 = vmatprep.subr.bf16.mxu0 0
    %336 = vmatpush1.bf16.msra.mxu0 0
    %337 = vmatprep.subr.bf16.mxu0 0
    %338 = vmatpush1.bf16.msra.mxu0 0
    %339 = vmatprep.subr.bf16.mxu0 0
    %340 = vmatpush1.bf16.msra.mxu0 0
    %341 = vmatprep.mubr.bf16.mxu0 0
    %342 = vmatmul.mubr.bf16.gmra.mrb[0].mxu0 %v134
    %v343 = vpop.f32.mrb[0].mxu0
    %v344 = vadd.f32 0.0, %v343
    %v345 = vpop.f32.mrb[0].mxu0
    %v346 = vpop.f32.mrb[0].mxu0
    %v347 = vadd.f32 0.0, %v346
    %v348 = vpop.f32.mrb[0].mxu0
    %349 = vmatprep.mubr.bf16.mxu0 0
    %350 = vmatmul.mubr.bf16.gmra.mrb[0].mxu0 %v137
    %v351 = vpop.f32.mrb[0].mxu0
    %v352 = vadd.f32 0.0, %v351
    %v353 = vpop.f32.mrb[0].mxu0
    %v354 = vpop.f32.mrb[0].mxu0
    %v355 = vadd.f32 0.0, %v354
    %v356 = vpop.f32.mrb[0].mxu0
    %357 = vmatprep.mubr.bf16.mxu0 0
    %358 = vmatmul.mubr.bf16.gmra.mrb[0].mxu0 %v140
    %v359 = vpop.f32.mrb[0].mxu0
    %v360 = vadd.f32 0.0, %v359
    %v361 = vpop.f32.mrb[0].mxu0
    %v362 = vpop.f32.mrb[0].mxu0
    %v363 = vadd.f32 0.0, %v362
    %v364 = vpop.f32.mrb[0].mxu0
    %365 = vmatprep.mubr.bf16.mxu0 0
    %366 = vmatmul.mubr.bf16.gmra.mrb[0].mxu0 %v143
    %v367 = vpop.f32.mrb[0].mxu0
    %v368 = vadd.f32 0.0, %v367
    %v369 = vpop.f32.mrb[0].mxu0
    %v370 = vpop.f32.mrb[0].mxu0
    %v371 = vadd.f32 0.0, %v370
    %v372 = vpop.f32.mrb[0].mxu0
    %373 = vdwg.mxu0
    %v374 = vrot.slane %v262, 1
    %v375 = vrot.slane %v265, 1
    %v376 = vrot.slane %v270, 1
    %v377 = vrot.slane %v273, 1
    %v378 = vrot.slane %v278, 1
    %v379 = vrot.slane %v281, 1
    %v380 = vrot.slane %v286, 1
    %v381 = vrot.slane %v289, 1
    %v382 = vlaneseq
    %v383 = vshrl.u32 %v382, 7
    %vm384 = vcmp.lt.s32.totalorder %v383, 7
    %v385 = vsel %vm384, %v380, %v381
    %v386 = vsel %vm384, %v379, %v380
    %v387 = vsel %vm384, %v378, %v379
    %v388 = vsel %vm384, %v377, %v378
    %v389 = vsel %vm384, %v376, %v377
    %v390 = vsel %vm384, %v375, %v376
    %v391 = vsel %vm384, %v374, %v375
    %v392 = vsel %vm384, %v381, %v374
    %v393 = vrot.slane %v344, 2
    %v394 = vrot.slane %v347, 2
    %v395 = vrot.slane %v352, 2
    %v396 = vrot.slane %v355, 2
    %v397 = vrot.slane %v360, 2
    %v398 = vrot.slane %v363, 2
    %v399 = vrot.slane %v368, 2
    %v400 = vrot.slane %v371, 2
    %vm401 = vcmp.lt.s32.totalorder %v383, 6
    %v402 = vsel %vm401, %v399, %v400
    %v403 = vsel %vm401, %v398, %v399
    %v404 = vsel %vm401, %v397, %v398
    %v405 = vsel %vm401, %v396, %v397
    %v406 = vsel %vm401, %v395, %v396
    %v407 = vsel %vm401, %v394, %v395
    %v408 = vsel %vm401, %v393, %v394
    %v409 = vsel %vm401, %v400, %v393
    %v410 = vsel %vm384, 1, 0
    %v411 = vcvt.s32.f32 %v410
    %v412 = vsel %vm401, 1, 0
    %v413 = vcvt.s32.f32 %v412
    %v414 = vmul.f32 %v391, %v411
    %v415 = vmul.f32 %v390, %v411
    %v416 = vmul.f32 %v389, %v411
    %v417 = vmul.f32 %v388, %v411
    %v418 = vmul.f32 %v387, %v411
    %v419 = vmul.f32 %v386, %v411
    %v420 = vmul.f32 %v385, %v411
    %v421 = vmul.f32 %v392, %v411
    %v422 = vadd.f32 %v180, %v414
    %v423 = vadd.f32 %v183, %v415
    %v424 = vadd.f32 %v188, %v416
    %v425 = vadd.f32 %v191, %v417
    %v426 = vadd.f32 %v196, %v418
    %v427 = vadd.f32 %v199, %v419
    %v428 = vadd.f32 %v204, %v420
    %v429 = vadd.f32 %v207, %v421
    %v430 = vmul.f32 %v408, %v413
    %v431 = vmul.f32 %v407, %v413
    %v432 = vmul.f32 %v406, %v413
    %v433 = vmul.f32 %v405, %v413
    %v434 = vmul.f32 %v404, %v413
    %v435 = vmul.f32 %v403, %v413
    %v436 = vmul.f32 %v402, %v413
    %v437 = vmul.f32 %v409, %v413
    %v438 = vadd.f32 %v422, %v430
    %v439 = vadd.f32 %v423, %v431
    %v440 = vadd.f32 %v424, %v432
    %v441 = vadd.f32 %v425, %v433
    %v442 = vadd.f32 %v426, %v434
    %v443 = vadd.f32 %v427, %v435
    %v444 = vadd.f32 %v428, %v436
    %v445 = vadd.f32 %v429, %v437
    %v446 = vld [vmem:[%s5] sm:$0x1]
    %v448 = vlaneseq
    %v449 = vshrl.u32 %v448, 7
    %v450 = vsub.s32 0, %v449
    %v451 = vrot.slane %v446, %v450
    %v453 = vadd.f32 %v438, %v451
    %v454 = vadd.f32 %v439, %v451
    %v455 = vadd.f32 %v440, %v451
    %v456 = vadd.f32 %v441, %v451
    %v457 = vadd.f32 %v442, %v451
    %v458 = vadd.f32 %v443, %v451
    %v459 = vadd.f32 %v444, %v451
    %v460 = vadd.f32 %v445, %v451
    %v461 = vmax.f32 %v453, 0.0
    %v462 = vmax.f32 %v454, 0.0
    %v463 = vmax.f32 %v455, 0.0
    %v464 = vmax.f32 %v456, 0.0
    %v465 = vmax.f32 %v457, 0.0
    %v466 = vmax.f32 %v458, 0.0
    %v467 = vmax.f32 %v459, 0.0
    %v468 = vmax.f32 %v460, 0.0
    %v469 = vmul.f32 %v461, %v461
    %v470 = vmul.f32 %v462, %v462
    %v471 = vmul.f32 %v463, %v463
    %v472 = vmul.f32 %v464, %v464
    %v473 = vmul.f32 %v465, %v465
    %v474 = vmul.f32 %v466, %v466
    %v475 = vmul.f32 %v467, %v467
    %v476 = vmul.f32 %v468, %v468
    %v477 = vsel %vm132, %v469, 0.0
    %478 = vadd.xlane.f32.xlu0 %v477
    %v479 = vpop.xlane.xlu0 %478
    %v480 = vsel %vm132, %v470, 0.0
    %481 = vadd.xlane.f32.xlu0 %v480
    %v482 = vpop.xlane.xlu0 %481
    %v483 = vsel %vm132, %v471, 0.0
    %484 = vadd.xlane.f32.xlu0 %v483
    %v485 = vpop.xlane.xlu0 %484
    %v486 = vsel %vm132, %v472, 0.0
    %487 = vadd.xlane.f32.xlu0 %v486
    %v488 = vpop.xlane.xlu0 %487
    %v489 = vsel %vm132, %v473, 0.0
    %490 = vadd.xlane.f32.xlu0 %v489
    %v491 = vpop.xlane.xlu0 %490
    %v492 = vsel %vm132, %v474, 0.0
    %493 = vadd.xlane.f32.xlu0 %v492
    %v494 = vpop.xlane.xlu0 %493
    %v495 = vsel %vm132, %v475, 0.0
    %496 = vadd.xlane.f32.xlu0 %v495
    %v497 = vpop.xlane.xlu0 %496
    %v498 = vsel %vm132, %v476, 0.0
    %499 = vadd.xlane.f32.xlu0 %v498
    %v500 = vpop.xlane.xlu0 %499
    %v501 = vrsqrt.pop %v479
    %v502 = vmul.f32 %v479, %v501
    %vm503 = vcmp.eq.f32.partialorder %v479, inf
    %v504 = vsel %vm503, %v479, %v502
    %vm505 = vcmp.eq.f32.partialorder %v479, 0.0
    %v506 = vand.u32 %v479, 2147483648
    %v507 = vsel %vm505, %v506, %v504
    %v508 = vrsqrt.pop %v482
    %v509 = vmul.f32 %v482, %v508
    %vm510 = vcmp.eq.f32.partialorder %v482, inf
    %v511 = vsel %vm510, %v482, %v509
    %vm512 = vcmp.eq.f32.partialorder %v482, 0.0
    %v513 = vand.u32 %v482, 2147483648
    %v514 = vsel %vm512, %v513, %v511
    %v515 = vrsqrt.pop %v485
    %v516 = vmul.f32 %v485, %v515
    %vm517 = vcmp.eq.f32.partialorder %v485, inf
    %v518 = vsel %vm517, %v485, %v516
    %vm519 = vcmp.eq.f32.partialorder %v485, 0.0
    %v520 = vand.u32 %v485, 2147483648
    %v521 = vsel %vm519, %v520, %v518
    %v522 = vrsqrt.pop %v488
    %v523 = vmul.f32 %v488, %v522
    %vm524 = vcmp.eq.f32.partialorder %v488, inf
    %v525 = vsel %vm524, %v488, %v523
    %vm526 = vcmp.eq.f32.partialorder %v488, 0.0
    %v527 = vand.u32 %v488, 2147483648
    %v528 = vsel %vm526, %v527, %v525
    %v529 = vrsqrt.pop %v491
    %v530 = vmul.f32 %v491, %v529
    %vm531 = vcmp.eq.f32.partialorder %v491, inf
    %v532 = vsel %vm531, %v491, %v530
    %vm533 = vcmp.eq.f32.partialorder %v491, 0.0
    %v534 = vand.u32 %v491, 2147483648
    %v535 = vsel %vm533, %v534, %v532
    %v536 = vrsqrt.pop %v494
    %v537 = vmul.f32 %v494, %v536
    %vm538 = vcmp.eq.f32.partialorder %v494, inf
    %v539 = vsel %vm538, %v494, %v537
    %vm540 = vcmp.eq.f32.partialorder %v494, 0.0
    %v541 = vand.u32 %v494, 2147483648
    %v542 = vsel %vm540, %v541, %v539
    %v543 = vrsqrt.pop %v497
    %v544 = vmul.f32 %v497, %v543
    %vm545 = vcmp.eq.f32.partialorder %v497, inf
    %v546 = vsel %vm545, %v497, %v544
    %vm547 = vcmp.eq.f32.partialorder %v497, 0.0
    %v548 = vand.u32 %v497, 2147483648
    %v549 = vsel %vm547, %v548, %v546
    %v550 = vrsqrt.pop %v500
    %v551 = vmul.f32 %v500, %v550
    %vm552 = vcmp.eq.f32.partialorder %v500, inf
    %v553 = vsel %vm552, %v500, %v551
    %vm554 = vcmp.eq.f32.partialorder %v500, 0.0
    %v555 = vand.u32 %v500, 2147483648
    %v556 = vsel %vm554, %v555, %v553
    %v557 = vmax.f32 %v507, 1e-12
    %v558 = vmax.f32 %v514, 1e-12
    %v559 = vmax.f32 %v521, 1e-12
    %v560 = vmax.f32 %v528, 1e-12
    %v561 = vmax.f32 %v535, 1e-12
    %v562 = vmax.f32 %v542, 1e-12
    %v563 = vmax.f32 %v549, 1e-12
    %v564 = vmax.f32 %v556, 1e-12
    %v565 = vrcp.pop %v557
    %v566 = vmul.f32 %v461, %v565
    %v567 = vrcp.pop %v558
    %v568 = vmul.f32 %v462, %v567
    %v569 = vrcp.pop %v559
    %v570 = vmul.f32 %v463, %v569
    %v571 = vrcp.pop %v560
    %v572 = vmul.f32 %v464, %v571
    %v573 = vrcp.pop %v561
    %v574 = vmul.f32 %v465, %v573
    %v575 = vrcp.pop %v562
    %v576 = vmul.f32 %v466, %v575
    %v577 = vrcp.pop %v563
    %v578 = vmul.f32 %v467, %v577
    %v579 = vrcp.pop %v564
    %v580 = vmul.f32 %v468, %v579
    %v581 = vld [vmem:[%s1] sm:$0xf]
    %v582 = vld [vmem:[%s1 + $0x4] sm:$0xf]
    %v583 = vld [vmem:[%s1 + $0x8] sm:$0xf]
    %v584 = vld [vmem:[%s1 + $0xc] sm:$0xf]
    %v585 = vld [vmem:[%s1 + $0x10] sm:$0xf]
    %v586 = vld [vmem:[%s1 + $0x14] sm:$0xf]
    %v587 = vld [vmem:[%s1 + $0x18] sm:$0xf]
    %v588 = vld [vmem:[%s1 + $0x1c] sm:$0xf]
    %v589 = vld [vmem:[%s1 + $0x20] sm:$0xf]
    %v590 = vld [vmem:[%s1 + $0x24] sm:$0xf]
    %v591 = vld [vmem:[%s1 + $0x28] sm:$0xf]
    %v592 = vld [vmem:[%s1 + $0x2c] sm:$0xf]
    %v593 = vld [vmem:[%s1 + $0x30] sm:$0xf]
    %v594 = vld [vmem:[%s1 + $0x34] sm:$0xf]
    %v595 = vld [vmem:[%s1 + $0x38] sm:$0xf]
    %v596 = vld [vmem:[%s1 + $0x3c] sm:$0xf]
    %v613 = vunpack.c.l.b16 %v581
    %v614 = vunpack.c.l.b16 %v582
    %v615 = vunpack.c.l.b16 %v583
    %v616 = vunpack.c.l.b16 %v584
    %v617 = vunpack.c.l.b16 %v585
    %v618 = vunpack.c.l.b16 %v586
    %v619 = vunpack.c.l.b16 %v587
    %v620 = vunpack.c.l.b16 %v588
    %v621 = vunpack.c.l.b16 %v589
    %v622 = vunpack.c.l.b16 %v590
    %v623 = vunpack.c.l.b16 %v591
    %v624 = vunpack.c.l.b16 %v592
    %v625 = vunpack.c.l.b16 %v593
    %v626 = vunpack.c.l.b16 %v594
    %v627 = vunpack.c.l.b16 %v595
    %v628 = vunpack.c.l.b16 %v596
    %v629 = vpack.c.b16 %v614, %v613
    %v630 = vpack.c.b16 %v616, %v615
    %v631 = vpack.c.b16 %v618, %v617
    %v632 = vpack.c.b16 %v620, %v619
    %v633 = vpack.c.b16 %v622, %v621
    %v634 = vpack.c.b16 %v624, %v623
    %v635 = vpack.c.b16 %v626, %v625
    %v636 = vpack.c.b16 %v628, %v627
    %v638 = vsel %vm132, %v629, 0
    %v641 = vsel %vm132, %v630, 0
    %v644 = vsel %vm132, %v631, 0
    %v647 = vsel %vm132, %v632, 0
    %v650 = vsel %vm132, %v633, 0
    %v653 = vsel %vm132, %v634, 0
    %v656 = vsel %vm132, %v635, 0
    %v659 = vsel %vm132, %v636, 0
    %661 = vmatprep.subr.bf16.mxu0 0
    %662 = vmatpush1.bf16.msra.mxu0 %v128
    %663 = vmatprep.subr.bf16.mxu0 0
    %664 = vmatpush1.bf16.msra.mxu0 %v129
    %665 = vmatprep.subr.bf16.mxu0 0
    %666 = vmatpush1.bf16.msra.mxu0 0
    %667 = vmatprep.subr.bf16.mxu0 0
    %668 = vmatpush1.bf16.msra.mxu0 0
    %669 = vmatprep.subr.bf16.mxu0 0
    %670 = vmatpush1.bf16.msra.mxu0 0
    %671 = vmatprep.subr.bf16.mxu0 0
    %672 = vmatpush1.bf16.msra.mxu0 0
    %673 = vmatprep.subr.bf16.mxu0 0
    %674 = vmatpush1.bf16.msra.mxu0 0
    %675 = vmatprep.subr.bf16.mxu0 0
    %676 = vmatpush1.bf16.msra.mxu0 0
    %677 = vmatprep.subr.bf16.mxu0 0
    %678 = vmatpush1.bf16.msra.mxu0 0
    %679 = vmatprep.subr.bf16.mxu0 0
    %680 = vmatpush1.bf16.msra.mxu0 0
    %681 = vmatprep.subr.bf16.mxu0 0
    %682 = vmatpush1.bf16.msra.mxu0 0
    %683 = vmatprep.subr.bf16.mxu0 0
    %684 = vmatpush1.bf16.msra.mxu0 0
    %685 = vmatprep.subr.bf16.mxu0 0
    %686 = vmatpush1.bf16.msra.mxu0 0
    %687 = vmatprep.subr.bf16.mxu0 0
    %688 = vmatpush1.bf16.msra.mxu0 0
    %689 = vmatprep.subr.bf16.mxu0 0
    %690 = vmatpush1.bf16.msra.mxu0 0
    %691 = vmatprep.subr.bf16.mxu0 0
    %692 = vmatpush1.bf16.msra.mxu0 0
    %693 = vmatprep.mubr.bf16.mxu0 0
    %694 = vmatmul.mubr.bf16.gmra.mrb[0].mxu0 %v638
    %v695 = vpop.f32.mrb[0].mxu0
    %v696 = vadd.f32 0.0, %v695
    %v697 = vpop.f32.mrb[0].mxu0
    %v698 = vpop.f32.mrb[0].mxu0
    %v699 = vadd.f32 0.0, %v698
    %v700 = vpop.f32.mrb[0].mxu0
    %701 = vmatprep.mubr.bf16.mxu0 0
    %702 = vmatmul.mubr.bf16.gmra.mrb[0].mxu0 %v641
    %v703 = vpop.f32.mrb[0].mxu0
    %v704 = vadd.f32 0.0, %v703
    %v705 = vpop.f32.mrb[0].mxu0
    %v706 = vpop.f32.mrb[0].mxu0
    %v707 = vadd.f32 0.0, %v706
    %v708 = vpop.f32.mrb[0].mxu0
    %709 = vmatprep.mubr.bf16.mxu0 0
    %710 = vmatmul.mubr.bf16.gmra.mrb[0].mxu0 %v644
    %v711 = vpop.f32.mrb[0].mxu0
    %v712 = vadd.f32 0.0, %v711
    %v713 = vpop.f32.mrb[0].mxu0
    %v714 = vpop.f32.mrb[0].mxu0
    %v715 = vadd.f32 0.0, %v714
    %v716 = vpop.f32.mrb[0].mxu0
    %717 = vmatprep.mubr.bf16.mxu0 0
    %718 = vmatmul.mubr.bf16.gmra.mrb[0].mxu0 %v647
    %v719 = vpop.f32.mrb[0].mxu0
    %v720 = vadd.f32 0.0, %v719
    %v721 = vpop.f32.mrb[0].mxu0
    %v722 = vpop.f32.mrb[0].mxu0
    %v723 = vadd.f32 0.0, %v722
    %v724 = vpop.f32.mrb[0].mxu0
    %725 = vmatprep.mubr.bf16.mxu0 0
    %726 = vmatmul.mubr.bf16.gmra.mrb[0].mxu0 %v650
    %v727 = vpop.f32.mrb[0].mxu0
    %v728 = vadd.f32 0.0, %v727
    %v729 = vpop.f32.mrb[0].mxu0
    %v730 = vpop.f32.mrb[0].mxu0
    %v731 = vadd.f32 0.0, %v730
    %v732 = vpop.f32.mrb[0].mxu0
    %733 = vmatprep.mubr.bf16.mxu0 0
    %734 = vmatmul.mubr.bf16.gmra.mrb[0].mxu0 %v653
    %v735 = vpop.f32.mrb[0].mxu0
    %v736 = vadd.f32 0.0, %v735
    %v737 = vpop.f32.mrb[0].mxu0
    %v738 = vpop.f32.mrb[0].mxu0
    %v739 = vadd.f32 0.0, %v738
    %v740 = vpop.f32.mrb[0].mxu0
    %741 = vmatprep.mubr.bf16.mxu0 0
    %742 = vmatmul.mubr.bf16.gmra.mrb[0].mxu0 %v656
    %v743 = vpop.f32.mrb[0].mxu0
    %v744 = vadd.f32 0.0, %v743
    %v745 = vpop.f32.mrb[0].mxu0
    %v746 = vpop.f32.mrb[0].mxu0
    %v747 = vadd.f32 0.0, %v746
    %v748 = vpop.f32.mrb[0].mxu0
    %749 = vmatprep.mubr.bf16.mxu0 0
    %750 = vmatmul.mubr.bf16.gmra.mrb[0].mxu0 %v659
    %v751 = vpop.f32.mrb[0].mxu0
    %v752 = vadd.f32 0.0, %v751
    %v753 = vpop.f32.mrb[0].mxu0
    %v754 = vpop.f32.mrb[0].mxu0
    %v755 = vadd.f32 0.0, %v754
    %v756 = vpop.f32.mrb[0].mxu0
    %757 = vdwg.mxu0
    %758 = vmatprep.subr.bf16.mxu0 0
    %759 = vmatpush1.bf16.msra.mxu0 %v223
    %760 = vmatprep.subr.bf16.mxu0 0
    %761 = vmatpush1.bf16.msra.mxu0 %v224
    %762 = vmatprep.subr.bf16.mxu0 0
    %763 = vmatpush1.bf16.msra.mxu0 0
    %764 = vmatprep.subr.bf16.mxu0 0
    %765 = vmatpush1.bf16.msra.mxu0 0
    %766 = vmatprep.subr.bf16.mxu0 0
    %767 = vmatpush1.bf16.msra.mxu0 0
    %768 = vmatprep.subr.bf16.mxu0 0
    %769 = vmatpush1.bf16.msra.mxu0 0
    %770 = vmatprep.subr.bf16.mxu0 0
    %771 = vmatpush1.bf16.msra.mxu0 0
    %772 = vmatprep.subr.bf16.mxu0 0
    %773 = vmatpush1.bf16.msra.mxu0 0
    %774 = vmatprep.subr.bf16.mxu0 0
    %775 = vmatpush1.bf16.msra.mxu0 0
    %776 = vmatprep.subr.bf16.mxu0 0
    %777 = vmatpush1.bf16.msra.mxu0 0
    %778 = vmatprep.subr.bf16.mxu0 0
    %779 = vmatpush1.bf16.msra.mxu0 0
    %780 = vmatprep.subr.bf16.mxu0 0
    %781 = vmatpush1.bf16.msra.mxu0 0
    %782 = vmatprep.subr.bf16.mxu0 0
    %783 = vmatpush1.bf16.msra.mxu0 0
    %784 = vmatprep.subr.bf16.mxu0 0
    %785 = vmatpush1.bf16.msra.mxu0 0
    %786 = vmatprep.subr.bf16.mxu0 0
    %787 = vmatpush1.bf16.msra.mxu0 0
    %788 = vmatprep.subr.bf16.mxu0 0
    %789 = vmatpush1.bf16.msra.mxu0 0
    %790 = vmatprep.mubr.bf16.mxu0 0
    %791 = vmatmul.mubr.bf16.gmra.mrb[0].mxu0 %v638
    %v792 = vpop.f32.mrb[0].mxu0
    %v793 = vadd.f32 0.0, %v792
    %v794 = vpop.f32.mrb[0].mxu0
    %v795 = vpop.f32.mrb[0].mxu0
    %v796 = vadd.f32 0.0, %v795
    %v797 = vpop.f32.mrb[0].mxu0
    %798 = vmatprep.mubr.bf16.mxu0 0
    %799 = vmatmul.mubr.bf16.gmra.mrb[0].mxu0 %v641
    %v800 = vpop.f32.mrb[0].mxu0
    %v801 = vadd.f32 0.0, %v800
    %v802 = vpop.f32.mrb[0].mxu0
    %v803 = vpop.f32.mrb[0].mxu0
    %v804 = vadd.f32 0.0, %v803
    %v805 = vpop.f32.mrb[0].mxu0
    %806 = vmatprep.mubr.bf16.mxu0 0
    %807 = vmatmul.mubr.bf16.gmra.mrb[0].mxu0 %v644
    %v808 = vpop.f32.mrb[0].mxu0
    %v809 = vadd.f32 0.0, %v808
    %v810 = vpop.f32.mrb[0].mxu0
    %v811 = vpop.f32.mrb[0].mxu0
    %v812 = vadd.f32 0.0, %v811
    %v813 = vpop.f32.mrb[0].mxu0
    %814 = vmatprep.mubr.bf16.mxu0 0
    %815 = vmatmul.mubr.bf16.gmra.mrb[0].mxu0 %v647
    %v816 = vpop.f32.mrb[0].mxu0
    %v817 = vadd.f32 0.0, %v816
    %v818 = vpop.f32.mrb[0].mxu0
    %v819 = vpop.f32.mrb[0].mxu0
    %v820 = vadd.f32 0.0, %v819
    %v821 = vpop.f32.mrb[0].mxu0
    %822 = vmatprep.mubr.bf16.mxu0 0
    %823 = vmatmul.mubr.bf16.gmra.mrb[0].mxu0 %v650
    %v824 = vpop.f32.mrb[0].mxu0
    %v825 = vadd.f32 0.0, %v824
    %v826 = vpop.f32.mrb[0].mxu0
    %v827 = vpop.f32.mrb[0].mxu0
    %v828 = vadd.f32 0.0, %v827
    %v829 = vpop.f32.mrb[0].mxu0
    %830 = vmatprep.mubr.bf16.mxu0 0
    %831 = vmatmul.mubr.bf16.gmra.mrb[0].mxu0 %v653
    %v832 = vpop.f32.mrb[0].mxu0
    %v833 = vadd.f32 0.0, %v832
    %v834 = vpop.f32.mrb[0].mxu0
    %v835 = vpop.f32.mrb[0].mxu0
    %v836 = vadd.f32 0.0, %v835
    %v837 = vpop.f32.mrb[0].mxu0
    %838 = vmatprep.mubr.bf16.mxu0 0
    %839 = vmatmul.mubr.bf16.gmra.mrb[0].mxu0 %v656
    %v840 = vpop.f32.mrb[0].mxu0
    %v841 = vadd.f32 0.0, %v840
    %v842 = vpop.f32.mrb[0].mxu0
    %v843 = vpop.f32.mrb[0].mxu0
    %v844 = vadd.f32 0.0, %v843
    %v845 = vpop.f32.mrb[0].mxu0
    %846 = vmatprep.mubr.bf16.mxu0 0
    %847 = vmatmul.mubr.bf16.gmra.mrb[0].mxu0 %v659
    %v848 = vpop.f32.mrb[0].mxu0
    %v849 = vadd.f32 0.0, %v848
    %v850 = vpop.f32.mrb[0].mxu0
    %v851 = vpop.f32.mrb[0].mxu0
    %v852 = vadd.f32 0.0, %v851
    %v853 = vpop.f32.mrb[0].mxu0
    %854 = vdwg.mxu0
    %855 = vmatprep.subr.bf16.mxu0 0
    %856 = vmatpush1.bf16.msra.mxu0 %v305
    %857 = vmatprep.subr.bf16.mxu0 0
    %858 = vmatpush1.bf16.msra.mxu0 %v306
    %859 = vmatprep.subr.bf16.mxu0 0
    %860 = vmatpush1.bf16.msra.mxu0 0
    %861 = vmatprep.subr.bf16.mxu0 0
    %862 = vmatpush1.bf16.msra.mxu0 0
    %863 = vmatprep.subr.bf16.mxu0 0
    %864 = vmatpush1.bf16.msra.mxu0 0
    %865 = vmatprep.subr.bf16.mxu0 0
    %866 = vmatpush1.bf16.msra.mxu0 0
    %867 = vmatprep.subr.bf16.mxu0 0
    %868 = vmatpush1.bf16.msra.mxu0 0
    %869 = vmatprep.subr.bf16.mxu0 0
    %870 = vmatpush1.bf16.msra.mxu0 0
    %871 = vmatprep.subr.bf16.mxu0 0
    %872 = vmatpush1.bf16.msra.mxu0 0
    %873 = vmatprep.subr.bf16.mxu0 0
    %874 = vmatpush1.bf16.msra.mxu0 0
    %875 = vmatprep.subr.bf16.mxu0 0
    %876 = vmatpush1.bf16.msra.mxu0 0
    %877 = vmatprep.subr.bf16.mxu0 0
    %878 = vmatpush1.bf16.msra.mxu0 0
    %879 = vmatprep.subr.bf16.mxu0 0
    %880 = vmatpush1.bf16.msra.mxu0 0
    %881 = vmatprep.subr.bf16.mxu0 0
    %882 = vmatpush1.bf16.msra.mxu0 0
    %883 = vmatprep.subr.bf16.mxu0 0
    %884 = vmatpush1.bf16.msra.mxu0 0
    %885 = vmatprep.subr.bf16.mxu0 0
    %886 = vmatpush1.bf16.msra.mxu0 0
    %887 = vmatprep.mubr.bf16.mxu0 0
    %888 = vmatmul.mubr.bf16.gmra.mrb[0].mxu0 %v638
    %v889 = vpop.f32.mrb[0].mxu0
    %v890 = vadd.f32 0.0, %v889
    %v891 = vpop.f32.mrb[0].mxu0
    %v892 = vpop.f32.mrb[0].mxu0
    %v893 = vadd.f32 0.0, %v892
    %v894 = vpop.f32.mrb[0].mxu0
    %895 = vmatprep.mubr.bf16.mxu0 0
    %896 = vmatmul.mubr.bf16.gmra.mrb[0].mxu0 %v641
    %v897 = vpop.f32.mrb[0].mxu0
    %v898 = vadd.f32 0.0, %v897
    %v899 = vpop.f32.mrb[0].mxu0
    %v900 = vpop.f32.mrb[0].mxu0
    %v901 = vadd.f32 0.0, %v900
    %v902 = vpop.f32.mrb[0].mxu0
    %903 = vmatprep.mubr.bf16.mxu0 0
    %904 = vmatmul.mubr.bf16.gmra.mrb[0].mxu0 %v644
    %v905 = vpop.f32.mrb[0].mxu0
    %v906 = vadd.f32 0.0, %v905
    %v907 = vpop.f32.mrb[0].mxu0
    %v908 = vpop.f32.mrb[0].mxu0
    %v909 = vadd.f32 0.0, %v908
    %v910 = vpop.f32.mrb[0].mxu0
    %911 = vmatprep.mubr.bf16.mxu0 0
    %912 = vmatmul.mubr.bf16.gmra.mrb[0].mxu0 %v647
    %v913 = vpop.f32.mrb[0].mxu0
    %v914 = vadd.f32 0.0, %v913
    %v915 = vpop.f32.mrb[0].mxu0
    %v916 = vpop.f32.mrb[0].mxu0
    %v917 = vadd.f32 0.0, %v916
    %v918 = vpop.f32.mrb[0].mxu0
    %919 = vmatprep.mubr.bf16.mxu0 0
    %920 = vmatmul.mubr.bf16.gmra.mrb[0].mxu0 %v650
    %v921 = vpop.f32.mrb[0].mxu0
    %v922 = vadd.f32 0.0, %v921
    %v923 = vpop.f32.mrb[0].mxu0
    %v924 = vpop.f32.mrb[0].mxu0
    %v925 = vadd.f32 0.0, %v924
    %v926 = vpop.f32.mrb[0].mxu0
    %927 = vmatprep.mubr.bf16.mxu0 0
    %928 = vmatmul.mubr.bf16.gmra.mrb[0].mxu0 %v653
    %v929 = vpop.f32.mrb[0].mxu0
    %v930 = vadd.f32 0.0, %v929
    %v931 = vpop.f32.mrb[0].mxu0
    %v932 = vpop.f32.mrb[0].mxu0
    %v933 = vadd.f32 0.0, %v932
    %v934 = vpop.f32.mrb[0].mxu0
    %935 = vmatprep.mubr.bf16.mxu0 0
    %936 = vmatmul.mubr.bf16.gmra.mrb[0].mxu0 %v656
    %v937 = vpop.f32.mrb[0].mxu0
    %v938 = vadd.f32 0.0, %v937
    %v939 = vpop.f32.mrb[0].mxu0
    %v940 = vpop.f32.mrb[0].mxu0
    %v941 = vadd.f32 0.0, %v940
    %v942 = vpop.f32.mrb[0].mxu0
    %943 = vmatprep.mubr.bf16.mxu0 0
    %944 = vmatmul.mubr.bf16.gmra.mrb[0].mxu0 %v659
    %v945 = vpop.f32.mrb[0].mxu0
    %v946 = vadd.f32 0.0, %v945
    %v947 = vpop.f32.mrb[0].mxu0
    %v948 = vpop.f32.mrb[0].mxu0
    %v949 = vadd.f32 0.0, %v948
    %v950 = vpop.f32.mrb[0].mxu0
    %951 = vdwg.mxu0
    %v952 = vrot.slane %v793, 1
    %v953 = vrot.slane %v796, 1
    %v954 = vrot.slane %v801, 1
    %v955 = vrot.slane %v804, 1
    %v956 = vrot.slane %v809, 1
    %v957 = vrot.slane %v812, 1
    %v958 = vrot.slane %v817, 1
    %v959 = vrot.slane %v820, 1
    %v960 = vrot.slane %v825, 1
    %v961 = vrot.slane %v828, 1
    %v962 = vrot.slane %v833, 1
    %v963 = vrot.slane %v836, 1
    %v964 = vrot.slane %v841, 1
    %v965 = vrot.slane %v844, 1
    %v966 = vrot.slane %v849, 1
    %v967 = vrot.slane %v852, 1
    %v968 = vsel %vm384, %v966, %v967
    %v969 = vsel %vm384, %v965, %v966
    %v970 = vsel %vm384, %v964, %v965
    %v971 = vsel %vm384, %v963, %v964
    %v972 = vsel %vm384, %v962, %v963
    %v973 = vsel %vm384, %v961, %v962
    %v974 = vsel %vm384, %v960, %v961
    %v975 = vsel %vm384, %v959, %v960
    %v976 = vsel %vm384, %v958, %v959
    %v977 = vsel %vm384, %v957, %v958
    %v978 = vsel %vm384, %v956, %v957
    %v979 = vsel %vm384, %v955, %v956
    %v980 = vsel %vm384, %v954, %v955
    %v981 = vsel %vm384, %v953, %v954
    %v982 = vsel %vm384, %v952, %v953
    %v983 = vsel %vm384, %v967, %v952
    %v984 = vrot.slane %v890, 2
    %v985 = vrot.slane %v893, 2
    %v986 = vrot.slane %v898, 2
    %v987 = vrot.slane %v901, 2
    %v988 = vrot.slane %v906, 2
    %v989 = vrot.slane %v909, 2
    %v990 = vrot.slane %v914, 2
    %v991 = vrot.slane %v917, 2
    %v992 = vrot.slane %v922, 2
    %v993 = vrot.slane %v925, 2
    %v994 = vrot.slane %v930, 2
    %v995 = vrot.slane %v933, 2
    %v996 = vrot.slane %v938, 2
    %v997 = vrot.slane %v941, 2
    %v998 = vrot.slane %v946, 2
    %v999 = vrot.slane %v949, 2
    %v1000 = vsel %vm401, %v998, %v999
    %v1001 = vsel %vm401, %v997, %v998
    %v1002 = vsel %vm401, %v996, %v997
    %v1003 = vsel %vm401, %v995, %v996
    %v1004 = vsel %vm401, %v994, %v995
    %v1005 = vsel %vm401, %v993, %v994
    %v1006 = vsel %vm401, %v992, %v993
    %v1007 = vsel %vm401, %v991, %v992
    %v1008 = vsel %vm401, %v990, %v991
    %v1009 = vsel %vm401, %v989, %v990
    %v1010 = vsel %vm401, %v988, %v989
    %v1011 = vsel %vm401, %v987, %v988
    %v1012 = vsel %vm401, %v986, %v987
    %v1013 = vsel %vm401, %v985, %v986
    %v1014 = vsel %vm401, %v984, %v985
    %v1015 = vsel %vm401, %v999, %v984
    %v1016 = vadd.s32 %v383, 8
    %vm1017 = vcmp.lt.s32.totalorder %v383, 15
    %vm1018 = vcmp.lt.s32.totalorder %v1016, 15
    %v1019 = vsel %vm1017, 1, 0
    %v1020 = vsel %vm1018, 1, 0
    %v1021 = vcvt.s32.f32 %v1019
    %v1022 = vcvt.s32.f32 %v1020
    %vm1023 = vcmp.lt.s32.totalorder %v383, 14
    %vm1024 = vcmp.lt.s32.totalorder %v1016, 14
    %v1025 = vsel %vm1023, 1, 0
    %v1026 = vsel %vm1024, 1, 0
    %v1027 = vcvt.s32.f32 %v1025
    %v1028 = vcvt.s32.f32 %v1026
    %v1029 = vmul.f32 %v982, %v1021
    %v1030 = vmul.f32 %v981, %v1022
    %v1031 = vmul.f32 %v980, %v1021
    %v1032 = vmul.f32 %v979, %v1022
    %v1033 = vmul.f32 %v978, %v1021
    %v1034 = vmul.f32 %v977, %v1022
    %v1035 = vmul.f32 %v976, %v1021
    %v1036 = vmul.f32 %v975, %v1022
    %v1037 = vmul.f32 %v974, %v1021
    %v1038 = vmul.f32 %v973, %v1022
    %v1039 = vmul.f32 %v972, %v1021
    %v1040 = vmul.f32 %v971, %v1022
    %v1041 = vmul.f32 %v970, %v1021
    %v1042 = vmul.f32 %v969, %v1022
    %v1043 = vmul.f32 %v968, %v1021
    %v1044 = vmul.f32 %v983, %v1022
    %v1045 = vadd.f32 %v696, %v1029
    %v1046 = vadd.f32 %v699, %v1030
    %v1047 = vadd.f32 %v704, %v1031
    %v1048 = vadd.f32 %v707, %v1032
    %v1049 = vadd.f32 %v712, %v1033
    %v1050 = vadd.f32 %v715, %v1034
    %v1051 = vadd.f32 %v720, %v1035
    %v1052 = vadd.f32 %v723, %v1036
    %v1053 = vadd.f32 %v728, %v1037
    %v1054 = vadd.f32 %v731, %v1038
    %v1055 = vadd.f32 %v736, %v1039
    %v1056 = vadd.f32 %v739, %v1040
    %v1057 = vadd.f32 %v744, %v1041
    %v1058 = vadd.f32 %v747, %v1042
    %v1059 = vadd.f32 %v752, %v1043
    %v1060 = vadd.f32 %v755, %v1044
    %v1061 = vmul.f32 %v1014, %v1027
    %v1062 = vmul.f32 %v1013, %v1028
    %v1063 = vmul.f32 %v1012, %v1027
    %v1064 = vmul.f32 %v1011, %v1028
    %v1065 = vmul.f32 %v1010, %v1027
    %v1066 = vmul.f32 %v1009, %v1028
    %v1067 = vmul.f32 %v1008, %v1027
    %v1068 = vmul.f32 %v1007, %v1028
    %v1069 = vmul.f32 %v1006, %v1027
    %v1070 = vmul.f32 %v1005, %v1028
    %v1071 = vmul.f32 %v1004, %v1027
    %v1072 = vmul.f32 %v1003, %v1028
    %v1073 = vmul.f32 %v1002, %v1027
    %v1074 = vmul.f32 %v1001, %v1028
    %v1075 = vmul.f32 %v1000, %v1027
    %v1076 = vmul.f32 %v1015, %v1028
    %v1077 = vadd.f32 %v1045, %v1061
    %v1078 = vadd.f32 %v1046, %v1062
    %v1079 = vadd.f32 %v1047, %v1063
    %v1080 = vadd.f32 %v1048, %v1064
    %v1081 = vadd.f32 %v1049, %v1065
    %v1082 = vadd.f32 %v1050, %v1066
    %v1083 = vadd.f32 %v1051, %v1067
    %v1084 = vadd.f32 %v1052, %v1068
    %v1085 = vadd.f32 %v1053, %v1069
    %v1086 = vadd.f32 %v1054, %v1070
    %v1087 = vadd.f32 %v1055, %v1071
    %v1088 = vadd.f32 %v1056, %v1072
    %v1089 = vadd.f32 %v1057, %v1073
    %v1090 = vadd.f32 %v1058, %v1074
    %v1091 = vadd.f32 %v1059, %v1075
    %v1092 = vadd.f32 %v1060, %v1076
    %v1093 = vadd.f32 %v1077, %v451
    %v1094 = vadd.f32 %v1078, %v451
    %v1095 = vadd.f32 %v1079, %v451
    %v1096 = vadd.f32 %v1080, %v451
    %v1097 = vadd.f32 %v1081, %v451
    %v1098 = vadd.f32 %v1082, %v451
    %v1099 = vadd.f32 %v1083, %v451
    %v1100 = vadd.f32 %v1084, %v451
    %v1101 = vadd.f32 %v1085, %v451
    %v1102 = vadd.f32 %v1086, %v451
    %v1103 = vadd.f32 %v1087, %v451
    %v1104 = vadd.f32 %v1088, %v451
    %v1105 = vadd.f32 %v1089, %v451
    %v1106 = vadd.f32 %v1090, %v451
    %v1107 = vadd.f32 %v1091, %v451
    %v1108 = vadd.f32 %v1092, %v451
    %v1109 = vmax.f32 %v1093, 0.0
    %v1110 = vmax.f32 %v1094, 0.0
    %v1111 = vmax.f32 %v1095, 0.0
    %v1112 = vmax.f32 %v1096, 0.0
    %v1113 = vmax.f32 %v1097, 0.0
    %v1114 = vmax.f32 %v1098, 0.0
    %v1115 = vmax.f32 %v1099, 0.0
    %v1116 = vmax.f32 %v1100, 0.0
    %v1117 = vmax.f32 %v1101, 0.0
    %v1118 = vmax.f32 %v1102, 0.0
    %v1119 = vmax.f32 %v1103, 0.0
    %v1120 = vmax.f32 %v1104, 0.0
    %v1121 = vmax.f32 %v1105, 0.0
    %v1122 = vmax.f32 %v1106, 0.0
    %v1123 = vmax.f32 %v1107, 0.0
    %v1124 = vmax.f32 %v1108, 0.0
    %v1125 = vmul.f32 %v1109, %v1109
    %v1126 = vmul.f32 %v1110, %v1110
    %v1127 = vmul.f32 %v1111, %v1111
    %v1128 = vmul.f32 %v1112, %v1112
    %v1129 = vmul.f32 %v1113, %v1113
    %v1130 = vmul.f32 %v1114, %v1114
    %v1131 = vmul.f32 %v1115, %v1115
    %v1132 = vmul.f32 %v1116, %v1116
    %v1133 = vmul.f32 %v1117, %v1117
    %v1134 = vmul.f32 %v1118, %v1118
    %v1135 = vmul.f32 %v1119, %v1119
    %v1136 = vmul.f32 %v1120, %v1120
    %v1137 = vmul.f32 %v1121, %v1121
    %v1138 = vmul.f32 %v1122, %v1122
    %v1139 = vmul.f32 %v1123, %v1123
    %v1140 = vmul.f32 %v1124, %v1124
    %v1141 = vsel %vm132, %v1125, 0.0
    %1142 = vadd.xlane.f32.xlu0 %v1141
    %v1143 = vpop.xlane.xlu0 %1142
    %v1144 = vsel %vm132, %v1126, 0.0
    %1145 = vadd.xlane.f32.xlu0 %v1144
    %v1146 = vpop.xlane.xlu0 %1145
    %v1147 = vsel %vm132, %v1127, 0.0
    %1148 = vadd.xlane.f32.xlu0 %v1147
    %v1149 = vpop.xlane.xlu0 %1148
    %v1150 = vsel %vm132, %v1128, 0.0
    %1151 = vadd.xlane.f32.xlu0 %v1150
    %v1152 = vpop.xlane.xlu0 %1151
    %v1153 = vsel %vm132, %v1129, 0.0
    %1154 = vadd.xlane.f32.xlu0 %v1153
    %v1155 = vpop.xlane.xlu0 %1154
    %v1156 = vsel %vm132, %v1130, 0.0
    %1157 = vadd.xlane.f32.xlu0 %v1156
    %v1158 = vpop.xlane.xlu0 %1157
    %v1159 = vsel %vm132, %v1131, 0.0
    %1160 = vadd.xlane.f32.xlu0 %v1159
    %v1161 = vpop.xlane.xlu0 %1160
    %v1162 = vsel %vm132, %v1132, 0.0
    %1163 = vadd.xlane.f32.xlu0 %v1162
    %v1164 = vpop.xlane.xlu0 %1163
    %v1165 = vsel %vm132, %v1133, 0.0
    %1166 = vadd.xlane.f32.xlu0 %v1165
    %v1167 = vpop.xlane.xlu0 %1166
    %v1168 = vsel %vm132, %v1134, 0.0
    %1169 = vadd.xlane.f32.xlu0 %v1168
    %v1170 = vpop.xlane.xlu0 %1169
    %v1171 = vsel %vm132, %v1135, 0.0
    %1172 = vadd.xlane.f32.xlu0 %v1171
    %v1173 = vpop.xlane.xlu0 %1172
    %v1174 = vsel %vm132, %v1136, 0.0
    %1175 = vadd.xlane.f32.xlu0 %v1174
    %v1176 = vpop.xlane.xlu0 %1175
    %v1177 = vsel %vm132, %v1137, 0.0
    %1178 = vadd.xlane.f32.xlu0 %v1177
    %v1179 = vpop.xlane.xlu0 %1178
    %v1180 = vsel %vm132, %v1138, 0.0
    %1181 = vadd.xlane.f32.xlu0 %v1180
    %v1182 = vpop.xlane.xlu0 %1181
    %v1183 = vsel %vm132, %v1139, 0.0
    %1184 = vadd.xlane.f32.xlu0 %v1183
    %v1185 = vpop.xlane.xlu0 %1184
    %v1186 = vsel %vm132, %v1140, 0.0
    %1187 = vadd.xlane.f32.xlu0 %v1186
    %v1188 = vpop.xlane.xlu0 %1187
    %v1189 = vrsqrt.pop %v1143
    %v1190 = vmul.f32 %v1143, %v1189
    %vm1191 = vcmp.eq.f32.partialorder %v1143, inf
    %v1192 = vsel %vm1191, %v1143, %v1190
    %vm1193 = vcmp.eq.f32.partialorder %v1143, 0.0
    %v1194 = vand.u32 %v1143, 2147483648
    %v1195 = vsel %vm1193, %v1194, %v1192
    %v1196 = vrsqrt.pop %v1146
    %v1197 = vmul.f32 %v1146, %v1196
    %vm1198 = vcmp.eq.f32.partialorder %v1146, inf
    %v1199 = vsel %vm1198, %v1146, %v1197
    %vm1200 = vcmp.eq.f32.partialorder %v1146, 0.0
    %v1201 = vand.u32 %v1146, 2147483648
    %v1202 = vsel %vm1200, %v1201, %v1199
    %v1203 = vrsqrt.pop %v1149
    %v1204 = vmul.f32 %v1149, %v1203
    %vm1205 = vcmp.eq.f32.partialorder %v1149, inf
    %v1206 = vsel %vm1205, %v1149, %v1204
    %vm1207 = vcmp.eq.f32.partialorder %v1149, 0.0
    %v1208 = vand.u32 %v1149, 2147483648
    %v1209 = vsel %vm1207, %v1208, %v1206
    %v1210 = vrsqrt.pop %v1152
    %v1211 = vmul.f32 %v1152, %v1210
    %vm1212 = vcmp.eq.f32.partialorder %v1152, inf
    %v1213 = vsel %vm1212, %v1152, %v1211
    %vm1214 = vcmp.eq.f32.partialorder %v1152, 0.0
    %v1215 = vand.u32 %v1152, 2147483648
    %v1216 = vsel %vm1214, %v1215, %v1213
    %v1217 = vrsqrt.pop %v1155
    %v1218 = vmul.f32 %v1155, %v1217
    %vm1219 = vcmp.eq.f32.partialorder %v1155, inf
    %v1220 = vsel %vm1219, %v1155, %v1218
    %vm1221 = vcmp.eq.f32.partialorder %v1155, 0.0
    %v1222 = vand.u32 %v1155, 2147483648
    %v1223 = vsel %vm1221, %v1222, %v1220
    %v1224 = vrsqrt.pop %v1158
    %v1225 = vmul.f32 %v1158, %v1224
    %vm1226 = vcmp.eq.f32.partialorder %v1158, inf
    %v1227 = vsel %vm1226, %v1158, %v1225
    %vm1228 = vcmp.eq.f32.partialorder %v1158, 0.0
    %v1229 = vand.u32 %v1158, 2147483648
    %v1230 = vsel %vm1228, %v1229, %v1227
    %v1231 = vrsqrt.pop %v1161
    %v1232 = vmul.f32 %v1161, %v1231
    %vm1233 = vcmp.eq.f32.partialorder %v1161, inf
    %v1234 = vsel %vm1233, %v1161, %v1232
    %vm1235 = vcmp.eq.f32.partialorder %v1161, 0.0
    %v1236 = vand.u32 %v1161, 2147483648
    %v1237 = vsel %vm1235, %v1236, %v1234
    %v1238 = vrsqrt.pop %v1164
    %v1239 = vmul.f32 %v1164, %v1238
    %vm1240 = vcmp.eq.f32.partialorder %v1164, inf
    %v1241 = vsel %vm1240, %v1164, %v1239
    %vm1242 = vcmp.eq.f32.partialorder %v1164, 0.0
    %v1243 = vand.u32 %v1164, 2147483648
    %v1244 = vsel %vm1242, %v1243, %v1241
    %v1245 = vrsqrt.pop %v1167
    %v1246 = vmul.f32 %v1167, %v1245
    %vm1247 = vcmp.eq.f32.partialorder %v1167, inf
    %v1248 = vsel %vm1247, %v1167, %v1246
    %vm1249 = vcmp.eq.f32.partialorder %v1167, 0.0
    %v1250 = vand.u32 %v1167, 2147483648
    %v1251 = vsel %vm1249, %v1250, %v1248
    %v1252 = vrsqrt.pop %v1170
    %v1253 = vmul.f32 %v1170, %v1252
    %vm1254 = vcmp.eq.f32.partialorder %v1170, inf
    %v1255 = vsel %vm1254, %v1170, %v1253
    %vm1256 = vcmp.eq.f32.partialorder %v1170, 0.0
    %v1257 = vand.u32 %v1170, 2147483648
    %v1258 = vsel %vm1256, %v1257, %v1255
    %v1259 = vrsqrt.pop %v1173
    %v1260 = vmul.f32 %v1173, %v1259
    %vm1261 = vcmp.eq.f32.partialorder %v1173, inf
    %v1262 = vsel %vm1261, %v1173, %v1260
    %vm1263 = vcmp.eq.f32.partialorder %v1173, 0.0
    %v1264 = vand.u32 %v1173, 2147483648
    %v1265 = vsel %vm1263, %v1264, %v1262
    %v1266 = vrsqrt.pop %v1176
    %v1267 = vmul.f32 %v1176, %v1266
    %vm1268 = vcmp.eq.f32.partialorder %v1176, inf
    %v1269 = vsel %vm1268, %v1176, %v1267
    %vm1270 = vcmp.eq.f32.partialorder %v1176, 0.0
    %v1271 = vand.u32 %v1176, 2147483648
    %v1272 = vsel %vm1270, %v1271, %v1269
    %v1273 = vrsqrt.pop %v1179
    %v1274 = vmul.f32 %v1179, %v1273
    %vm1275 = vcmp.eq.f32.partialorder %v1179, inf
    %v1276 = vsel %vm1275, %v1179, %v1274
    %vm1277 = vcmp.eq.f32.partialorder %v1179, 0.0
    %v1278 = vand.u32 %v1179, 2147483648
    %v1279 = vsel %vm1277, %v1278, %v1276
    %v1280 = vrsqrt.pop %v1182
    %v1281 = vmul.f32 %v1182, %v1280
    %vm1282 = vcmp.eq.f32.partialorder %v1182, inf
    %v1283 = vsel %vm1282, %v1182, %v1281
    %vm1284 = vcmp.eq.f32.partialorder %v1182, 0.0
    %v1285 = vand.u32 %v1182, 2147483648
    %v1286 = vsel %vm1284, %v1285, %v1283
    %v1287 = vrsqrt.pop %v1185
    %v1288 = vmul.f32 %v1185, %v1287
    %vm1289 = vcmp.eq.f32.partialorder %v1185, inf
    %v1290 = vsel %vm1289, %v1185, %v1288
    %vm1291 = vcmp.eq.f32.partialorder %v1185, 0.0
    %v1292 = vand.u32 %v1185, 2147483648
    %v1293 = vsel %vm1291, %v1292, %v1290
    %v1294 = vrsqrt.pop %v1188
    %v1295 = vmul.f32 %v1188, %v1294
    %vm1296 = vcmp.eq.f32.partialorder %v1188, inf
    %v1297 = vsel %vm1296, %v1188, %v1295
    %vm1298 = vcmp.eq.f32.partialorder %v1188, 0.0
    %v1299 = vand.u32 %v1188, 2147483648
    %v1300 = vsel %vm1298, %v1299, %v1297
    %v1301 = vmax.f32 %v1195, 1e-12
    %v1302 = vmax.f32 %v1202, 1e-12
    %v1303 = vmax.f32 %v1209, 1e-12
    %v1304 = vmax.f32 %v1216, 1e-12
    %v1305 = vmax.f32 %v1223, 1e-12
    %v1306 = vmax.f32 %v1230, 1e-12
    %v1307 = vmax.f32 %v1237, 1e-12
    %v1308 = vmax.f32 %v1244, 1e-12
    %v1309 = vmax.f32 %v1251, 1e-12
    %v1310 = vmax.f32 %v1258, 1e-12
    %v1311 = vmax.f32 %v1265, 1e-12
    %v1312 = vmax.f32 %v1272, 1e-12
    %v1313 = vmax.f32 %v1279, 1e-12
    %v1314 = vmax.f32 %v1286, 1e-12
    %v1315 = vmax.f32 %v1293, 1e-12
    %v1316 = vmax.f32 %v1300, 1e-12
    %v1317 = vrcp.pop %v1301
    %v1318 = vmul.f32 %v1109, %v1317
    %v1319 = vrcp.pop %v1302
    %v1320 = vmul.f32 %v1110, %v1319
    %v1321 = vrcp.pop %v1303
    %v1322 = vmul.f32 %v1111, %v1321
    %v1323 = vrcp.pop %v1304
    %v1324 = vmul.f32 %v1112, %v1323
    %v1325 = vrcp.pop %v1305
    %v1326 = vmul.f32 %v1113, %v1325
    %v1327 = vrcp.pop %v1306
    %v1328 = vmul.f32 %v1114, %v1327
    %v1329 = vrcp.pop %v1307
    %v1330 = vmul.f32 %v1115, %v1329
    %v1331 = vrcp.pop %v1308
    %v1332 = vmul.f32 %v1116, %v1331
    %v1333 = vrcp.pop %v1309
    %v1334 = vmul.f32 %v1117, %v1333
    %v1335 = vrcp.pop %v1310
    %v1336 = vmul.f32 %v1118, %v1335
    %v1337 = vrcp.pop %v1311
    %v1338 = vmul.f32 %v1119, %v1337
    %v1339 = vrcp.pop %v1312
    %v1340 = vmul.f32 %v1120, %v1339
    %v1341 = vrcp.pop %v1313
    %v1342 = vmul.f32 %v1121, %v1341
    %v1343 = vrcp.pop %v1314
    %v1344 = vmul.f32 %v1122, %v1343
    %v1345 = vrcp.pop %v1315
    %v1346 = vmul.f32 %v1123, %v1345
    %v1347 = vrcp.pop %v1316
    %v1348 = vmul.f32 %v1124, %v1347
    %v1350 = vsel %vm132, %v566, 0
    %v1353 = vsel %vm132, %v1318, 0
    %v1356 = vsel %vm132, %v1320, 0
    %1358 = vmatprep.subr.mxu0 0.0
    %1359 = vmatpush1.xpose.msra.mxu0 %v1353
    %1360 = vmatprep.subr.mxu0 0.0
    %1361 = vmatpush1.xpose.msra.mxu0 %v1356
    %1362 = vmatprep.subr.mxu0 0.0
    %1363 = vmatpush1.xpose.msra.mxu0 0.0
    %1364 = vmatprep.subr.mxu0 0.0
    %1365 = vmatpush1.xpose.msra.mxu0 0.0
    %1366 = vmatprep.subr.mxu0 0.0
    %1367 = vmatpush1.xpose.msra.mxu0 0.0
    %1368 = vmatprep.subr.mxu0 0.0
    %1369 = vmatpush1.xpose.msra.mxu0 0.0
    %1370 = vmatprep.subr.mxu0 0.0
    %1371 = vmatpush1.xpose.msra.mxu0 0.0
    %1372 = vmatprep.subr.mxu0 0.0
    %1373 = vmatpush1.xpose.msra.mxu0 0.0
    %1374 = vmatprep.subr.mxu0 0.0
    %1375 = vmatpush1.xpose.msra.mxu0 0.0
    %1376 = vmatprep.subr.mxu0 0.0
    %1377 = vmatpush1.xpose.msra.mxu0 0.0
    %1378 = vmatprep.subr.mxu0 0.0
    %1379 = vmatpush1.xpose.msra.mxu0 0.0
    %1380 = vmatprep.subr.mxu0 0.0
    %1381 = vmatpush1.xpose.msra.mxu0 0.0
    %1382 = vmatprep.subr.mxu0 0.0
    %1383 = vmatpush1.xpose.msra.mxu0 0.0
    %1384 = vmatprep.subr.mxu0 0.0
    %1385 = vmatpush1.xpose.msra.mxu0 0.0
    %1386 = vmatprep.subr.mxu0 0.0
    %1387 = vmatpush1.xpose.msra.mxu0 0.0
    %1388 = vmatprep.subr.mxu0 0.0
    %1389 = vmatpush1.xpose.msra.mxu0 0.0
    %1390 = vmatprep.subr.mxu0 0.0
    %1391 = vmatpush1.xpose.msra.mxu0 0.0
    %1392 = vmatprep.subr.mxu0 0.0
    %1393 = vmatpush1.xpose.msra.mxu0 0.0
    %1394 = vmatprep.subr.mxu0 0.0
    %1395 = vmatpush1.xpose.msra.mxu0 0.0
    %1396 = vmatprep.subr.mxu0 0.0
    %1397 = vmatpush1.xpose.msra.mxu0 0.0
    %1398 = vmatprep.subr.mxu0 0.0
    %1399 = vmatpush1.xpose.msra.mxu0 0.0
    %1400 = vmatprep.subr.mxu0 0.0
    %1401 = vmatpush1.xpose.msra.mxu0 0.0
    %1402 = vmatprep.subr.mxu0 0.0
    %1403 = vmatpush1.xpose.msra.mxu0 0.0
    %1404 = vmatprep.subr.mxu0 0.0
    %1405 = vmatpush1.xpose.msra.mxu0 0.0
    %1406 = vmatprep.subr.mxu0 0.0
    %1407 = vmatpush1.xpose.msra.mxu0 0.0
    %1408 = vmatprep.subr.mxu0 0.0
    %1409 = vmatpush1.xpose.msra.mxu0 0.0
    %1410 = vmatprep.subr.mxu0 0.0
    %1411 = vmatpush1.xpose.msra.mxu0 0.0
    %1412 = vmatprep.subr.mxu0 0.0
    %1413 = vmatpush1.xpose.msra.mxu0 0.0
    %1414 = vmatprep.subr.mxu0 0.0
    %1415 = vmatpush1.xpose.msra.mxu0 0.0
    %1416 = vmatprep.subr.mxu0 0.0
    %1417 = vmatpush1.xpose.msra.mxu0 0.0
    %1418 = vmatprep.subr.mxu0 0.0
    %1419 = vmatpush1.xpose.msra.mxu0 0.0
    %1420 = vmatprep.subr.mxu0 0.0
    %1421 = vmatpush1.xpose.msra.mxu0 0.0
    %1422 = vmatprep.mubr.f32.mxu0 0.0
    %1423 = vmatmul.mubr.f32.gmra.mrb[0].mxu0 %v1350
    %v1424 = vpop.f32.mrb[0].mxu0
    %v1425 = vadd.f32 0.0, %v1424
    %v1426 = vpop.f32.mrb[0].mxu0
    %1427 = vdwg.mxu0
    %v1429 = vsel %vm132, %v568, 0
    %v1432 = vsel %vm132, %v1322, 0
    %v1435 = vsel %vm132, %v1324, 0
    %1437 = vmatprep.subr.mxu0 0.0
    %1438 = vmatpush1.xpose.msra.mxu0 %v1432
    %1439 = vmatprep.subr.mxu0 0.0
    %1440 = vmatpush1.xpose.msra.mxu0 %v1435
    %1441 = vmatprep.subr.mxu0 0.0
    %1442 = vmatpush1.xpose.msra.mxu0 0.0
    %1443 = vmatprep.subr.mxu0 0.0
    %1444 = vmatpush1.xpose.msra.mxu0 0.0
    %1445 = vmatprep.subr.mxu0 0.0
    %1446 = vmatpush1.xpose.msra.mxu0 0.0
    %1447 = vmatprep.subr.mxu0 0.0
    %1448 = vmatpush1.xpose.msra.mxu0 0.0
    %1449 = vmatprep.subr.mxu0 0.0
    %1450 = vmatpush1.xpose.msra.mxu0 0.0
    %1451 = vmatprep.subr.mxu0 0.0
    %1452 = vmatpush1.xpose.msra.mxu0 0.0
    %1453 = vmatprep.subr.mxu0 0.0
    %1454 = vmatpush1.xpose.msra.mxu0 0.0
    %1455 = vmatprep.subr.mxu0 0.0
    %1456 = vmatpush1.xpose.msra.mxu0 0.0
    %1457 = vmatprep.subr.mxu0 0.0
    %1458 = vmatpush1.xpose.msra.mxu0 0.0
    %1459 = vmatprep.subr.mxu0 0.0
    %1460 = vmatpush1.xpose.msra.mxu0 0.0
    %1461 = vmatprep.subr.mxu0 0.0
    %1462 = vmatpush1.xpose.msra.mxu0 0.0
    %1463 = vmatprep.subr.mxu0 0.0
    %1464 = vmatpush1.xpose.msra.mxu0 0.0
    %1465 = vmatprep.subr.mxu0 0.0
    %1466 = vmatpush1.xpose.msra.mxu0 0.0
    %1467 = vmatprep.subr.mxu0 0.0
    %1468 = vmatpush1.xpose.msra.mxu0 0.0
    %1469 = vmatprep.subr.mxu0 0.0
    %1470 = vmatpush1.xpose.msra.mxu0 0.0
    %1471 = vmatprep.subr.mxu0 0.0
    %1472 = vmatpush1.xpose.msra.mxu0 0.0
    %1473 = vmatprep.subr.mxu0 0.0
    %1474 = vmatpush1.xpose.msra.mxu0 0.0
    %1475 = vmatprep.subr.mxu0 0.0
    %1476 = vmatpush1.xpose.msra.mxu0 0.0
    %1477 = vmatprep.subr.mxu0 0.0
    %1478 = vmatpush1.xpose.msra.mxu0 0.0
    %1479 = vmatprep.subr.mxu0 0.0
    %1480 = vmatpush1.xpose.msra.mxu0 0.0
    %1481 = vmatprep.subr.mxu0 0.0
    %1482 = vmatpush1.xpose.msra.mxu0 0.0
    %1483 = vmatprep.subr.mxu0 0.0
    %1484 = vmatpush1.xpose.msra.mxu0 0.0
    %1485 = vmatprep.subr.mxu0 0.0
    %1486 = vmatpush1.xpose.msra.mxu0 0.0
    %1487 = vmatprep.subr.mxu0 0.0
    %1488 = vmatpush1.xpose.msra.mxu0 0.0
    %1489 = vmatprep.subr.mxu0 0.0
    %1490 = vmatpush1.xpose.msra.mxu0 0.0
    %1491 = vmatprep.subr.mxu0 0.0
    %1492 = vmatpush1.xpose.msra.mxu0 0.0
    %1493 = vmatprep.subr.mxu0 0.0
    %1494 = vmatpush1.xpose.msra.mxu0 0.0
    %1495 = vmatprep.subr.mxu0 0.0
    %1496 = vmatpush1.xpose.msra.mxu0 0.0
    %1497 = vmatprep.subr.mxu0 0.0
    %1498 = vmatpush1.xpose.msra.mxu0 0.0
    %1499 = vmatprep.subr.mxu0 0.0
    %1500 = vmatpush1.xpose.msra.mxu0 0.0
    %1501 = vmatprep.mubr.f32.mxu0 0.0
    %1502 = vmatmul.mubr.f32.gmra.mrb[0].mxu0 %v1429
    %v1503 = vpop.f32.mrb[0].mxu0
    %v1504 = vadd.f32 0.0, %v1503
    %v1505 = vpop.f32.mrb[0].mxu0
    %1506 = vdwg.mxu0
    %v1508 = vsel %vm132, %v570, 0
    %v1511 = vsel %vm132, %v1326, 0
    %v1514 = vsel %vm132, %v1328, 0
    %1516 = vmatprep.subr.mxu0 0.0
    %1517 = vmatpush1.xpose.msra.mxu0 %v1511
    %1518 = vmatprep.subr.mxu0 0.0
    %1519 = vmatpush1.xpose.msra.mxu0 %v1514
    %1520 = vmatprep.subr.mxu0 0.0
    %1521 = vmatpush1.xpose.msra.mxu0 0.0
    %1522 = vmatprep.subr.mxu0 0.0
    %1523 = vmatpush1.xpose.msra.mxu0 0.0
    %1524 = vmatprep.subr.mxu0 0.0
    %1525 = vmatpush1.xpose.msra.mxu0 0.0
    %1526 = vmatprep.subr.mxu0 0.0
    %1527 = vmatpush1.xpose.msra.mxu0 0.0
    %1528 = vmatprep.subr.mxu0 0.0
    %1529 = vmatpush1.xpose.msra.mxu0 0.0
    %1530 = vmatprep.subr.mxu0 0.0
    %1531 = vmatpush1.xpose.msra.mxu0 0.0
    %1532 = vmatprep.subr.mxu0 0.0
    %1533 = vmatpush1.xpose.msra.mxu0 0.0
    %1534 = vmatprep.subr.mxu0 0.0
    %1535 = vmatpush1.xpose.msra.mxu0 0.0
    %1536 = vmatprep.subr.mxu0 0.0
    %1537 = vmatpush1.xpose.msra.mxu0 0.0
    %1538 = vmatprep.subr.mxu0 0.0
    %1539 = vmatpush1.xpose.msra.mxu0 0.0
    %1540 = vmatprep.subr.mxu0 0.0
    %1541 = vmatpush1.xpose.msra.mxu0 0.0
    %1542 = vmatprep.subr.mxu0 0.0
    %1543 = vmatpush1.xpose.msra.mxu0 0.0
    %1544 = vmatprep.subr.mxu0 0.0
    %1545 = vmatpush1.xpose.msra.mxu0 0.0
    %1546 = vmatprep.subr.mxu0 0.0
    %1547 = vmatpush1.xpose.msra.mxu0 0.0
    %1548 = vmatprep.subr.mxu0 0.0
    %1549 = vmatpush1.xpose.msra.mxu0 0.0
    %1550 = vmatprep.subr.mxu0 0.0
    %1551 = vmatpush1.xpose.msra.mxu0 0.0
    %1552 = vmatprep.subr.mxu0 0.0
    %1553 = vmatpush1.xpose.msra.mxu0 0.0
    %1554 = vmatprep.subr.mxu0 0.0
    %1555 = vmatpush1.xpose.msra.mxu0 0.0
    %1556 = vmatprep.subr.mxu0 0.0
    %1557 = vmatpush1.xpose.msra.mxu0 0.0
    %1558 = vmatprep.subr.mxu0 0.0
    %1559 = vmatpush1.xpose.msra.mxu0 0.0
    %1560 = vmatprep.subr.mxu0 0.0
    %1561 = vmatpush1.xpose.msra.mxu0 0.0
    %1562 = vmatprep.subr.mxu0 0.0
    %1563 = vmatpush1.xpose.msra.mxu0 0.0
    %1564 = vmatprep.subr.mxu0 0.0
    %1565 = vmatpush1.xpose.msra.mxu0 0.0
    %1566 = vmatprep.subr.mxu0 0.0
    %1567 = vmatpush1.xpose.msra.mxu0 0.0
    %1568 = vmatprep.subr.mxu0 0.0
    %1569 = vmatpush1.xpose.msra.mxu0 0.0
    %1570 = vmatprep.subr.mxu0 0.0
    %1571 = vmatpush1.xpose.msra.mxu0 0.0
    %1572 = vmatprep.subr.mxu0 0.0
    %1573 = vmatpush1.xpose.msra.mxu0 0.0
    %1574 = vmatprep.subr.mxu0 0.0
    %1575 = vmatpush1.xpose.msra.mxu0 0.0
    %1576 = vmatprep.subr.mxu0 0.0
    %1577 = vmatpush1.xpose.msra.mxu0 0.0
    %1578 = vmatprep.subr.mxu0 0.0
    %1579 = vmatpush1.xpose.msra.mxu0 0.0
    %1580 = vmatprep.mubr.f32.mxu0 0.0
    %1581 = vmatmul.mubr.f32.gmra.mrb[0].mxu0 %v1508
    %v1582 = vpop.f32.mrb[0].mxu0
    %v1583 = vadd.f32 0.0, %v1582
    %v1584 = vpop.f32.mrb[0].mxu0
    %1585 = vdwg.mxu0
    %v1587 = vsel %vm132, %v572, 0
    %v1590 = vsel %vm132, %v1330, 0
    %v1593 = vsel %vm132, %v1332, 0
    %1595 = vmatprep.subr.mxu0 0.0
    %1596 = vmatpush1.xpose.msra.mxu0 %v1590
    %1597 = vmatprep.subr.mxu0 0.0
    %1598 = vmatpush1.xpose.msra.mxu0 %v1593
    %1599 = vmatprep.subr.mxu0 0.0
    %1600 = vmatpush1.xpose.msra.mxu0 0.0
    %1601 = vmatprep.subr.mxu0 0.0
    %1602 = vmatpush1.xpose.msra.mxu0 0.0
    %1603 = vmatprep.subr.mxu0 0.0
    %1604 = vmatpush1.xpose.msra.mxu0 0.0
    %1605 = vmatprep.subr.mxu0 0.0
    %1606 = vmatpush1.xpose.msra.mxu0 0.0
    %1607 = vmatprep.subr.mxu0 0.0
    %1608 = vmatpush1.xpose.msra.mxu0 0.0
    %1609 = vmatprep.subr.mxu0 0.0
    %1610 = vmatpush1.xpose.msra.mxu0 0.0
    %1611 = vmatprep.subr.mxu0 0.0
    %1612 = vmatpush1.xpose.msra.mxu0 0.0
    %1613 = vmatprep.subr.mxu0 0.0
    %1614 = vmatpush1.xpose.msra.mxu0 0.0
    %1615 = vmatprep.subr.mxu0 0.0
    %1616 = vmatpush1.xpose.msra.mxu0 0.0
    %1617 = vmatprep.subr.mxu0 0.0
    %1618 = vmatpush1.xpose.msra.mxu0 0.0
    %1619 = vmatprep.subr.mxu0 0.0
    %1620 = vmatpush1.xpose.msra.mxu0 0.0
    %1621 = vmatprep.subr.mxu0 0.0
    %1622 = vmatpush1.xpose.msra.mxu0 0.0
    %1623 = vmatprep.subr.mxu0 0.0
    %1624 = vmatpush1.xpose.msra.mxu0 0.0
    %1625 = vmatprep.subr.mxu0 0.0
    %1626 = vmatpush1.xpose.msra.mxu0 0.0
    %1627 = vmatprep.subr.mxu0 0.0
    %1628 = vmatpush1.xpose.msra.mxu0 0.0
    %1629 = vmatprep.subr.mxu0 0.0
    %1630 = vmatpush1.xpose.msra.mxu0 0.0
    %1631 = vmatprep.subr.mxu0 0.0
    %1632 = vmatpush1.xpose.msra.mxu0 0.0
    %1633 = vmatprep.subr.mxu0 0.0
    %1634 = vmatpush1.xpose.msra.mxu0 0.0
    %1635 = vmatprep.subr.mxu0 0.0
    %1636 = vmatpush1.xpose.msra.mxu0 0.0
    %1637 = vmatprep.subr.mxu0 0.0
    %1638 = vmatpush1.xpose.msra.mxu0 0.0
    %1639 = vmatprep.subr.mxu0 0.0
    %1640 = vmatpush1.xpose.msra.mxu0 0.0
    %1641 = vmatprep.subr.mxu0 0.0
    %1642 = vmatpush1.xpose.msra.mxu0 0.0
    %1643 = vmatprep.subr.mxu0 0.0
    %1644 = vmatpush1.xpose.msra.mxu0 0.0
    %1645 = vmatprep.subr.mxu0 0.0
    %1646 = vmatpush1.xpose.msra.mxu0 0.0
    %1647 = vmatprep.subr.mxu0 0.0
    %1648 = vmatpush1.xpose.msra.mxu0 0.0
    %1649 = vmatprep.subr.mxu0 0.0
    %1650 = vmatpush1.xpose.msra.mxu0 0.0
    %1651 = vmatprep.subr.mxu0 0.0
    %1652 = vmatpush1.xpose.msra.mxu0 0.0
    %1653 = vmatprep.subr.mxu0 0.0
    %1654 = vmatpush1.xpose.msra.mxu0 0.0
    %1655 = vmatprep.subr.mxu0 0.0
    %1656 = vmatpush1.xpose.msra.mxu0 0.0
    %1657 = vmatprep.subr.mxu0 0.0
    %1658 = vmatpush1.xpose.msra.mxu0 0.0
    %1659 = vmatprep.mubr.f32.mxu0 0.0
    %1660 = vmatmul.mubr.f32.gmra.mrb[0].mxu0 %v1587
    %v1661 = vpop.f32.mrb[0].mxu0
    %v1662 = vadd.f32 0.0, %v1661
    %v1663 = vpop.f32.mrb[0].mxu0
    %1664 = vdwg.mxu0
    %v1666 = vsel %vm132, %v574, 0
    %v1669 = vsel %vm132, %v1334, 0
    %v1672 = vsel %vm132, %v1336, 0
    %1674 = vmatprep.subr.mxu0 0.0
    %1675 = vmatpush1.xpose.msra.mxu0 %v1669
    %1676 = vmatprep.subr.mxu0 0.0
    %1677 = vmatpush1.xpose.msra.mxu0 %v1672
    %1678 = vmatprep.subr.mxu0 0.0
    %1679 = vmatpush1.xpose.msra.mxu0 0.0
    %1680 = vmatprep.subr.mxu0 0.0
    %1681 = vmatpush1.xpose.msra.mxu0 0.0
    %1682 = vmatprep.subr.mxu0 0.0
    %1683 = vmatpush1.xpose.msra.mxu0 0.0
    %1684 = vmatprep.subr.mxu0 0.0
    %1685 = vmatpush1.xpose.msra.mxu0 0.0
    %1686 = vmatprep.subr.mxu0 0.0
    %1687 = vmatpush1.xpose.msra.mxu0 0.0
    %1688 = vmatprep.subr.mxu0 0.0
    %1689 = vmatpush1.xpose.msra.mxu0 0.0
    %1690 = vmatprep.subr.mxu0 0.0
    %1691 = vmatpush1.xpose.msra.mxu0 0.0
    %1692 = vmatprep.subr.mxu0 0.0
    %1693 = vmatpush1.xpose.msra.mxu0 0.0
    %1694 = vmatprep.subr.mxu0 0.0
    %1695 = vmatpush1.xpose.msra.mxu0 0.0
    %1696 = vmatprep.subr.mxu0 0.0
    %1697 = vmatpush1.xpose.msra.mxu0 0.0
    %1698 = vmatprep.subr.mxu0 0.0
    %1699 = vmatpush1.xpose.msra.mxu0 0.0
    %1700 = vmatprep.subr.mxu0 0.0
    %1701 = vmatpush1.xpose.msra.mxu0 0.0
    %1702 = vmatprep.subr.mxu0 0.0
    %1703 = vmatpush1.xpose.msra.mxu0 0.0
    %1704 = vmatprep.subr.mxu0 0.0
    %1705 = vmatpush1.xpose.msra.mxu0 0.0
    %1706 = vmatprep.subr.mxu0 0.0
    %1707 = vmatpush1.xpose.msra.mxu0 0.0
    %1708 = vmatprep.subr.mxu0 0.0
    %1709 = vmatpush1.xpose.msra.mxu0 0.0
    %1710 = vmatprep.subr.mxu0 0.0
    %1711 = vmatpush1.xpose.msra.mxu0 0.0
    %1712 = vmatprep.subr.mxu0 0.0
    %1713 = vmatpush1.xpose.msra.mxu0 0.0
    %1714 = vmatprep.subr.mxu0 0.0
    %1715 = vmatpush1.xpose.msra.mxu0 0.0
    %1716 = vmatprep.subr.mxu0 0.0
    %1717 = vmatpush1.xpose.msra.mxu0 0.0
    %1718 = vmatprep.subr.mxu0 0.0
    %1719 = vmatpush1.xpose.msra.mxu0 0.0
    %1720 = vmatprep.subr.mxu0 0.0
    %1721 = vmatpush1.xpose.msra.mxu0 0.0
    %1722 = vmatprep.subr.mxu0 0.0
    %1723 = vmatpush1.xpose.msra.mxu0 0.0
    %1724 = vmatprep.subr.mxu0 0.0
    %1725 = vmatpush1.xpose.msra.mxu0 0.0
    %1726 = vmatprep.subr.mxu0 0.0
    %1727 = vmatpush1.xpose.msra.mxu0 0.0
    %1728 = vmatprep.subr.mxu0 0.0
    %1729 = vmatpush1.xpose.msra.mxu0 0.0
    %1730 = vmatprep.subr.mxu0 0.0
    %1731 = vmatpush1.xpose.msra.mxu0 0.0
    %1732 = vmatprep.subr.mxu0 0.0
    %1733 = vmatpush1.xpose.msra.mxu0 0.0
    %1734 = vmatprep.subr.mxu0 0.0
    %1735 = vmatpush1.xpose.msra.mxu0 0.0
    %1736 = vmatprep.subr.mxu0 0.0
    %1737 = vmatpush1.xpose.msra.mxu0 0.0
    %1738 = vmatprep.mubr.f32.mxu0 0.0
    %1739 = vmatmul.mubr.f32.gmra.mrb[0].mxu0 %v1666
    %v1740 = vpop.f32.mrb[0].mxu0
    %v1741 = vadd.f32 0.0, %v1740
    %v1742 = vpop.f32.mrb[0].mxu0
    %1743 = vdwg.mxu0
    %v1745 = vsel %vm132, %v576, 0
    %v1748 = vsel %vm132, %v1338, 0
    %v1751 = vsel %vm132, %v1340, 0
    %1753 = vmatprep.subr.mxu0 0.0
    %1754 = vmatpush1.xpose.msra.mxu0 %v1748
    %1755 = vmatprep.subr.mxu0 0.0
    %1756 = vmatpush1.xpose.msra.mxu0 %v1751
    %1757 = vmatprep.subr.mxu0 0.0
    %1758 = vmatpush1.xpose.msra.mxu0 0.0
    %1759 = vmatprep.subr.mxu0 0.0
    %1760 = vmatpush1.xpose.msra.mxu0 0.0
    %1761 = vmatprep.subr.mxu0 0.0
    %1762 = vmatpush1.xpose.msra.mxu0 0.0
    %1763 = vmatprep.subr.mxu0 0.0
    %1764 = vmatpush1.xpose.msra.mxu0 0.0
    %1765 = vmatprep.subr.mxu0 0.0
    %1766 = vmatpush1.xpose.msra.mxu0 0.0
    %1767 = vmatprep.subr.mxu0 0.0
    %1768 = vmatpush1.xpose.msra.mxu0 0.0
    %1769 = vmatprep.subr.mxu0 0.0
    %1770 = vmatpush1.xpose.msra.mxu0 0.0
    %1771 = vmatprep.subr.mxu0 0.0
    %1772 = vmatpush1.xpose.msra.mxu0 0.0
    %1773 = vmatprep.subr.mxu0 0.0
    %1774 = vmatpush1.xpose.msra.mxu0 0.0
    %1775 = vmatprep.subr.mxu0 0.0
    %1776 = vmatpush1.xpose.msra.mxu0 0.0
    %1777 = vmatprep.subr.mxu0 0.0
    %1778 = vmatpush1.xpose.msra.mxu0 0.0
    %1779 = vmatprep.subr.mxu0 0.0
    %1780 = vmatpush1.xpose.msra.mxu0 0.0
    %1781 = vmatprep.subr.mxu0 0.0
    %1782 = vmatpush1.xpose.msra.mxu0 0.0
    %1783 = vmatprep.subr.mxu0 0.0
    %1784 = vmatpush1.xpose.msra.mxu0 0.0
    %1785 = vmatprep.subr.mxu0 0.0
    %1786 = vmatpush1.xpose.msra.mxu0 0.0
    %1787 = vmatprep.subr.mxu0 0.0
    %1788 = vmatpush1.xpose.msra.mxu0 0.0
    %1789 = vmatprep.subr.mxu0 0.0
    %1790 = vmatpush1.xpose.msra.mxu0 0.0
    %1791 = vmatprep.subr.mxu0 0.0
    %1792 = vmatpush1.xpose.msra.mxu0 0.0
    %1793 = vmatprep.subr.mxu0 0.0
    %1794 = vmatpush1.xpose.msra.mxu0 0.0
    %1795 = vmatprep.subr.mxu0 0.0
    %1796 = vmatpush1.xpose.msra.mxu0 0.0
    %1797 = vmatprep.subr.mxu0 0.0
    %1798 = vmatpush1.xpose.msra.mxu0 0.0
    %1799 = vmatprep.subr.mxu0 0.0
    %1800 = vmatpush1.xpose.msra.mxu0 0.0
    %1801 = vmatprep.subr.mxu0 0.0
    %1802 = vmatpush1.xpose.msra.mxu0 0.0
    %1803 = vmatprep.subr.mxu0 0.0
    %1804 = vmatpush1.xpose.msra.mxu0 0.0
    %1805 = vmatprep.subr.mxu0 0.0
    %1806 = vmatpush1.xpose.msra.mxu0 0.0
    %1807 = vmatprep.subr.mxu0 0.0
    %1808 = vmatpush1.xpose.msra.mxu0 0.0
    %1809 = vmatprep.subr.mxu0 0.0
    %1810 = vmatpush1.xpose.msra.mxu0 0.0
    %1811 = vmatprep.subr.mxu0 0.0
    %1812 = vmatpush1.xpose.msra.mxu0 0.0
    %1813 = vmatprep.subr.mxu0 0.0
    %1814 = vmatpush1.xpose.msra.mxu0 0.0
    %1815 = vmatprep.subr.mxu0 0.0
    %1816 = vmatpush1.xpose.msra.mxu0 0.0
    %1817 = vmatprep.mubr.f32.mxu0 0.0
    %1818 = vmatmul.mubr.f32.gmra.mrb[0].mxu0 %v1745
    %v1819 = vpop.f32.mrb[0].mxu0
    %v1820 = vadd.f32 0.0, %v1819
    %v1821 = vpop.f32.mrb[0].mxu0
    %1822 = vdwg.mxu0
    %v1824 = vsel %vm132, %v578, 0
    %v1827 = vsel %vm132, %v1342, 0
    %v1830 = vsel %vm132, %v1344, 0
    %1832 = vmatprep.subr.mxu0 0.0
    %1833 = vmatpush1.xpose.msra.mxu0 %v1827
    %1834 = vmatprep.subr.mxu0 0.0
    %1835 = vmatpush1.xpose.msra.mxu0 %v1830
    %1836 = vmatprep.subr.mxu0 0.0
    %1837 = vmatpush1.xpose.msra.mxu0 0.0
    %1838 = vmatprep.subr.mxu0 0.0
    %1839 = vmatpush1.xpose.msra.mxu0 0.0
    %1840 = vmatprep.subr.mxu0 0.0
    %1841 = vmatpush1.xpose.msra.mxu0 0.0
    %1842 = vmatprep.subr.mxu0 0.0
    %1843 = vmatpush1.xpose.msra.mxu0 0.0
    %1844 = vmatprep.subr.mxu0 0.0
    %1845 = vmatpush1.xpose.msra.mxu0 0.0
    %1846 = vmatprep.subr.mxu0 0.0
    %1847 = vmatpush1.xpose.msra.mxu0 0.0
    %1848 = vmatprep.subr.mxu0 0.0
    %1849 = vmatpush1.xpose.msra.mxu0 0.0
    %1850 = vmatprep.subr.mxu0 0.0
    %1851 = vmatpush1.xpose.msra.mxu0 0.0
    %1852 = vmatprep.subr.mxu0 0.0
    %1853 = vmatpush1.xpose.msra.mxu0 0.0
    %1854 = vmatprep.subr.mxu0 0.0
    %1855 = vmatpush1.xpose.msra.mxu0 0.0
    %1856 = vmatprep.subr.mxu0 0.0
    %1857 = vmatpush1.xpose.msra.mxu0 0.0
    %1858 = vmatprep.subr.mxu0 0.0
    %1859 = vmatpush1.xpose.msra.mxu0 0.0
    %1860 = vmatprep.subr.mxu0 0.0
    %1861 = vmatpush1.xpose.msra.mxu0 0.0
    %1862 = vmatprep.subr.mxu0 0.0
    %1863 = vmatpush1.xpose.msra.mxu0 0.0
    %1864 = vmatprep.subr.mxu0 0.0
    %1865 = vmatpush1.xpose.msra.mxu0 0.0
    %1866 = vmatprep.subr.mxu0 0.0
    %1867 = vmatpush1.xpose.msra.mxu0 0.0
    %1868 = vmatprep.subr.mxu0 0.0
    %1869 = vmatpush1.xpose.msra.mxu0 0.0
    %1870 = vmatprep.subr.mxu0 0.0
    %1871 = vmatpush1.xpose.msra.mxu0 0.0
    %1872 = vmatprep.subr.mxu0 0.0
    %1873 = vmatpush1.xpose.msra.mxu0 0.0
    %1874 = vmatprep.subr.mxu0 0.0
    %1875 = vmatpush1.xpose.msra.mxu0 0.0
    %1876 = vmatprep.subr.mxu0 0.0
    %1877 = vmatpush1.xpose.msra.mxu0 0.0
    %1878 = vmatprep.subr.mxu0 0.0
    %1879 = vmatpush1.xpose.msra.mxu0 0.0
    %1880 = vmatprep.subr.mxu0 0.0
    %1881 = vmatpush1.xpose.msra.mxu0 0.0
    %1882 = vmatprep.subr.mxu0 0.0
    %1883 = vmatpush1.xpose.msra.mxu0 0.0
    %1884 = vmatprep.subr.mxu0 0.0
    %1885 = vmatpush1.xpose.msra.mxu0 0.0
    %1886 = vmatprep.subr.mxu0 0.0
    %1887 = vmatpush1.xpose.msra.mxu0 0.0
    %1888 = vmatprep.subr.mxu0 0.0
    %1889 = vmatpush1.xpose.msra.mxu0 0.0
    %1890 = vmatprep.subr.mxu0 0.0
    %1891 = vmatpush1.xpose.msra.mxu0 0.0
    %1892 = vmatprep.subr.mxu0 0.0
    %1893 = vmatpush1.xpose.msra.mxu0 0.0
    %1894 = vmatprep.subr.mxu0 0.0
    %1895 = vmatpush1.xpose.msra.mxu0 0.0
    %1896 = vmatprep.mubr.f32.mxu0 0.0
    %1897 = vmatmul.mubr.f32.gmra.mrb[0].mxu0 %v1824
    %v1898 = vpop.f32.mrb[0].mxu0
    %v1899 = vadd.f32 0.0, %v1898
    %v1900 = vpop.f32.mrb[0].mxu0
    %1901 = vdwg.mxu0
    %v1903 = vsel %vm132, %v580, 0
    %v1906 = vsel %vm132, %v1346, 0
    %v1909 = vsel %vm132, %v1348, 0
    %1911 = vmatprep.subr.mxu0 0.0
    %1912 = vmatpush1.xpose.msra.mxu0 %v1906
    %1913 = vmatprep.subr.mxu0 0.0
    %1914 = vmatpush1.xpose.msra.mxu0 %v1909
    %1915 = vmatprep.subr.mxu0 0.0
    %1916 = vmatpush1.xpose.msra.mxu0 0.0
    %1917 = vmatprep.subr.mxu0 0.0
    %1918 = vmatpush1.xpose.msra.mxu0 0.0
    %1919 = vmatprep.subr.mxu0 0.0
    %1920 = vmatpush1.xpose.msra.mxu0 0.0
    %1921 = vmatprep.subr.mxu0 0.0
    %1922 = vmatpush1.xpose.msra.mxu0 0.0
    %1923 = vmatprep.subr.mxu0 0.0
    %1924 = vmatpush1.xpose.msra.mxu0 0.0
    %1925 = vmatprep.subr.mxu0 0.0
    %1926 = vmatpush1.xpose.msra.mxu0 0.0
    %1927 = vmatprep.subr.mxu0 0.0
    %1928 = vmatpush1.xpose.msra.mxu0 0.0
    %1929 = vmatprep.subr.mxu0 0.0
    %1930 = vmatpush1.xpose.msra.mxu0 0.0
    %1931 = vmatprep.subr.mxu0 0.0
    %1932 = vmatpush1.xpose.msra.mxu0 0.0
    %1933 = vmatprep.subr.mxu0 0.0
    %1934 = vmatpush1.xpose.msra.mxu0 0.0
    %1935 = vmatprep.subr.mxu0 0.0
    %1936 = vmatpush1.xpose.msra.mxu0 0.0
    %1937 = vmatprep.subr.mxu0 0.0
    %1938 = vmatpush1.xpose.msra.mxu0 0.0
    %1939 = vmatprep.subr.mxu0 0.0
    %1940 = vmatpush1.xpose.msra.mxu0 0.0
    %1941 = vmatprep.subr.mxu0 0.0
    %1942 = vmatpush1.xpose.msra.mxu0 0.0
    %1943 = vmatprep.subr.mxu0 0.0
    %1944 = vmatpush1.xpose.msra.mxu0 0.0
    %1945 = vmatprep.subr.mxu0 0.0
    %1946 = vmatpush1.xpose.msra.mxu0 0.0
    %1947 = vmatprep.subr.mxu0 0.0
    %1948 = vmatpush1.xpose.msra.mxu0 0.0
    %1949 = vmatprep.subr.mxu0 0.0
    %1950 = vmatpush1.xpose.msra.mxu0 0.0
    %1951 = vmatprep.subr.mxu0 0.0
    %1952 = vmatpush1.xpose.msra.mxu0 0.0
    %1953 = vmatprep.subr.mxu0 0.0
    %1954 = vmatpush1.xpose.msra.mxu0 0.0
    %1955 = vmatprep.subr.mxu0 0.0
    %1956 = vmatpush1.xpose.msra.mxu0 0.0
    %1957 = vmatprep.subr.mxu0 0.0
    %1958 = vmatpush1.xpose.msra.mxu0 0.0
    %1959 = vmatprep.subr.mxu0 0.0
    %1960 = vmatpush1.xpose.msra.mxu0 0.0
    %1961 = vmatprep.subr.mxu0 0.0
    %1962 = vmatpush1.xpose.msra.mxu0 0.0
    %1963 = vmatprep.subr.mxu0 0.0
    %1964 = vmatpush1.xpose.msra.mxu0 0.0
    %1965 = vmatprep.subr.mxu0 0.0
    %1966 = vmatpush1.xpose.msra.mxu0 0.0
    %1967 = vmatprep.subr.mxu0 0.0
    %1968 = vmatpush1.xpose.msra.mxu0 0.0
    %1969 = vmatprep.subr.mxu0 0.0
    %1970 = vmatpush1.xpose.msra.mxu0 0.0
    %1971 = vmatprep.subr.mxu0 0.0
    %1972 = vmatpush1.xpose.msra.mxu0 0.0
    %1973 = vmatprep.subr.mxu0 0.0
    %1974 = vmatpush1.xpose.msra.mxu0 0.0
    %1975 = vmatprep.mubr.f32.mxu0 0.0
    %1976 = vmatmul.mubr.f32.gmra.mrb[0].mxu0 %v1903
    %v1977 = vpop.f32.mrb[0].mxu0
    %v1978 = vadd.f32 0.0, %v1977
    %v1979 = vpop.f32.mrb[0].mxu0
    %1980 = vdwg.mxu0
    %v1981 = vld [vmem:[%s3] sm:$0xff]
    %v1983 = vcombine.high %v1981, %v1981
    %v1985 = vunpack.c.l.s4 1966171168
    %v1986 = vunpack.c.0.s8 %v1985
    %v1987 = vlaneseq
    %v1988 = vshrl.u32 %v1987, 7
    %v1989 = vsub.s32 %v1986, %v1988
    %v1990 = vrot.slane %v1981, %v1989
    %v1992 = vunpack.c.l.s4 1966171168
    %v1993 = vunpack.c.0.s8 %v1992
    %v1994 = vlaneseq
    %v1995 = vshrl.u32 %v1994, 7
    %v1996 = vsub.s32 %v1993, %v1995
    %v1997 = vrot.slane %v1983, %v1996
    %v1998 = vcombine.high %v1990, %v1990
    %v1999 = vcombine.high %v1997, %v1997
    %v2001 = vunpack.c.l.s4 1966171168
    %v2002 = vunpack.c.0.s8 %v2001
    %v2003 = vlaneseq
    %v2004 = vshrl.u32 %v2003, 7
    %v2005 = vsub.s32 %v2002, %v2004
    %v2006 = vrot.slane %v1990, %v2005
    %v2008 = vunpack.c.l.s4 1966171168
    %v2009 = vunpack.c.0.s8 %v2008
    %v2010 = vlaneseq
    %v2011 = vshrl.u32 %v2010, 7
    %v2012 = vsub.s32 %v2009, %v2011
    %v2013 = vrot.slane %v1997, %v2012
    %v2015 = vunpack.c.l.s4 1966171168
    %v2016 = vunpack.c.0.s8 %v2015
    %v2017 = vlaneseq
    %v2018 = vshrl.u32 %v2017, 7
    %v2019 = vsub.s32 %v2016, %v2018
    %v2020 = vrot.slane %v1998, %v2019
    %v2022 = vunpack.c.l.s4 1966171168
    %v2023 = vunpack.c.0.s8 %v2022
    %v2024 = vlaneseq
    %v2025 = vshrl.u32 %v2024, 7
    %v2026 = vsub.s32 %v2023, %v2025
    %v2027 = vrot.slane %v1999, %v2026
    %v2028 = vcombine.high %v2006, %v2006
    %v2029 = vcombine.high %v2013, %v2013
    %v2030 = vcombine.high %v2020, %v2020
    %v2031 = vcombine.high %v2027, %v2027
    %vm2040 = vcmp.gt.f32.partialorder %v2006, 0.0
    %vm2041 = vcmp.gt.f32.partialorder %v2020, 0.0
    %vm2042 = vcmp.gt.f32.partialorder %v2028, 0.0
    %vm2043 = vcmp.gt.f32.partialorder %v2030, 0.0
    %vm2044 = vcmp.gt.f32.partialorder %v2013, 0.0
    %vm2045 = vcmp.gt.f32.partialorder %v2027, 0.0
    %vm2046 = vcmp.gt.f32.partialorder %v2029, 0.0
    %vm2047 = vcmp.gt.f32.partialorder %v2031, 0.0
    %v2048 = vsel %vm2040, 1, 0
    %v2049 = vsel %vm2041, 1, 0
    %v2050 = vsel %vm2042, 1, 0
    %v2051 = vsel %vm2043, 1, 0
    %v2052 = vsel %vm2044, 1, 0
    %v2053 = vsel %vm2045, 1, 0
    %v2054 = vsel %vm2046, 1, 0
    %v2055 = vsel %vm2047, 1, 0
    %v2056 = vlaneseq
    %v2057 = vshrl.u32 %v2056, 7
    %v2058 = vsub.s32 0, %v2057
    %v2059 = vrot.slane %v2048, %v2058
    %v2060 = vlaneseq
    %v2061 = vshrl.u32 %v2060, 7
    %v2062 = vsub.s32 0, %v2061
    %v2063 = vrot.slane %v2049, %v2062
    %v2064 = vlaneseq
    %v2065 = vshrl.u32 %v2064, 7
    %v2066 = vsub.s32 0, %v2065
    %v2067 = vrot.slane %v2050, %v2066
    %v2068 = vlaneseq
    %v2069 = vshrl.u32 %v2068, 7
    %v2070 = vsub.s32 0, %v2069
    %v2071 = vrot.slane %v2051, %v2070
    %v2072 = vlaneseq
    %v2073 = vshrl.u32 %v2072, 7
    %v2074 = vsub.s32 0, %v2073
    %v2075 = vrot.slane %v2052, %v2074
    %v2076 = vlaneseq
    %v2077 = vshrl.u32 %v2076, 7
    %v2078 = vsub.s32 0, %v2077
    %v2079 = vrot.slane %v2053, %v2078
    %v2080 = vlaneseq
    %v2081 = vshrl.u32 %v2080, 7
    %v2082 = vsub.s32 0, %v2081
    %v2083 = vrot.slane %v2054, %v2082
    %v2084 = vlaneseq
    %v2085 = vshrl.u32 %v2084, 7
    %v2086 = vsub.s32 0, %v2085
    %v2087 = vrot.slane %v2055, %v2086
    %vm2088 = vcmp.eq.s32.totalorder %v2059, 1
    %vm2089 = vcmp.eq.s32.totalorder %v2063, 1
    %vm2090 = vcmp.eq.s32.totalorder %v2067, 1
    %vm2091 = vcmp.eq.s32.totalorder %v2071, 1
    %vm2092 = vcmp.eq.s32.totalorder %v2075, 1
    %vm2093 = vcmp.eq.s32.totalorder %v2079, 1
    %vm2094 = vcmp.eq.s32.totalorder %v2083, 1
    %vm2095 = vcmp.eq.s32.totalorder %v2087, 1
    %v2096 = vsel %vm2088, %v1425, -10000.0
    %v2097 = vsel %vm2089, %v1504, -10000.0
    %v2098 = vsel %vm2090, %v1583, -10000.0
    %v2099 = vsel %vm2091, %v1662, -10000.0
    %v2100 = vsel %vm2092, %v1741, -10000.0
    %v2101 = vsel %vm2093, %v1820, -10000.0
    %v2102 = vsel %vm2094, %v1899, -10000.0
    %v2103 = vsel %vm2095, %v1978, -10000.0
    %s2104 = sld [smem:[#allocation3]]
    %v2105 = vstv %s2104
    %v2106 = vsub.f32 %v2096, %v2105
    %v2107 = vsub.f32 %v2097, %v2105
    %v2108 = vsub.f32 %v2098, %v2105
    %v2109 = vsub.f32 %v2099, %v2105
    %v2110 = vsub.f32 %v2100, %v2105
    %v2111 = vsub.f32 %v2101, %v2105
    %v2112 = vsub.f32 %v2102, %v2105
    %v2113 = vsub.f32 %v2103, %v2105
    %v2114 = vmul.f32 %v2106, %v2106
    %v2115 = vmul.f32 %v2107, %v2107
    %v2116 = vmul.f32 %v2108, %v2108
    %v2117 = vmul.f32 %v2109, %v2109
    %v2118 = vmul.f32 %v2110, %v2110
    %v2119 = vmul.f32 %v2111, %v2111
    %v2120 = vmul.f32 %v2112, %v2112
    %v2121 = vmul.f32 %v2113, %v2113
    %s2122 = sld [smem:[#allocation5]]
    %v2123 = vstv %s2122
    %v2124 = vmul.f32 %v2114, %v2123
    %v2125 = vmul.f32 %v2115, %v2123
    %v2126 = vmul.f32 %v2116, %v2123
    %v2127 = vmul.f32 %v2117, %v2123
    %v2128 = vmul.f32 %v2118, %v2123
    %v2129 = vmul.f32 %v2119, %v2123
    %v2130 = vmul.f32 %v2120, %v2123
    %v2131 = vmul.f32 %v2121, %v2123
    %v2132 = vmul.f32 %v2124, 1.442695
    %v2133 = vpow.pop %v2132
    %v2134 = vmul.f32 %v2125, 1.442695
    %v2135 = vpow.pop %v2134
    %v2136 = vmul.f32 %v2126, 1.442695
    %v2137 = vpow.pop %v2136
    %v2138 = vmul.f32 %v2127, 1.442695
    %v2139 = vpow.pop %v2138
    %v2140 = vmul.f32 %v2128, 1.442695
    %v2141 = vpow.pop %v2140
    %v2142 = vmul.f32 %v2129, 1.442695
    %v2143 = vpow.pop %v2142
    %v2144 = vmul.f32 %v2130, 1.442695
    %v2145 = vpow.pop %v2144
    %v2146 = vmul.f32 %v2131, 1.442695
    %v2147 = vpow.pop %v2146
    %vm2148 = vcmask 130048
    %v2149 = vsel %vm2148, %v2133, 0.0
    %2150 = vadd.xlane.f32.xlu0 %v2149
    %v2151 = vpop.xlane.xlu0 %2150
    %v2152 = vsel %vm2148, %v2135, 0.0
    %2153 = vadd.xlane.f32.xlu0 %v2152
    %v2154 = vpop.xlane.xlu0 %2153
    %v2155 = vsel %vm2148, %v2137, 0.0
    %2156 = vadd.xlane.f32.xlu0 %v2155
    %v2157 = vpop.xlane.xlu0 %2156
    %v2158 = vsel %vm2148, %v2139, 0.0
    %2159 = vadd.xlane.f32.xlu0 %v2158
    %v2160 = vpop.xlane.xlu0 %2159
    %v2161 = vsel %vm2148, %v2141, 0.0
    %2162 = vadd.xlane.f32.xlu0 %v2161
    %v2163 = vpop.xlane.xlu0 %2162
    %v2164 = vsel %vm2148, %v2143, 0.0
    %2165 = vadd.xlane.f32.xlu0 %v2164
    %v2166 = vpop.xlane.xlu0 %2165
    %v2167 = vsel %vm2148, %v2145, 0.0
    %2168 = vadd.xlane.f32.xlu0 %v2167
    %v2169 = vpop.xlane.xlu0 %2168
    %v2170 = vsel %vm2148, %v2147, 0.0
    %2171 = vadd.xlane.f32.xlu0 %v2170
    %v2172 = vpop.xlane.xlu0 %2171
    %s2173 = sld [smem:[#allocation7]]
    %v2174 = vstv %s2173
    %v2175 = vmul.f32 %v2151, %v2174
    %v2176 = vmul.f32 %v2154, %v2174
    %v2177 = vmul.f32 %v2157, %v2174
    %v2178 = vmul.f32 %v2160, %v2174
    %v2179 = vmul.f32 %v2163, %v2174
    %v2180 = vmul.f32 %v2166, %v2174
    %v2181 = vmul.f32 %v2169, %v2174
    %v2182 = vmul.f32 %v2172, %v2174
    %v2183 = vmax.f32 %v2175, 0.0001
    %v2184 = vmax.f32 %v2176, 0.0001
    %v2185 = vmax.f32 %v2177, 0.0001
    %v2186 = vmax.f32 %v2178, 0.0001
    %v2187 = vmax.f32 %v2179, 0.0001
    %v2188 = vmax.f32 %v2180, 0.0001
    %v2189 = vmax.f32 %v2181, 0.0001
    %v2190 = vmax.f32 %v2182, 0.0001
    %v2191 = vlog2.pop %v2183
    %v2192 = vmul.f32 %v2191, 0.6931472
    %v2193 = vlog2.pop %v2184
    %v2194 = vmul.f32 %v2193, 0.6931472
    %v2195 = vlog2.pop %v2185
    %v2196 = vmul.f32 %v2195, 0.6931472
    %v2197 = vlog2.pop %v2186
    %v2198 = vmul.f32 %v2197, 0.6931472
    %v2199 = vlog2.pop %v2187
    %v2200 = vmul.f32 %v2199, 0.6931472
    %v2201 = vlog2.pop %v2188
    %v2202 = vmul.f32 %v2201, 0.6931472
    %v2203 = vlog2.pop %v2189
    %v2204 = vmul.f32 %v2203, 0.6931472
    %v2205 = vlog2.pop %v2190
    %v2206 = vmul.f32 %v2205, 0.6931472
    %s2207 = sld [smem:[#allocation8]]
    %v2208 = vstv %s2207
    %v2209 = vmul.f32 %v2192, %v2208
    %v2210 = vmul.f32 %v2194, %v2208
    %v2211 = vmul.f32 %v2196, %v2208
    %v2212 = vmul.f32 %v2198, %v2208
    %v2213 = vmul.f32 %v2200, %v2208
    %v2214 = vmul.f32 %v2202, %v2208
    %v2215 = vmul.f32 %v2204, %v2208
    %v2216 = vmul.f32 %v2206, %v2208
    %v2217 = vadd.f32 %v2209, 0.0
    %v2218 = vadd.f32 %v2210, 0.0
    %v2219 = vadd.f32 %v2211, 0.0
    %v2220 = vadd.f32 %v2212, 0.0
    %v2221 = vadd.f32 %v2213, 0.0
    %v2222 = vadd.f32 %v2214, 0.0
    %v2223 = vadd.f32 %v2215, 0.0
    %v2224 = vadd.f32 %v2216, 0.0
    %s2225 = sld [smem:[#allocation3 + $0x1]]
    %v2226 = vstv %s2225
    %v2227 = vsub.f32 %v2096, %v2226
    %v2228 = vsub.f32 %v2097, %v2226
    %v2229 = vsub.f32 %v2098, %v2226
    %v2230 = vsub.f32 %v2099, %v2226
    %v2231 = vsub.f32 %v2100, %v2226
    %v2232 = vsub.f32 %v2101, %v2226
    %v2233 = vsub.f32 %v2102, %v2226
    %v2234 = vsub.f32 %v2103, %v2226
    %v2235 = vmul.f32 %v2227, %v2227
    %v2236 = vmul.f32 %v2228, %v2228
    %v2237 = vmul.f32 %v2229, %v2229
    %v2238 = vmul.f32 %v2230, %v2230
    %v2239 = vmul.f32 %v2231, %v2231
    %v2240 = vmul.f32 %v2232, %v2232
    %v2241 = vmul.f32 %v2233, %v2233
    %v2242 = vmul.f32 %v2234, %v2234
    %s2243 = sld [smem:[#allocation5 + $0x1]]
    %v2244 = vstv %s2243
    %v2245 = vmul.f32 %v2235, %v2244
    %v2246 = vmul.f32 %v2236, %v2244
    %v2247 = vmul.f32 %v2237, %v2244
    %v2248 = vmul.f32 %v2238, %v2244
    %v2249 = vmul.f32 %v2239, %v2244
    %v2250 = vmul.f32 %v2240, %v2244
    %v2251 = vmul.f32 %v2241, %v2244
    %v2252 = vmul.f32 %v2242, %v2244
    %v2253 = vmul.f32 %v2245, 1.442695
    %v2254 = vpow.pop %v2253
    %v2255 = vmul.f32 %v2246, 1.442695
    %v2256 = vpow.pop %v2255
    %v2257 = vmul.f32 %v2247, 1.442695
    %v2258 = vpow.pop %v2257
    %v2259 = vmul.f32 %v2248, 1.442695
    %v2260 = vpow.pop %v2259
    %v2261 = vmul.f32 %v2249, 1.442695
    %v2262 = vpow.pop %v2261
    %v2263 = vmul.f32 %v2250, 1.442695
    %v2264 = vpow.pop %v2263
    %v2265 = vmul.f32 %v2251, 1.442695
    %v2266 = vpow.pop %v2265
    %v2267 = vmul.f32 %v2252, 1.442695
    %v2268 = vpow.pop %v2267
    %v2269 = vsel %vm2148, %v2254, 0.0
    %2270 = vadd.xlane.f32.xlu0 %v2269
    %v2271 = vpop.xlane.xlu0 %2270
    %v2272 = vsel %vm2148, %v2256, 0.0
    %2273 = vadd.xlane.f32.xlu0 %v2272
    %v2274 = vpop.xlane.xlu0 %2273
    %v2275 = vsel %vm2148, %v2258, 0.0
    %2276 = vadd.xlane.f32.xlu0 %v2275
    %v2277 = vpop.xlane.xlu0 %2276
    %v2278 = vsel %vm2148, %v2260, 0.0
    %2279 = vadd.xlane.f32.xlu0 %v2278
    %v2280 = vpop.xlane.xlu0 %2279
    %v2281 = vsel %vm2148, %v2262, 0.0
    %2282 = vadd.xlane.f32.xlu0 %v2281
    %v2283 = vpop.xlane.xlu0 %2282
    %v2284 = vsel %vm2148, %v2264, 0.0
    %2285 = vadd.xlane.f32.xlu0 %v2284
    %v2286 = vpop.xlane.xlu0 %2285
    %v2287 = vsel %vm2148, %v2266, 0.0
    %2288 = vadd.xlane.f32.xlu0 %v2287
    %v2289 = vpop.xlane.xlu0 %2288
    %v2290 = vsel %vm2148, %v2268, 0.0
    %2291 = vadd.xlane.f32.xlu0 %v2290
    %v2292 = vpop.xlane.xlu0 %2291
    %s2293 = sld [smem:[#allocation7 + $0x1]]
    %v2294 = vstv %s2293
    %v2295 = vmul.f32 %v2271, %v2294
    %v2296 = vmul.f32 %v2274, %v2294
    %v2297 = vmul.f32 %v2277, %v2294
    %v2298 = vmul.f32 %v2280, %v2294
    %v2299 = vmul.f32 %v2283, %v2294
    %v2300 = vmul.f32 %v2286, %v2294
    %v2301 = vmul.f32 %v2289, %v2294
    %v2302 = vmul.f32 %v2292, %v2294
    %v2303 = vmax.f32 %v2295, 0.0001
    %v2304 = vmax.f32 %v2296, 0.0001
    %v2305 = vmax.f32 %v2297, 0.0001
    %v2306 = vmax.f32 %v2298, 0.0001
    %v2307 = vmax.f32 %v2299, 0.0001
    %v2308 = vmax.f32 %v2300, 0.0001
    %v2309 = vmax.f32 %v2301, 0.0001
    %v2310 = vmax.f32 %v2302, 0.0001
    %v2311 = vlog2.pop %v2303
    %v2312 = vmul.f32 %v2311, 0.6931472
    %v2313 = vlog2.pop %v2304
    %v2314 = vmul.f32 %v2313, 0.6931472
    %v2315 = vlog2.pop %v2305
    %v2316 = vmul.f32 %v2315, 0.6931472
    %v2317 = vlog2.pop %v2306
    %v2318 = vmul.f32 %v2317, 0.6931472
    %v2319 = vlog2.pop %v2307
    %v2320 = vmul.f32 %v2319, 0.6931472
    %v2321 = vlog2.pop %v2308
    %v2322 = vmul.f32 %v2321, 0.6931472
    %v2323 = vlog2.pop %v2309
    %v2324 = vmul.f32 %v2323, 0.6931472
    %v2325 = vlog2.pop %v2310
    %v2326 = vmul.f32 %v2325, 0.6931472
    %s2327 = sld [smem:[#allocation8 + $0x1]]
    %v2328 = vstv %s2327
    %v2329 = vmul.f32 %v2312, %v2328
    %v2330 = vmul.f32 %v2314, %v2328
    %v2331 = vmul.f32 %v2316, %v2328
    %v2332 = vmul.f32 %v2318, %v2328
    %v2333 = vmul.f32 %v2320, %v2328
    %v2334 = vmul.f32 %v2322, %v2328
    %v2335 = vmul.f32 %v2324, %v2328
    %v2336 = vmul.f32 %v2326, %v2328
    %v2337 = vadd.f32 %v2217, %v2329
    %v2338 = vadd.f32 %v2218, %v2330
    %v2339 = vadd.f32 %v2219, %v2331
    %v2340 = vadd.f32 %v2220, %v2332
    %v2341 = vadd.f32 %v2221, %v2333
    %v2342 = vadd.f32 %v2222, %v2334
    %v2343 = vadd.f32 %v2223, %v2335
    %v2344 = vadd.f32 %v2224, %v2336
    %s2345 = sld [smem:[#allocation3 + $0x2]]
    %v2346 = vstv %s2345
    %v2347 = vsub.f32 %v2096, %v2346
    %v2348 = vsub.f32 %v2097, %v2346
    %v2349 = vsub.f32 %v2098, %v2346
    %v2350 = vsub.f32 %v2099, %v2346
    %v2351 = vsub.f32 %v2100, %v2346
    %v2352 = vsub.f32 %v2101, %v2346
    %v2353 = vsub.f32 %v2102, %v2346
    %v2354 = vsub.f32 %v2103, %v2346
    %v2355 = vmul.f32 %v2347, %v2347
    %v2356 = vmul.f32 %v2348, %v2348
    %v2357 = vmul.f32 %v2349, %v2349
    %v2358 = vmul.f32 %v2350, %v2350
    %v2359 = vmul.f32 %v2351, %v2351
    %v2360 = vmul.f32 %v2352, %v2352
    %v2361 = vmul.f32 %v2353, %v2353
    %v2362 = vmul.f32 %v2354, %v2354
    %s2363 = sld [smem:[#allocation5 + $0x2]]
    %v2364 = vstv %s2363
    %v2365 = vmul.f32 %v2355, %v2364
    %v2366 = vmul.f32 %v2356, %v2364
    %v2367 = vmul.f32 %v2357, %v2364
    %v2368 = vmul.f32 %v2358, %v2364
    %v2369 = vmul.f32 %v2359, %v2364
    %v2370 = vmul.f32 %v2360, %v2364
    %v2371 = vmul.f32 %v2361, %v2364
    %v2372 = vmul.f32 %v2362, %v2364
    %v2373 = vmul.f32 %v2365, 1.442695
    %v2374 = vpow.pop %v2373
    %v2375 = vmul.f32 %v2366, 1.442695
    %v2376 = vpow.pop %v2375
    %v2377 = vmul.f32 %v2367, 1.442695
    %v2378 = vpow.pop %v2377
    %v2379 = vmul.f32 %v2368, 1.442695
    %v2380 = vpow.pop %v2379
    %v2381 = vmul.f32 %v2369, 1.442695
    %v2382 = vpow.pop %v2381
    %v2383 = vmul.f32 %v2370, 1.442695
    %v2384 = vpow.pop %v2383
    %v2385 = vmul.f32 %v2371, 1.442695
    %v2386 = vpow.pop %v2385
    %v2387 = vmul.f32 %v2372, 1.442695
    %v2388 = vpow.pop %v2387
    %v2389 = vsel %vm2148, %v2374, 0.0
    %2390 = vadd.xlane.f32.xlu0 %v2389
    %v2391 = vpop.xlane.xlu0 %2390
    %v2392 = vsel %vm2148, %v2376, 0.0
    %2393 = vadd.xlane.f32.xlu0 %v2392
    %v2394 = vpop.xlane.xlu0 %2393
    %v2395 = vsel %vm2148, %v2378, 0.0
    %2396 = vadd.xlane.f32.xlu0 %v2395
    %v2397 = vpop.xlane.xlu0 %2396
    %v2398 = vsel %vm2148, %v2380, 0.0
    %2399 = vadd.xlane.f32.xlu0 %v2398
    %v2400 = vpop.xlane.xlu0 %2399
    %v2401 = vsel %vm2148, %v2382, 0.0
    %2402 = vadd.xlane.f32.xlu0 %v2401
    %v2403 = vpop.xlane.xlu0 %2402
    %v2404 = vsel %vm2148, %v2384, 0.0
    %2405 = vadd.xlane.f32.xlu0 %v2404
    %v2406 = vpop.xlane.xlu0 %2405
    %v2407 = vsel %vm2148, %v2386, 0.0
    %2408 = vadd.xlane.f32.xlu0 %v2407
    %v2409 = vpop.xlane.xlu0 %2408
    %v2410 = vsel %vm2148, %v2388, 0.0
    %2411 = vadd.xlane.f32.xlu0 %v2410
    %v2412 = vpop.xlane.xlu0 %2411
    %s2413 = sld [smem:[#allocation7 + $0x2]]
    %v2414 = vstv %s2413
    %v2415 = vmul.f32 %v2391, %v2414
    %v2416 = vmul.f32 %v2394, %v2414
    %v2417 = vmul.f32 %v2397, %v2414
    %v2418 = vmul.f32 %v2400, %v2414
    %v2419 = vmul.f32 %v2403, %v2414
    %v2420 = vmul.f32 %v2406, %v2414
    %v2421 = vmul.f32 %v2409, %v2414
    %v2422 = vmul.f32 %v2412, %v2414
    %v2423 = vmax.f32 %v2415, 0.0001
    %v2424 = vmax.f32 %v2416, 0.0001
    %v2425 = vmax.f32 %v2417, 0.0001
    %v2426 = vmax.f32 %v2418, 0.0001
    %v2427 = vmax.f32 %v2419, 0.0001
    %v2428 = vmax.f32 %v2420, 0.0001
    %v2429 = vmax.f32 %v2421, 0.0001
    %v2430 = vmax.f32 %v2422, 0.0001
    %v2431 = vlog2.pop %v2423
    %v2432 = vmul.f32 %v2431, 0.6931472
    %v2433 = vlog2.pop %v2424
    %v2434 = vmul.f32 %v2433, 0.6931472
    %v2435 = vlog2.pop %v2425
    %v2436 = vmul.f32 %v2435, 0.6931472
    %v2437 = vlog2.pop %v2426
    %v2438 = vmul.f32 %v2437, 0.6931472
    %v2439 = vlog2.pop %v2427
    %v2440 = vmul.f32 %v2439, 0.6931472
    %v2441 = vlog2.pop %v2428
    %v2442 = vmul.f32 %v2441, 0.6931472
    %v2443 = vlog2.pop %v2429
    %v2444 = vmul.f32 %v2443, 0.6931472
    %v2445 = vlog2.pop %v2430
    %v2446 = vmul.f32 %v2445, 0.6931472
    %s2447 = sld [smem:[#allocation8 + $0x2]]
    %v2448 = vstv %s2447
    %v2449 = vmul.f32 %v2432, %v2448
    %v2450 = vmul.f32 %v2434, %v2448
    %v2451 = vmul.f32 %v2436, %v2448
    %v2452 = vmul.f32 %v2438, %v2448
    %v2453 = vmul.f32 %v2440, %v2448
    %v2454 = vmul.f32 %v2442, %v2448
    %v2455 = vmul.f32 %v2444, %v2448
    %v2456 = vmul.f32 %v2446, %v2448
    %v2457 = vadd.f32 %v2337, %v2449
    %v2458 = vadd.f32 %v2338, %v2450
    %v2459 = vadd.f32 %v2339, %v2451
    %v2460 = vadd.f32 %v2340, %v2452
    %v2461 = vadd.f32 %v2341, %v2453
    %v2462 = vadd.f32 %v2342, %v2454
    %v2463 = vadd.f32 %v2343, %v2455
    %v2464 = vadd.f32 %v2344, %v2456
    %s2465 = sld [smem:[#allocation3 + $0x3]]
    %v2466 = vstv %s2465
    %v2467 = vsub.f32 %v2096, %v2466
    %v2468 = vsub.f32 %v2097, %v2466
    %v2469 = vsub.f32 %v2098, %v2466
    %v2470 = vsub.f32 %v2099, %v2466
    %v2471 = vsub.f32 %v2100, %v2466
    %v2472 = vsub.f32 %v2101, %v2466
    %v2473 = vsub.f32 %v2102, %v2466
    %v2474 = vsub.f32 %v2103, %v2466
    %v2475 = vmul.f32 %v2467, %v2467
    %v2476 = vmul.f32 %v2468, %v2468
    %v2477 = vmul.f32 %v2469, %v2469
    %v2478 = vmul.f32 %v2470, %v2470
    %v2479 = vmul.f32 %v2471, %v2471
    %v2480 = vmul.f32 %v2472, %v2472
    %v2481 = vmul.f32 %v2473, %v2473
    %v2482 = vmul.f32 %v2474, %v2474
    %s2483 = sld [smem:[#allocation5 + $0x3]]
    %v2484 = vstv %s2483
    %v2485 = vmul.f32 %v2475, %v2484
    %v2486 = vmul.f32 %v2476, %v2484
    %v2487 = vmul.f32 %v2477, %v2484
    %v2488 = vmul.f32 %v2478, %v2484
    %v2489 = vmul.f32 %v2479, %v2484
    %v2490 = vmul.f32 %v2480, %v2484
    %v2491 = vmul.f32 %v2481, %v2484
    %v2492 = vmul.f32 %v2482, %v2484
    %v2493 = vmul.f32 %v2485, 1.442695
    %v2494 = vpow.pop %v2493
    %v2495 = vmul.f32 %v2486, 1.442695
    %v2496 = vpow.pop %v2495
    %v2497 = vmul.f32 %v2487, 1.442695
    %v2498 = vpow.pop %v2497
    %v2499 = vmul.f32 %v2488, 1.442695
    %v2500 = vpow.pop %v2499
    %v2501 = vmul.f32 %v2489, 1.442695
    %v2502 = vpow.pop %v2501
    %v2503 = vmul.f32 %v2490, 1.442695
    %v2504 = vpow.pop %v2503
    %v2505 = vmul.f32 %v2491, 1.442695
    %v2506 = vpow.pop %v2505
    %v2507 = vmul.f32 %v2492, 1.442695
    %v2508 = vpow.pop %v2507
    %v2509 = vsel %vm2148, %v2494, 0.0
    %2510 = vadd.xlane.f32.xlu0 %v2509
    %v2511 = vpop.xlane.xlu0 %2510
    %v2512 = vsel %vm2148, %v2496, 0.0
    %2513 = vadd.xlane.f32.xlu0 %v2512
    %v2514 = vpop.xlane.xlu0 %2513
    %v2515 = vsel %vm2148, %v2498, 0.0
    %2516 = vadd.xlane.f32.xlu0 %v2515
    %v2517 = vpop.xlane.xlu0 %2516
    %v2518 = vsel %vm2148, %v2500, 0.0
    %2519 = vadd.xlane.f32.xlu0 %v2518
    %v2520 = vpop.xlane.xlu0 %2519
    %v2521 = vsel %vm2148, %v2502, 0.0
    %2522 = vadd.xlane.f32.xlu0 %v2521
    %v2523 = vpop.xlane.xlu0 %2522
    %v2524 = vsel %vm2148, %v2504, 0.0
    %2525 = vadd.xlane.f32.xlu0 %v2524
    %v2526 = vpop.xlane.xlu0 %2525
    %v2527 = vsel %vm2148, %v2506, 0.0
    %2528 = vadd.xlane.f32.xlu0 %v2527
    %v2529 = vpop.xlane.xlu0 %2528
    %v2530 = vsel %vm2148, %v2508, 0.0
    %2531 = vadd.xlane.f32.xlu0 %v2530
    %v2532 = vpop.xlane.xlu0 %2531
    %s2533 = sld [smem:[#allocation7 + $0x3]]
    %v2534 = vstv %s2533
    %v2535 = vmul.f32 %v2511, %v2534
    %v2536 = vmul.f32 %v2514, %v2534
    %v2537 = vmul.f32 %v2517, %v2534
    %v2538 = vmul.f32 %v2520, %v2534
    %v2539 = vmul.f32 %v2523, %v2534
    %v2540 = vmul.f32 %v2526, %v2534
    %v2541 = vmul.f32 %v2529, %v2534
    %v2542 = vmul.f32 %v2532, %v2534
    %v2543 = vmax.f32 %v2535, 0.0001
    %v2544 = vmax.f32 %v2536, 0.0001
    %v2545 = vmax.f32 %v2537, 0.0001
    %v2546 = vmax.f32 %v2538, 0.0001
    %v2547 = vmax.f32 %v2539, 0.0001
    %v2548 = vmax.f32 %v2540, 0.0001
    %v2549 = vmax.f32 %v2541, 0.0001
    %v2550 = vmax.f32 %v2542, 0.0001
    %v2551 = vlog2.pop %v2543
    %v2552 = vmul.f32 %v2551, 0.6931472
    %v2553 = vlog2.pop %v2544
    %v2554 = vmul.f32 %v2553, 0.6931472
    %v2555 = vlog2.pop %v2545
    %v2556 = vmul.f32 %v2555, 0.6931472
    %v2557 = vlog2.pop %v2546
    %v2558 = vmul.f32 %v2557, 0.6931472
    %v2559 = vlog2.pop %v2547
    %v2560 = vmul.f32 %v2559, 0.6931472
    %v2561 = vlog2.pop %v2548
    %v2562 = vmul.f32 %v2561, 0.6931472
    %v2563 = vlog2.pop %v2549
    %v2564 = vmul.f32 %v2563, 0.6931472
    %v2565 = vlog2.pop %v2550
    %v2566 = vmul.f32 %v2565, 0.6931472
    %s2567 = sld [smem:[#allocation8 + $0x3]]
    %v2568 = vstv %s2567
    %v2569 = vmul.f32 %v2552, %v2568
    %v2570 = vmul.f32 %v2554, %v2568
    %v2571 = vmul.f32 %v2556, %v2568
    %v2572 = vmul.f32 %v2558, %v2568
    %v2573 = vmul.f32 %v2560, %v2568
    %v2574 = vmul.f32 %v2562, %v2568
    %v2575 = vmul.f32 %v2564, %v2568
    %v2576 = vmul.f32 %v2566, %v2568
    %v2577 = vadd.f32 %v2457, %v2569
    %v2578 = vadd.f32 %v2458, %v2570
    %v2579 = vadd.f32 %v2459, %v2571
    %v2580 = vadd.f32 %v2460, %v2572
    %v2581 = vadd.f32 %v2461, %v2573
    %v2582 = vadd.f32 %v2462, %v2574
    %v2583 = vadd.f32 %v2463, %v2575
    %v2584 = vadd.f32 %v2464, %v2576
    %s2585 = sld [smem:[#allocation3 + $0x4]]
    %v2586 = vstv %s2585
    %v2587 = vsub.f32 %v2096, %v2586
    %v2588 = vsub.f32 %v2097, %v2586
    %v2589 = vsub.f32 %v2098, %v2586
    %v2590 = vsub.f32 %v2099, %v2586
    %v2591 = vsub.f32 %v2100, %v2586
    %v2592 = vsub.f32 %v2101, %v2586
    %v2593 = vsub.f32 %v2102, %v2586
    %v2594 = vsub.f32 %v2103, %v2586
    %v2595 = vmul.f32 %v2587, %v2587
    %v2596 = vmul.f32 %v2588, %v2588
    %v2597 = vmul.f32 %v2589, %v2589
    %v2598 = vmul.f32 %v2590, %v2590
    %v2599 = vmul.f32 %v2591, %v2591
    %v2600 = vmul.f32 %v2592, %v2592
    %v2601 = vmul.f32 %v2593, %v2593
    %v2602 = vmul.f32 %v2594, %v2594
    %s2603 = sld [smem:[#allocation5 + $0x4]]
    %v2604 = vstv %s2603
    %v2605 = vmul.f32 %v2595, %v2604
    %v2606 = vmul.f32 %v2596, %v2604
    %v2607 = vmul.f32 %v2597, %v2604
    %v2608 = vmul.f32 %v2598, %v2604
    %v2609 = vmul.f32 %v2599, %v2604
    %v2610 = vmul.f32 %v2600, %v2604
    %v2611 = vmul.f32 %v2601, %v2604
    %v2612 = vmul.f32 %v2602, %v2604
    %v2613 = vmul.f32 %v2605, 1.442695
    %v2614 = vpow.pop %v2613
    %v2615 = vmul.f32 %v2606, 1.442695
    %v2616 = vpow.pop %v2615
    %v2617 = vmul.f32 %v2607, 1.442695
    %v2618 = vpow.pop %v2617
    %v2619 = vmul.f32 %v2608, 1.442695
    %v2620 = vpow.pop %v2619
    %v2621 = vmul.f32 %v2609, 1.442695
    %v2622 = vpow.pop %v2621
    %v2623 = vmul.f32 %v2610, 1.442695
    %v2624 = vpow.pop %v2623
    %v2625 = vmul.f32 %v2611, 1.442695
    %v2626 = vpow.pop %v2625
    %v2627 = vmul.f32 %v2612, 1.442695
    %v2628 = vpow.pop %v2627
    %v2629 = vsel %vm2148, %v2614, 0.0
    %2630 = vadd.xlane.f32.xlu0 %v2629
    %v2631 = vpop.xlane.xlu0 %2630
    %v2632 = vsel %vm2148, %v2616, 0.0
    %2633 = vadd.xlane.f32.xlu0 %v2632
    %v2634 = vpop.xlane.xlu0 %2633
    %v2635 = vsel %vm2148, %v2618, 0.0
    %2636 = vadd.xlane.f32.xlu0 %v2635
    %v2637 = vpop.xlane.xlu0 %2636
    %v2638 = vsel %vm2148, %v2620, 0.0
    %2639 = vadd.xlane.f32.xlu0 %v2638
    %v2640 = vpop.xlane.xlu0 %2639
    %v2641 = vsel %vm2148, %v2622, 0.0
    %2642 = vadd.xlane.f32.xlu0 %v2641
    %v2643 = vpop.xlane.xlu0 %2642
    %v2644 = vsel %vm2148, %v2624, 0.0
    %2645 = vadd.xlane.f32.xlu0 %v2644
    %v2646 = vpop.xlane.xlu0 %2645
    %v2647 = vsel %vm2148, %v2626, 0.0
    %2648 = vadd.xlane.f32.xlu0 %v2647
    %v2649 = vpop.xlane.xlu0 %2648
    %v2650 = vsel %vm2148, %v2628, 0.0
    %2651 = vadd.xlane.f32.xlu0 %v2650
    %v2652 = vpop.xlane.xlu0 %2651
    %s2653 = sld [smem:[#allocation7 + $0x4]]
    %v2654 = vstv %s2653
    %v2655 = vmul.f32 %v2631, %v2654
    %v2656 = vmul.f32 %v2634, %v2654
    %v2657 = vmul.f32 %v2637, %v2654
    %v2658 = vmul.f32 %v2640, %v2654
    %v2659 = vmul.f32 %v2643, %v2654
    %v2660 = vmul.f32 %v2646, %v2654
    %v2661 = vmul.f32 %v2649, %v2654
    %v2662 = vmul.f32 %v2652, %v2654
    %v2663 = vmax.f32 %v2655, 0.0001
    %v2664 = vmax.f32 %v2656, 0.0001
    %v2665 = vmax.f32 %v2657, 0.0001
    %v2666 = vmax.f32 %v2658, 0.0001
    %v2667 = vmax.f32 %v2659, 0.0001
    %v2668 = vmax.f32 %v2660, 0.0001
    %v2669 = vmax.f32 %v2661, 0.0001
    %v2670 = vmax.f32 %v2662, 0.0001
    %v2671 = vlog2.pop %v2663
    %v2672 = vmul.f32 %v2671, 0.6931472
    %v2673 = vlog2.pop %v2664
    %v2674 = vmul.f32 %v2673, 0.6931472
    %v2675 = vlog2.pop %v2665
    %v2676 = vmul.f32 %v2675, 0.6931472
    %v2677 = vlog2.pop %v2666
    %v2678 = vmul.f32 %v2677, 0.6931472
    %v2679 = vlog2.pop %v2667
    %v2680 = vmul.f32 %v2679, 0.6931472
    %v2681 = vlog2.pop %v2668
    %v2682 = vmul.f32 %v2681, 0.6931472
    %v2683 = vlog2.pop %v2669
    %v2684 = vmul.f32 %v2683, 0.6931472
    %v2685 = vlog2.pop %v2670
    %v2686 = vmul.f32 %v2685, 0.6931472
    %s2687 = sld [smem:[#allocation8 + $0x4]]
    %v2688 = vstv %s2687
    %v2689 = vmul.f32 %v2672, %v2688
    %v2690 = vmul.f32 %v2674, %v2688
    %v2691 = vmul.f32 %v2676, %v2688
    %v2692 = vmul.f32 %v2678, %v2688
    %v2693 = vmul.f32 %v2680, %v2688
    %v2694 = vmul.f32 %v2682, %v2688
    %v2695 = vmul.f32 %v2684, %v2688
    %v2696 = vmul.f32 %v2686, %v2688
    %v2697 = vadd.f32 %v2577, %v2689
    %v2698 = vadd.f32 %v2578, %v2690
    %v2699 = vadd.f32 %v2579, %v2691
    %v2700 = vadd.f32 %v2580, %v2692
    %v2701 = vadd.f32 %v2581, %v2693
    %v2702 = vadd.f32 %v2582, %v2694
    %v2703 = vadd.f32 %v2583, %v2695
    %v2704 = vadd.f32 %v2584, %v2696
    %s2705 = sld [smem:[#allocation3 + $0x5]]
    %v2706 = vstv %s2705
    %v2707 = vsub.f32 %v2096, %v2706
    %v2708 = vsub.f32 %v2097, %v2706
    %v2709 = vsub.f32 %v2098, %v2706
    %v2710 = vsub.f32 %v2099, %v2706
    %v2711 = vsub.f32 %v2100, %v2706
    %v2712 = vsub.f32 %v2101, %v2706
    %v2713 = vsub.f32 %v2102, %v2706
    %v2714 = vsub.f32 %v2103, %v2706
    %v2715 = vmul.f32 %v2707, %v2707
    %v2716 = vmul.f32 %v2708, %v2708
    %v2717 = vmul.f32 %v2709, %v2709
    %v2718 = vmul.f32 %v2710, %v2710
    %v2719 = vmul.f32 %v2711, %v2711
    %v2720 = vmul.f32 %v2712, %v2712
    %v2721 = vmul.f32 %v2713, %v2713
    %v2722 = vmul.f32 %v2714, %v2714
    %s2723 = sld [smem:[#allocation5 + $0x5]]
    %v2724 = vstv %s2723
    %v2725 = vmul.f32 %v2715, %v2724
    %v2726 = vmul.f32 %v2716, %v2724
    %v2727 = vmul.f32 %v2717, %v2724
    %v2728 = vmul.f32 %v2718, %v2724
    %v2729 = vmul.f32 %v2719, %v2724
    %v2730 = vmul.f32 %v2720, %v2724
    %v2731 = vmul.f32 %v2721, %v2724
    %v2732 = vmul.f32 %v2722, %v2724
    %v2733 = vmul.f32 %v2725, 1.442695
    %v2734 = vpow.pop %v2733
    %v2735 = vmul.f32 %v2726, 1.442695
    %v2736 = vpow.pop %v2735
    %v2737 = vmul.f32 %v2727, 1.442695
    %v2738 = vpow.pop %v2737
    %v2739 = vmul.f32 %v2728, 1.442695
    %v2740 = vpow.pop %v2739
    %v2741 = vmul.f32 %v2729, 1.442695
    %v2742 = vpow.pop %v2741
    %v2743 = vmul.f32 %v2730, 1.442695
    %v2744 = vpow.pop %v2743
    %v2745 = vmul.f32 %v2731, 1.442695
    %v2746 = vpow.pop %v2745
    %v2747 = vmul.f32 %v2732, 1.442695
    %v2748 = vpow.pop %v2747
    %v2749 = vsel %vm2148, %v2734, 0.0
    %2750 = vadd.xlane.f32.xlu0 %v2749
    %v2751 = vpop.xlane.xlu0 %2750
    %v2752 = vsel %vm2148, %v2736, 0.0
    %2753 = vadd.xlane.f32.xlu0 %v2752
    %v2754 = vpop.xlane.xlu0 %2753
    %v2755 = vsel %vm2148, %v2738, 0.0
    %2756 = vadd.xlane.f32.xlu0 %v2755
    %v2757 = vpop.xlane.xlu0 %2756
    %v2758 = vsel %vm2148, %v2740, 0.0
    %2759 = vadd.xlane.f32.xlu0 %v2758
    %v2760 = vpop.xlane.xlu0 %2759
    %v2761 = vsel %vm2148, %v2742, 0.0
    %2762 = vadd.xlane.f32.xlu0 %v2761
    %v2763 = vpop.xlane.xlu0 %2762
    %v2764 = vsel %vm2148, %v2744, 0.0
    %2765 = vadd.xlane.f32.xlu0 %v2764
    %v2766 = vpop.xlane.xlu0 %2765
    %v2767 = vsel %vm2148, %v2746, 0.0
    %2768 = vadd.xlane.f32.xlu0 %v2767
    %v2769 = vpop.xlane.xlu0 %2768
    %v2770 = vsel %vm2148, %v2748, 0.0
    %2771 = vadd.xlane.f32.xlu0 %v2770
    %v2772 = vpop.xlane.xlu0 %2771
    %s2773 = sld [smem:[#allocation7 + $0x5]]
    %v2774 = vstv %s2773
    %v2775 = vmul.f32 %v2751, %v2774
    %v2776 = vmul.f32 %v2754, %v2774
    %v2777 = vmul.f32 %v2757, %v2774
    %v2778 = vmul.f32 %v2760, %v2774
    %v2779 = vmul.f32 %v2763, %v2774
    %v2780 = vmul.f32 %v2766, %v2774
    %v2781 = vmul.f32 %v2769, %v2774
    %v2782 = vmul.f32 %v2772, %v2774
    %v2783 = vmax.f32 %v2775, 0.0001
    %v2784 = vmax.f32 %v2776, 0.0001
    %v2785 = vmax.f32 %v2777, 0.0001
    %v2786 = vmax.f32 %v2778, 0.0001
    %v2787 = vmax.f32 %v2779, 0.0001
    %v2788 = vmax.f32 %v2780, 0.0001
    %v2789 = vmax.f32 %v2781, 0.0001
    %v2790 = vmax.f32 %v2782, 0.0001
    %v2791 = vlog2.pop %v2783
    %v2792 = vmul.f32 %v2791, 0.6931472
    %v2793 = vlog2.pop %v2784
    %v2794 = vmul.f32 %v2793, 0.6931472
    %v2795 = vlog2.pop %v2785
    %v2796 = vmul.f32 %v2795, 0.6931472
    %v2797 = vlog2.pop %v2786
    %v2798 = vmul.f32 %v2797, 0.6931472
    %v2799 = vlog2.pop %v2787
    %v2800 = vmul.f32 %v2799, 0.6931472
    %v2801 = vlog2.pop %v2788
    %v2802 = vmul.f32 %v2801, 0.6931472
    %v2803 = vlog2.pop %v2789
    %v2804 = vmul.f32 %v2803, 0.6931472
    %v2805 = vlog2.pop %v2790
    %v2806 = vmul.f32 %v2805, 0.6931472
    %s2807 = sld [smem:[#allocation8 + $0x5]]
    %v2808 = vstv %s2807
    %v2809 = vmul.f32 %v2792, %v2808
    %v2810 = vmul.f32 %v2794, %v2808
    %v2811 = vmul.f32 %v2796, %v2808
    %v2812 = vmul.f32 %v2798, %v2808
    %v2813 = vmul.f32 %v2800, %v2808
    %v2814 = vmul.f32 %v2802, %v2808
    %v2815 = vmul.f32 %v2804, %v2808
    %v2816 = vmul.f32 %v2806, %v2808
    %v2817 = vadd.f32 %v2697, %v2809
    %v2818 = vadd.f32 %v2698, %v2810
    %v2819 = vadd.f32 %v2699, %v2811
    %v2820 = vadd.f32 %v2700, %v2812
    %v2821 = vadd.f32 %v2701, %v2813
    %v2822 = vadd.f32 %v2702, %v2814
    %v2823 = vadd.f32 %v2703, %v2815
    %v2824 = vadd.f32 %v2704, %v2816
    %s2825 = sld [smem:[#allocation3 + $0x6]]
    %v2826 = vstv %s2825
    %v2827 = vsub.f32 %v2096, %v2826
    %v2828 = vsub.f32 %v2097, %v2826
    %v2829 = vsub.f32 %v2098, %v2826
    %v2830 = vsub.f32 %v2099, %v2826
    %v2831 = vsub.f32 %v2100, %v2826
    %v2832 = vsub.f32 %v2101, %v2826
    %v2833 = vsub.f32 %v2102, %v2826
    %v2834 = vsub.f32 %v2103, %v2826
    %v2835 = vmul.f32 %v2827, %v2827
    %v2836 = vmul.f32 %v2828, %v2828
    %v2837 = vmul.f32 %v2829, %v2829
    %v2838 = vmul.f32 %v2830, %v2830
    %v2839 = vmul.f32 %v2831, %v2831
    %v2840 = vmul.f32 %v2832, %v2832
    %v2841 = vmul.f32 %v2833, %v2833
    %v2842 = vmul.f32 %v2834, %v2834
    %s2843 = sld [smem:[#allocation5 + $0x6]]
    %v2844 = vstv %s2843
    %v2845 = vmul.f32 %v2835, %v2844
    %v2846 = vmul.f32 %v2836, %v2844
    %v2847 = vmul.f32 %v2837, %v2844
    %v2848 = vmul.f32 %v2838, %v2844
    %v2849 = vmul.f32 %v2839, %v2844
    %v2850 = vmul.f32 %v2840, %v2844
    %v2851 = vmul.f32 %v2841, %v2844
    %v2852 = vmul.f32 %v2842, %v2844
    %v2853 = vmul.f32 %v2845, 1.442695
    %v2854 = vpow.pop %v2853
    %v2855 = vmul.f32 %v2846, 1.442695
    %v2856 = vpow.pop %v2855
    %v2857 = vmul.f32 %v2847, 1.442695
    %v2858 = vpow.pop %v2857
    %v2859 = vmul.f32 %v2848, 1.442695
    %v2860 = vpow.pop %v2859
    %v2861 = vmul.f32 %v2849, 1.442695
    %v2862 = vpow.pop %v2861
    %v2863 = vmul.f32 %v2850, 1.442695
    %v2864 = vpow.pop %v2863
    %v2865 = vmul.f32 %v2851, 1.442695
    %v2866 = vpow.pop %v2865
    %v2867 = vmul.f32 %v2852, 1.442695
    %v2868 = vpow.pop %v2867
    %v2869 = vsel %vm2148, %v2854, 0.0
    %2870 = vadd.xlane.f32.xlu0 %v2869
    %v2871 = vpop.xlane.xlu0 %2870
    %v2872 = vsel %vm2148, %v2856, 0.0
    %2873 = vadd.xlane.f32.xlu0 %v2872
    %v2874 = vpop.xlane.xlu0 %2873
    %v2875 = vsel %vm2148, %v2858, 0.0
    %2876 = vadd.xlane.f32.xlu0 %v2875
    %v2877 = vpop.xlane.xlu0 %2876
    %v2878 = vsel %vm2148, %v2860, 0.0
    %2879 = vadd.xlane.f32.xlu0 %v2878
    %v2880 = vpop.xlane.xlu0 %2879
    %v2881 = vsel %vm2148, %v2862, 0.0
    %2882 = vadd.xlane.f32.xlu0 %v2881
    %v2883 = vpop.xlane.xlu0 %2882
    %v2884 = vsel %vm2148, %v2864, 0.0
    %2885 = vadd.xlane.f32.xlu0 %v2884
    %v2886 = vpop.xlane.xlu0 %2885
    %v2887 = vsel %vm2148, %v2866, 0.0
    %2888 = vadd.xlane.f32.xlu0 %v2887
    %v2889 = vpop.xlane.xlu0 %2888
    %v2890 = vsel %vm2148, %v2868, 0.0
    %2891 = vadd.xlane.f32.xlu0 %v2890
    %v2892 = vpop.xlane.xlu0 %2891
    %s2893 = sld [smem:[#allocation7 + $0x6]]
    %v2894 = vstv %s2893
    %v2895 = vmul.f32 %v2871, %v2894
    %v2896 = vmul.f32 %v2874, %v2894
    %v2897 = vmul.f32 %v2877, %v2894
    %v2898 = vmul.f32 %v2880, %v2894
    %v2899 = vmul.f32 %v2883, %v2894
    %v2900 = vmul.f32 %v2886, %v2894
    %v2901 = vmul.f32 %v2889, %v2894
    %v2902 = vmul.f32 %v2892, %v2894
    %v2903 = vmax.f32 %v2895, 0.0001
    %v2904 = vmax.f32 %v2896, 0.0001
    %v2905 = vmax.f32 %v2897, 0.0001
    %v2906 = vmax.f32 %v2898, 0.0001
    %v2907 = vmax.f32 %v2899, 0.0001
    %v2908 = vmax.f32 %v2900, 0.0001
    %v2909 = vmax.f32 %v2901, 0.0001
    %v2910 = vmax.f32 %v2902, 0.0001
    %v2911 = vlog2.pop %v2903
    %v2912 = vmul.f32 %v2911, 0.6931472
    %v2913 = vlog2.pop %v2904
    %v2914 = vmul.f32 %v2913, 0.6931472
    %v2915 = vlog2.pop %v2905
    %v2916 = vmul.f32 %v2915, 0.6931472
    %v2917 = vlog2.pop %v2906
    %v2918 = vmul.f32 %v2917, 0.6931472
    %v2919 = vlog2.pop %v2907
    %v2920 = vmul.f32 %v2919, 0.6931472
    %v2921 = vlog2.pop %v2908
    %v2922 = vmul.f32 %v2921, 0.6931472
    %v2923 = vlog2.pop %v2909
    %v2924 = vmul.f32 %v2923, 0.6931472
    %v2925 = vlog2.pop %v2910
    %v2926 = vmul.f32 %v2925, 0.6931472
    %s2927 = sld [smem:[#allocation8 + $0x6]]
    %v2928 = vstv %s2927
    %v2929 = vmul.f32 %v2912, %v2928
    %v2930 = vmul.f32 %v2914, %v2928
    %v2931 = vmul.f32 %v2916, %v2928
    %v2932 = vmul.f32 %v2918, %v2928
    %v2933 = vmul.f32 %v2920, %v2928
    %v2934 = vmul.f32 %v2922, %v2928
    %v2935 = vmul.f32 %v2924, %v2928
    %v2936 = vmul.f32 %v2926, %v2928
    %v2937 = vadd.f32 %v2817, %v2929
    %v2938 = vadd.f32 %v2818, %v2930
    %v2939 = vadd.f32 %v2819, %v2931
    %v2940 = vadd.f32 %v2820, %v2932
    %v2941 = vadd.f32 %v2821, %v2933
    %v2942 = vadd.f32 %v2822, %v2934
    %v2943 = vadd.f32 %v2823, %v2935
    %v2944 = vadd.f32 %v2824, %v2936
    %s2945 = sld [smem:[#allocation3 + $0x7]]
    %v2946 = vstv %s2945
    %v2947 = vsub.f32 %v2096, %v2946
    %v2948 = vsub.f32 %v2097, %v2946
    %v2949 = vsub.f32 %v2098, %v2946
    %v2950 = vsub.f32 %v2099, %v2946
    %v2951 = vsub.f32 %v2100, %v2946
    %v2952 = vsub.f32 %v2101, %v2946
    %v2953 = vsub.f32 %v2102, %v2946
    %v2954 = vsub.f32 %v2103, %v2946
    %v2955 = vmul.f32 %v2947, %v2947
    %v2956 = vmul.f32 %v2948, %v2948
    %v2957 = vmul.f32 %v2949, %v2949
    %v2958 = vmul.f32 %v2950, %v2950
    %v2959 = vmul.f32 %v2951, %v2951
    %v2960 = vmul.f32 %v2952, %v2952
    %v2961 = vmul.f32 %v2953, %v2953
    %v2962 = vmul.f32 %v2954, %v2954
    %s2963 = sld [smem:[#allocation5 + $0x7]]
    %v2964 = vstv %s2963
    %v2965 = vmul.f32 %v2955, %v2964
    %v2966 = vmul.f32 %v2956, %v2964
    %v2967 = vmul.f32 %v2957, %v2964
    %v2968 = vmul.f32 %v2958, %v2964
    %v2969 = vmul.f32 %v2959, %v2964
    %v2970 = vmul.f32 %v2960, %v2964
    %v2971 = vmul.f32 %v2961, %v2964
    %v2972 = vmul.f32 %v2962, %v2964
    %v2973 = vmul.f32 %v2965, 1.442695
    %v2974 = vpow.pop %v2973
    %v2975 = vmul.f32 %v2966, 1.442695
    %v2976 = vpow.pop %v2975
    %v2977 = vmul.f32 %v2967, 1.442695
    %v2978 = vpow.pop %v2977
    %v2979 = vmul.f32 %v2968, 1.442695
    %v2980 = vpow.pop %v2979
    %v2981 = vmul.f32 %v2969, 1.442695
    %v2982 = vpow.pop %v2981
    %v2983 = vmul.f32 %v2970, 1.442695
    %v2984 = vpow.pop %v2983
    %v2985 = vmul.f32 %v2971, 1.442695
    %v2986 = vpow.pop %v2985
    %v2987 = vmul.f32 %v2972, 1.442695
    %v2988 = vpow.pop %v2987
    %v2989 = vsel %vm2148, %v2974, 0.0
    %2990 = vadd.xlane.f32.xlu0 %v2989
    %v2991 = vpop.xlane.xlu0 %2990
    %v2992 = vsel %vm2148, %v2976, 0.0
    %2993 = vadd.xlane.f32.xlu0 %v2992
    %v2994 = vpop.xlane.xlu0 %2993
    %v2995 = vsel %vm2148, %v2978, 0.0
    %2996 = vadd.xlane.f32.xlu0 %v2995
    %v2997 = vpop.xlane.xlu0 %2996
    %v2998 = vsel %vm2148, %v2980, 0.0
    %2999 = vadd.xlane.f32.xlu0 %v2998
    %v3000 = vpop.xlane.xlu0 %2999
    %v3001 = vsel %vm2148, %v2982, 0.0
    %3002 = vadd.xlane.f32.xlu0 %v3001
    %v3003 = vpop.xlane.xlu0 %3002
    %v3004 = vsel %vm2148, %v2984, 0.0
    %3005 = vadd.xlane.f32.xlu0 %v3004
    %v3006 = vpop.xlane.xlu0 %3005
    %v3007 = vsel %vm2148, %v2986, 0.0
    %3008 = vadd.xlane.f32.xlu0 %v3007
    %v3009 = vpop.xlane.xlu0 %3008
    %v3010 = vsel %vm2148, %v2988, 0.0
    %3011 = vadd.xlane.f32.xlu0 %v3010
    %v3012 = vpop.xlane.xlu0 %3011
    %s3013 = sld [smem:[#allocation7 + $0x7]]
    %v3014 = vstv %s3013
    %v3015 = vmul.f32 %v2991, %v3014
    %v3016 = vmul.f32 %v2994, %v3014
    %v3017 = vmul.f32 %v2997, %v3014
    %v3018 = vmul.f32 %v3000, %v3014
    %v3019 = vmul.f32 %v3003, %v3014
    %v3020 = vmul.f32 %v3006, %v3014
    %v3021 = vmul.f32 %v3009, %v3014
    %v3022 = vmul.f32 %v3012, %v3014
    %v3023 = vmax.f32 %v3015, 0.0001
    %v3024 = vmax.f32 %v3016, 0.0001
    %v3025 = vmax.f32 %v3017, 0.0001
    %v3026 = vmax.f32 %v3018, 0.0001
    %v3027 = vmax.f32 %v3019, 0.0001
    %v3028 = vmax.f32 %v3020, 0.0001
    %v3029 = vmax.f32 %v3021, 0.0001
    %v3030 = vmax.f32 %v3022, 0.0001
    %v3031 = vlog2.pop %v3023
    %v3032 = vmul.f32 %v3031, 0.6931472
    %v3033 = vlog2.pop %v3024
    %v3034 = vmul.f32 %v3033, 0.6931472
    %v3035 = vlog2.pop %v3025
    %v3036 = vmul.f32 %v3035, 0.6931472
    %v3037 = vlog2.pop %v3026
    %v3038 = vmul.f32 %v3037, 0.6931472
    %v3039 = vlog2.pop %v3027
    %v3040 = vmul.f32 %v3039, 0.6931472
    %v3041 = vlog2.pop %v3028
    %v3042 = vmul.f32 %v3041, 0.6931472
    %v3043 = vlog2.pop %v3029
    %v3044 = vmul.f32 %v3043, 0.6931472
    %v3045 = vlog2.pop %v3030
    %v3046 = vmul.f32 %v3045, 0.6931472
    %s3047 = sld [smem:[#allocation8 + $0x7]]
    %v3048 = vstv %s3047
    %v3049 = vmul.f32 %v3032, %v3048
    %v3050 = vmul.f32 %v3034, %v3048
    %v3051 = vmul.f32 %v3036, %v3048
    %v3052 = vmul.f32 %v3038, %v3048
    %v3053 = vmul.f32 %v3040, %v3048
    %v3054 = vmul.f32 %v3042, %v3048
    %v3055 = vmul.f32 %v3044, %v3048
    %v3056 = vmul.f32 %v3046, %v3048
    %v3057 = vadd.f32 %v2937, %v3049
    %v3058 = vadd.f32 %v2938, %v3050
    %v3059 = vadd.f32 %v2939, %v3051
    %v3060 = vadd.f32 %v2940, %v3052
    %v3061 = vadd.f32 %v2941, %v3053
    %v3062 = vadd.f32 %v2942, %v3054
    %v3063 = vadd.f32 %v2943, %v3055
    %v3064 = vadd.f32 %v2944, %v3056
    %s3065 = sld [smem:[#allocation3 + $0x8]]
    %v3066 = vstv %s3065
    %v3067 = vsub.f32 %v2096, %v3066
    %v3068 = vsub.f32 %v2097, %v3066
    %v3069 = vsub.f32 %v2098, %v3066
    %v3070 = vsub.f32 %v2099, %v3066
    %v3071 = vsub.f32 %v2100, %v3066
    %v3072 = vsub.f32 %v2101, %v3066
    %v3073 = vsub.f32 %v2102, %v3066
    %v3074 = vsub.f32 %v2103, %v3066
    %v3075 = vmul.f32 %v3067, %v3067
    %v3076 = vmul.f32 %v3068, %v3068
    %v3077 = vmul.f32 %v3069, %v3069
    %v3078 = vmul.f32 %v3070, %v3070
    %v3079 = vmul.f32 %v3071, %v3071
    %v3080 = vmul.f32 %v3072, %v3072
    %v3081 = vmul.f32 %v3073, %v3073
    %v3082 = vmul.f32 %v3074, %v3074
    %s3083 = sld [smem:[#allocation5 + $0x8]]
    %v3084 = vstv %s3083
    %v3085 = vmul.f32 %v3075, %v3084
    %v3086 = vmul.f32 %v3076, %v3084
    %v3087 = vmul.f32 %v3077, %v3084
    %v3088 = vmul.f32 %v3078, %v3084
    %v3089 = vmul.f32 %v3079, %v3084
    %v3090 = vmul.f32 %v3080, %v3084
    %v3091 = vmul.f32 %v3081, %v3084
    %v3092 = vmul.f32 %v3082, %v3084
    %v3093 = vmul.f32 %v3085, 1.442695
    %v3094 = vpow.pop %v3093
    %v3095 = vmul.f32 %v3086, 1.442695
    %v3096 = vpow.pop %v3095
    %v3097 = vmul.f32 %v3087, 1.442695
    %v3098 = vpow.pop %v3097
    %v3099 = vmul.f32 %v3088, 1.442695
    %v3100 = vpow.pop %v3099
    %v3101 = vmul.f32 %v3089, 1.442695
    %v3102 = vpow.pop %v3101
    %v3103 = vmul.f32 %v3090, 1.442695
    %v3104 = vpow.pop %v3103
    %v3105 = vmul.f32 %v3091, 1.442695
    %v3106 = vpow.pop %v3105
    %v3107 = vmul.f32 %v3092, 1.442695
    %v3108 = vpow.pop %v3107
    %v3109 = vsel %vm2148, %v3094, 0.0
    %3110 = vadd.xlane.f32.xlu0 %v3109
    %v3111 = vpop.xlane.xlu0 %3110
    %v3112 = vsel %vm2148, %v3096, 0.0
    %3113 = vadd.xlane.f32.xlu0 %v3112
    %v3114 = vpop.xlane.xlu0 %3113
    %v3115 = vsel %vm2148, %v3098, 0.0
    %3116 = vadd.xlane.f32.xlu0 %v3115
    %v3117 = vpop.xlane.xlu0 %3116
    %v3118 = vsel %vm2148, %v3100, 0.0
    %3119 = vadd.xlane.f32.xlu0 %v3118
    %v3120 = vpop.xlane.xlu0 %3119
    %v3121 = vsel %vm2148, %v3102, 0.0
    %3122 = vadd.xlane.f32.xlu0 %v3121
    %v3123 = vpop.xlane.xlu0 %3122
    %v3124 = vsel %vm2148, %v3104, 0.0
    %3125 = vadd.xlane.f32.xlu0 %v3124
    %v3126 = vpop.xlane.xlu0 %3125
    %v3127 = vsel %vm2148, %v3106, 0.0
    %3128 = vadd.xlane.f32.xlu0 %v3127
    %v3129 = vpop.xlane.xlu0 %3128
    %v3130 = vsel %vm2148, %v3108, 0.0
    %3131 = vadd.xlane.f32.xlu0 %v3130
    %v3132 = vpop.xlane.xlu0 %3131
    %s3133 = sld [smem:[#allocation7 + $0x8]]
    %v3134 = vstv %s3133
    %v3135 = vmul.f32 %v3111, %v3134
    %v3136 = vmul.f32 %v3114, %v3134
    %v3137 = vmul.f32 %v3117, %v3134
    %v3138 = vmul.f32 %v3120, %v3134
    %v3139 = vmul.f32 %v3123, %v3134
    %v3140 = vmul.f32 %v3126, %v3134
    %v3141 = vmul.f32 %v3129, %v3134
    %v3142 = vmul.f32 %v3132, %v3134
    %v3143 = vmax.f32 %v3135, 0.0001
    %v3144 = vmax.f32 %v3136, 0.0001
    %v3145 = vmax.f32 %v3137, 0.0001
    %v3146 = vmax.f32 %v3138, 0.0001
    %v3147 = vmax.f32 %v3139, 0.0001
    %v3148 = vmax.f32 %v3140, 0.0001
    %v3149 = vmax.f32 %v3141, 0.0001
    %v3150 = vmax.f32 %v3142, 0.0001
    %v3151 = vlog2.pop %v3143
    %v3152 = vmul.f32 %v3151, 0.6931472
    %v3153 = vlog2.pop %v3144
    %v3154 = vmul.f32 %v3153, 0.6931472
    %v3155 = vlog2.pop %v3145
    %v3156 = vmul.f32 %v3155, 0.6931472
    %v3157 = vlog2.pop %v3146
    %v3158 = vmul.f32 %v3157, 0.6931472
    %v3159 = vlog2.pop %v3147
    %v3160 = vmul.f32 %v3159, 0.6931472
    %v3161 = vlog2.pop %v3148
    %v3162 = vmul.f32 %v3161, 0.6931472
    %v3163 = vlog2.pop %v3149
    %v3164 = vmul.f32 %v3163, 0.6931472
    %v3165 = vlog2.pop %v3150
    %v3166 = vmul.f32 %v3165, 0.6931472
    %s3167 = sld [smem:[#allocation8 + $0x8]]
    %v3168 = vstv %s3167
    %v3169 = vmul.f32 %v3152, %v3168
    %v3170 = vmul.f32 %v3154, %v3168
    %v3171 = vmul.f32 %v3156, %v3168
    %v3172 = vmul.f32 %v3158, %v3168
    %v3173 = vmul.f32 %v3160, %v3168
    %v3174 = vmul.f32 %v3162, %v3168
    %v3175 = vmul.f32 %v3164, %v3168
    %v3176 = vmul.f32 %v3166, %v3168
    %v3177 = vadd.f32 %v3057, %v3169
    %v3178 = vadd.f32 %v3058, %v3170
    %v3179 = vadd.f32 %v3059, %v3171
    %v3180 = vadd.f32 %v3060, %v3172
    %v3181 = vadd.f32 %v3061, %v3173
    %v3182 = vadd.f32 %v3062, %v3174
    %v3183 = vadd.f32 %v3063, %v3175
    %v3184 = vadd.f32 %v3064, %v3176
    %s3185 = sld [smem:[#allocation3 + $0x9]]
    %v3186 = vstv %s3185
    %v3187 = vsub.f32 %v2096, %v3186
    %v3188 = vsub.f32 %v2097, %v3186
    %v3189 = vsub.f32 %v2098, %v3186
    %v3190 = vsub.f32 %v2099, %v3186
    %v3191 = vsub.f32 %v2100, %v3186
    %v3192 = vsub.f32 %v2101, %v3186
    %v3193 = vsub.f32 %v2102, %v3186
    %v3194 = vsub.f32 %v2103, %v3186
    %v3195 = vmul.f32 %v3187, %v3187
    %v3196 = vmul.f32 %v3188, %v3188
    %v3197 = vmul.f32 %v3189, %v3189
    %v3198 = vmul.f32 %v3190, %v3190
    %v3199 = vmul.f32 %v3191, %v3191
    %v3200 = vmul.f32 %v3192, %v3192
    %v3201 = vmul.f32 %v3193, %v3193
    %v3202 = vmul.f32 %v3194, %v3194
    %s3203 = sld [smem:[#allocation5 + $0x9]]
    %v3204 = vstv %s3203
    %v3205 = vmul.f32 %v3195, %v3204
    %v3206 = vmul.f32 %v3196, %v3204
    %v3207 = vmul.f32 %v3197, %v3204
    %v3208 = vmul.f32 %v3198, %v3204
    %v3209 = vmul.f32 %v3199, %v3204
    %v3210 = vmul.f32 %v3200, %v3204
    %v3211 = vmul.f32 %v3201, %v3204
    %v3212 = vmul.f32 %v3202, %v3204
    %v3213 = vmul.f32 %v3205, 1.442695
    %v3214 = vpow.pop %v3213
    %v3215 = vmul.f32 %v3206, 1.442695
    %v3216 = vpow.pop %v3215
    %v3217 = vmul.f32 %v3207, 1.442695
    %v3218 = vpow.pop %v3217
    %v3219 = vmul.f32 %v3208, 1.442695
    %v3220 = vpow.pop %v3219
    %v3221 = vmul.f32 %v3209, 1.442695
    %v3222 = vpow.pop %v3221
    %v3223 = vmul.f32 %v3210, 1.442695
    %v3224 = vpow.pop %v3223
    %v3225 = vmul.f32 %v3211, 1.442695
    %v3226 = vpow.pop %v3225
    %v3227 = vmul.f32 %v3212, 1.442695
    %v3228 = vpow.pop %v3227
    %v3229 = vsel %vm2148, %v3214, 0.0
    %3230 = vadd.xlane.f32.xlu0 %v3229
    %v3231 = vpop.xlane.xlu0 %3230
    %v3232 = vsel %vm2148, %v3216, 0.0
    %3233 = vadd.xlane.f32.xlu0 %v3232
    %v3234 = vpop.xlane.xlu0 %3233
    %v3235 = vsel %vm2148, %v3218, 0.0
    %3236 = vadd.xlane.f32.xlu0 %v3235
    %v3237 = vpop.xlane.xlu0 %3236
    %v3238 = vsel %vm2148, %v3220, 0.0
    %3239 = vadd.xlane.f32.xlu0 %v3238
    %v3240 = vpop.xlane.xlu0 %3239
    %v3241 = vsel %vm2148, %v3222, 0.0
    %3242 = vadd.xlane.f32.xlu0 %v3241
    %v3243 = vpop.xlane.xlu0 %3242
    %v3244 = vsel %vm2148, %v3224, 0.0
    %3245 = vadd.xlane.f32.xlu0 %v3244
    %v3246 = vpop.xlane.xlu0 %3245
    %v3247 = vsel %vm2148, %v3226, 0.0
    %3248 = vadd.xlane.f32.xlu0 %v3247
    %v3249 = vpop.xlane.xlu0 %3248
    %v3250 = vsel %vm2148, %v3228, 0.0
    %3251 = vadd.xlane.f32.xlu0 %v3250
    %v3252 = vpop.xlane.xlu0 %3251
    %s3253 = sld [smem:[#allocation7 + $0x9]]
    %v3254 = vstv %s3253
    %v3255 = vmul.f32 %v3231, %v3254
    %v3256 = vmul.f32 %v3234, %v3254
    %v3257 = vmul.f32 %v3237, %v3254
    %v3258 = vmul.f32 %v3240, %v3254
    %v3259 = vmul.f32 %v3243, %v3254
    %v3260 = vmul.f32 %v3246, %v3254
    %v3261 = vmul.f32 %v3249, %v3254
    %v3262 = vmul.f32 %v3252, %v3254
    %v3263 = vmax.f32 %v3255, 0.0001
    %v3264 = vmax.f32 %v3256, 0.0001
    %v3265 = vmax.f32 %v3257, 0.0001
    %v3266 = vmax.f32 %v3258, 0.0001
    %v3267 = vmax.f32 %v3259, 0.0001
    %v3268 = vmax.f32 %v3260, 0.0001
    %v3269 = vmax.f32 %v3261, 0.0001
    %v3270 = vmax.f32 %v3262, 0.0001
    %v3271 = vlog2.pop %v3263
    %v3272 = vmul.f32 %v3271, 0.6931472
    %v3273 = vlog2.pop %v3264
    %v3274 = vmul.f32 %v3273, 0.6931472
    %v3275 = vlog2.pop %v3265
    %v3276 = vmul.f32 %v3275, 0.6931472
    %v3277 = vlog2.pop %v3266
    %v3278 = vmul.f32 %v3277, 0.6931472
    %v3279 = vlog2.pop %v3267
    %v3280 = vmul.f32 %v3279, 0.6931472
    %v3281 = vlog2.pop %v3268
    %v3282 = vmul.f32 %v3281, 0.6931472
    %v3283 = vlog2.pop %v3269
    %v3284 = vmul.f32 %v3283, 0.6931472
    %v3285 = vlog2.pop %v3270
    %v3286 = vmul.f32 %v3285, 0.6931472
    %s3287 = sld [smem:[#allocation8 + $0x9]]
    %v3288 = vstv %s3287
    %v3289 = vmul.f32 %v3272, %v3288
    %v3290 = vmul.f32 %v3274, %v3288
    %v3291 = vmul.f32 %v3276, %v3288
    %v3292 = vmul.f32 %v3278, %v3288
    %v3293 = vmul.f32 %v3280, %v3288
    %v3294 = vmul.f32 %v3282, %v3288
    %v3295 = vmul.f32 %v3284, %v3288
    %v3296 = vmul.f32 %v3286, %v3288
    %v3297 = vadd.f32 %v3177, %v3289
    %v3298 = vadd.f32 %v3178, %v3290
    %v3299 = vadd.f32 %v3179, %v3291
    %v3300 = vadd.f32 %v3180, %v3292
    %v3301 = vadd.f32 %v3181, %v3293
    %v3302 = vadd.f32 %v3182, %v3294
    %v3303 = vadd.f32 %v3183, %v3295
    %v3304 = vadd.f32 %v3184, %v3296
    %s3305 = sld [smem:[#allocation3 + $0xa]]
    %v3306 = vstv %s3305
    %v3307 = vsub.f32 %v2096, %v3306
    %v3308 = vsub.f32 %v2097, %v3306
    %v3309 = vsub.f32 %v2098, %v3306
    %v3310 = vsub.f32 %v2099, %v3306
    %v3311 = vsub.f32 %v2100, %v3306
    %v3312 = vsub.f32 %v2101, %v3306
    %v3313 = vsub.f32 %v2102, %v3306
    %v3314 = vsub.f32 %v2103, %v3306
    %v3315 = vmul.f32 %v3307, %v3307
    %v3316 = vmul.f32 %v3308, %v3308
    %v3317 = vmul.f32 %v3309, %v3309
    %v3318 = vmul.f32 %v3310, %v3310
    %v3319 = vmul.f32 %v3311, %v3311
    %v3320 = vmul.f32 %v3312, %v3312
    %v3321 = vmul.f32 %v3313, %v3313
    %v3322 = vmul.f32 %v3314, %v3314
    %s3323 = sld [smem:[#allocation5 + $0xa]]
    %v3324 = vstv %s3323
    %v3325 = vmul.f32 %v3315, %v3324
    %v3326 = vmul.f32 %v3316, %v3324
    %v3327 = vmul.f32 %v3317, %v3324
    %v3328 = vmul.f32 %v3318, %v3324
    %v3329 = vmul.f32 %v3319, %v3324
    %v3330 = vmul.f32 %v3320, %v3324
    %v3331 = vmul.f32 %v3321, %v3324
    %v3332 = vmul.f32 %v3322, %v3324
    %v3333 = vmul.f32 %v3325, 1.442695
    %v3334 = vpow.pop %v3333
    %v3335 = vmul.f32 %v3326, 1.442695
    %v3336 = vpow.pop %v3335
    %v3337 = vmul.f32 %v3327, 1.442695
    %v3338 = vpow.pop %v3337
    %v3339 = vmul.f32 %v3328, 1.442695
    %v3340 = vpow.pop %v3339
    %v3341 = vmul.f32 %v3329, 1.442695
    %v3342 = vpow.pop %v3341
    %v3343 = vmul.f32 %v3330, 1.442695
    %v3344 = vpow.pop %v3343
    %v3345 = vmul.f32 %v3331, 1.442695
    %v3346 = vpow.pop %v3345
    %v3347 = vmul.f32 %v3332, 1.442695
    %v3348 = vpow.pop %v3347
    %v3349 = vsel %vm2148, %v3334, 0.0
    %3350 = vadd.xlane.f32.xlu0 %v3349
    %v3351 = vpop.xlane.xlu0 %3350
    %v3352 = vsel %vm2148, %v3336, 0.0
    %3353 = vadd.xlane.f32.xlu0 %v3352
    %v3354 = vpop.xlane.xlu0 %3353
    %v3355 = vsel %vm2148, %v3338, 0.0
    %3356 = vadd.xlane.f32.xlu0 %v3355
    %v3357 = vpop.xlane.xlu0 %3356
    %v3358 = vsel %vm2148, %v3340, 0.0
    %3359 = vadd.xlane.f32.xlu0 %v3358
    %v3360 = vpop.xlane.xlu0 %3359
    %v3361 = vsel %vm2148, %v3342, 0.0
    %3362 = vadd.xlane.f32.xlu0 %v3361
    %v3363 = vpop.xlane.xlu0 %3362
    %v3364 = vsel %vm2148, %v3344, 0.0
    %3365 = vadd.xlane.f32.xlu0 %v3364
    %v3366 = vpop.xlane.xlu0 %3365
    %v3367 = vsel %vm2148, %v3346, 0.0
    %3368 = vadd.xlane.f32.xlu0 %v3367
    %v3369 = vpop.xlane.xlu0 %3368
    %v3370 = vsel %vm2148, %v3348, 0.0
    %3371 = vadd.xlane.f32.xlu0 %v3370
    %v3372 = vpop.xlane.xlu0 %3371
    %s3373 = sld [smem:[#allocation7 + $0xa]]
    %v3374 = vstv %s3373
    %v3375 = vmul.f32 %v3351, %v3374
    %v3376 = vmul.f32 %v3354, %v3374
    %v3377 = vmul.f32 %v3357, %v3374
    %v3378 = vmul.f32 %v3360, %v3374
    %v3379 = vmul.f32 %v3363, %v3374
    %v3380 = vmul.f32 %v3366, %v3374
    %v3381 = vmul.f32 %v3369, %v3374
    %v3382 = vmul.f32 %v3372, %v3374
    %v3383 = vmax.f32 %v3375, 0.0001
    %v3384 = vmax.f32 %v3376, 0.0001
    %v3385 = vmax.f32 %v3377, 0.0001
    %v3386 = vmax.f32 %v3378, 0.0001
    %v3387 = vmax.f32 %v3379, 0.0001
    %v3388 = vmax.f32 %v3380, 0.0001
    %v3389 = vmax.f32 %v3381, 0.0001
    %v3390 = vmax.f32 %v3382, 0.0001
    %v3391 = vlog2.pop %v3383
    %v3392 = vmul.f32 %v3391, 0.6931472
    %v3393 = vlog2.pop %v3384
    %v3394 = vmul.f32 %v3393, 0.6931472
    %v3395 = vlog2.pop %v3385
    %v3396 = vmul.f32 %v3395, 0.6931472
    %v3397 = vlog2.pop %v3386
    %v3398 = vmul.f32 %v3397, 0.6931472
    %v3399 = vlog2.pop %v3387
    %v3400 = vmul.f32 %v3399, 0.6931472
    %v3401 = vlog2.pop %v3388
    %v3402 = vmul.f32 %v3401, 0.6931472
    %v3403 = vlog2.pop %v3389
    %v3404 = vmul.f32 %v3403, 0.6931472
    %v3405 = vlog2.pop %v3390
    %v3406 = vmul.f32 %v3405, 0.6931472
    %s3407 = sld [smem:[#allocation8 + $0xa]]
    %v3408 = vstv %s3407
    %v3409 = vmul.f32 %v3392, %v3408
    %v3410 = vmul.f32 %v3394, %v3408
    %v3411 = vmul.f32 %v3396, %v3408
    %v3412 = vmul.f32 %v3398, %v3408
    %v3413 = vmul.f32 %v3400, %v3408
    %v3414 = vmul.f32 %v3402, %v3408
    %v3415 = vmul.f32 %v3404, %v3408
    %v3416 = vmul.f32 %v3406, %v3408
    %v3417 = vadd.f32 %v3297, %v3409
    %v3418 = vadd.f32 %v3298, %v3410
    %v3419 = vadd.f32 %v3299, %v3411
    %v3420 = vadd.f32 %v3300, %v3412
    %v3421 = vadd.f32 %v3301, %v3413
    %v3422 = vadd.f32 %v3302, %v3414
    %v3423 = vadd.f32 %v3303, %v3415
    %v3424 = vadd.f32 %v3304, %v3416
    %v3425 = vld [vmem:[%s2] sm:$0xff]
    %v3427 = vlaneseq
    %v3428 = vshrl.u32 %v3427, 7
    %v3429 = vsub.s32 0, %v3428
    %v3430 = vrot.slane %v3425, %v3429
    %3432 = vbcast.lane.b32.xlu0 %v3430, 256
    %v3433 = vpop.permute.xlu0 %3432
    %v3434 = vlaneseq
    %v3435 = vshrl.u32 %v3434, 7
    %v3436 = vsub.s32 1, %v3435
    %v3437 = vrot.slane %v3425, %v3436
    %3439 = vbcast.lane.b32.xlu0 %v3437, 256
    %v3440 = vpop.permute.xlu0 %3439
    %v3441 = vlaneseq
    %v3442 = vshrl.u32 %v3441, 7
    %v3443 = vsub.s32 2, %v3442
    %v3444 = vrot.slane %v3425, %v3443
    %3446 = vbcast.lane.b32.xlu0 %v3444, 256
    %v3447 = vpop.permute.xlu0 %3446
    %v3448 = vlaneseq
    %v3449 = vshrl.u32 %v3448, 7
    %v3450 = vsub.s32 3, %v3449
    %v3451 = vrot.slane %v3425, %v3450
    %3453 = vbcast.lane.b32.xlu0 %v3451, 256
    %v3454 = vpop.permute.xlu0 %3453
    %v3455 = vlaneseq
    %v3456 = vshrl.u32 %v3455, 7
    %v3457 = vsub.s32 4, %v3456
    %v3458 = vrot.slane %v3425, %v3457
    %3460 = vbcast.lane.b32.xlu0 %v3458, 256
    %v3461 = vpop.permute.xlu0 %3460
    %v3462 = vlaneseq
    %v3463 = vshrl.u32 %v3462, 7
    %v3464 = vsub.s32 5, %v3463
    %v3465 = vrot.slane %v3425, %v3464
    %3467 = vbcast.lane.b32.xlu0 %v3465, 256
    %v3468 = vpop.permute.xlu0 %3467
    %v3469 = vlaneseq
    %v3470 = vshrl.u32 %v3469, 7
    %v3471 = vsub.s32 6, %v3470
    %v3472 = vrot.slane %v3425, %v3471
    %3474 = vbcast.lane.b32.xlu0 %v3472, 256
    %v3475 = vpop.permute.xlu0 %3474
    %v3476 = vlaneseq
    %v3477 = vshrl.u32 %v3476, 7
    %v3478 = vsub.s32 7, %v3477
    %v3479 = vrot.slane %v3425, %v3478
    %3481 = vbcast.lane.b32.xlu0 %v3479, 256
    %v3482 = vpop.permute.xlu0 %3481
    %v3491 = vmul.f32 %v3417, %v3433
    %v3492 = vmul.f32 %v3418, %v3440
    %v3493 = vmul.f32 %v3419, %v3447
    %v3494 = vmul.f32 %v3420, %v3454
    %v3495 = vmul.f32 %v3421, %v3461
    %v3496 = vmul.f32 %v3422, %v3468
    %v3497 = vmul.f32 %v3423, %v3475
    %v3498 = vmul.f32 %v3424, %v3482
    %s3499 = sld [smem:[#allocation2]]
    %v3500 = vstv %s3499
    %3509 = vset.pattern.permute.xlu0 0
    %3510 = vperm.xlu0 %3509, %v3491
    %v3511 = vpop.permute.xlu0 %3510
    %3512 = vset.pattern.permute.xlu0 0
    %3513 = vperm.xlu0 %3512, %v3492
    %v3514 = vpop.permute.xlu0 %3513
    %3515 = vset.pattern.permute.xlu0 0
    %3516 = vperm.xlu0 %3515, %v3493
    %v3517 = vpop.permute.xlu0 %3516
    %3518 = vset.pattern.permute.xlu0 0
    %3519 = vperm.xlu0 %3518, %v3494
    %v3520 = vpop.permute.xlu0 %3519
    %3521 = vset.pattern.permute.xlu0 0
    %3522 = vperm.xlu0 %3521, %v3495
    %v3523 = vpop.permute.xlu0 %3522
    %3524 = vset.pattern.permute.xlu0 0
    %3525 = vperm.xlu0 %3524, %v3496
    %v3526 = vpop.permute.xlu0 %3525
    %3527 = vset.pattern.permute.xlu0 0
    %3528 = vperm.xlu0 %3527, %v3497
    %v3529 = vpop.permute.xlu0 %3528
    %3530 = vset.pattern.permute.xlu0 0
    %3531 = vperm.xlu0 %3530, %v3498
    %v3532 = vpop.permute.xlu0 %3531
    %v3533 = vlaneseq
    %v3534 = vand.u32 %v3533, 127
    %v3535 = vlaneseq
    %v3536 = vshrl.u32 %v3535, 7
    %v3537 = vsub.s32 %v3534, %v3536
    %v3538 = vrot.slane %v3511, %v3537
    %v3539 = vlaneseq
    %v3540 = vshrl.u32 %v3539, 7
    %v3541 = vsub.s32 %v3534, %v3540
    %v3542 = vrot.slane %v3514, %v3541
    %v3543 = vlaneseq
    %v3544 = vshrl.u32 %v3543, 7
    %v3545 = vsub.s32 %v3534, %v3544
    %v3546 = vrot.slane %v3517, %v3545
    %v3547 = vlaneseq
    %v3548 = vshrl.u32 %v3547, 7
    %v3549 = vsub.s32 %v3534, %v3548
    %v3550 = vrot.slane %v3520, %v3549
    %v3551 = vlaneseq
    %v3552 = vshrl.u32 %v3551, 7
    %v3553 = vsub.s32 %v3534, %v3552
    %v3554 = vrot.slane %v3523, %v3553
    %v3555 = vlaneseq
    %v3556 = vshrl.u32 %v3555, 7
    %v3557 = vsub.s32 %v3534, %v3556
    %v3558 = vrot.slane %v3526, %v3557
    %v3559 = vlaneseq
    %v3560 = vshrl.u32 %v3559, 7
    %v3561 = vsub.s32 %v3534, %v3560
    %v3562 = vrot.slane %v3529, %v3561
    %v3563 = vlaneseq
    %v3564 = vshrl.u32 %v3563, 7
    %v3565 = vsub.s32 %v3534, %v3564
    %v3566 = vrot.slane %v3532, %v3565
    %vm3567 = vcmask 1041409
    %v3568 = vsel %vm3567, %v3542, %v3538
    %vm3569 = vcmask 1042434
    %v3570 = vsel %vm3569, %v3546, %v3568
    %vm3571 = vcmask 1043459
    %v3572 = vsel %vm3571, %v3550, %v3570
    %vm3573 = vcmask 1044484
    %v3574 = vsel %vm3573, %v3554, %v3572
    %vm3575 = vcmask 1045509
    %v3576 = vsel %vm3575, %v3558, %v3574
    %vm3577 = vcmask 1046534
    %v3578 = vsel %vm3577, %v3562, %v3576
    %vm3579 = vcmask 1047559
    %v3580 = vsel %vm3579, %v3566, %v3578
    %vm3581 = vcmask 64512
    %v3583 = vsel %vm3581, 1.0, 0
    %v3585 = vsel %vm3581, %v3580, 0
    %3587 = vmatprep.subr.mxu0 0.0
    %3588 = vmatpush1.xpose.msra.mxu0 %v3585
    %3589 = vmatprep.subr.mxu0 0.0
    %3590 = vmatpush1.xpose.msra.mxu0 0.0
    %3591 = vmatprep.subr.mxu0 0.0
    %3592 = vmatpush1.xpose.msra.mxu0 0.0
    %3593 = vmatprep.subr.mxu0 0.0
    %3594 = vmatpush1.xpose.msra.mxu0 0.0
    %3595 = vmatprep.subr.mxu0 0.0
    %3596 = vmatpush1.xpose.msra.mxu0 0.0
    %3597 = vmatprep.subr.mxu0 0.0
    %3598 = vmatpush1.xpose.msra.mxu0 0.0
    %3599 = vmatprep.subr.mxu0 0.0
    %3600 = vmatpush1.xpose.msra.mxu0 0.0
    %3601 = vmatprep.subr.mxu0 0.0
    %3602 = vmatpush1.xpose.msra.mxu0 0.0
    %3603 = vmatprep.subr.mxu0 0.0
    %3604 = vmatpush1.xpose.msra.mxu0 0.0
    %3605 = vmatprep.subr.mxu0 0.0
    %3606 = vmatpush1.xpose.msra.mxu0 0.0
    %3607 = vmatprep.subr.mxu0 0.0
    %3608 = vmatpush1.xpose.msra.mxu0 0.0
    %3609 = vmatprep.subr.mxu0 0.0
    %3610 = vmatpush1.xpose.msra.mxu0 0.0
    %3611 = vmatprep.subr.mxu0 0.0
    %3612 = vmatpush1.xpose.msra.mxu0 0.0
    %3613 = vmatprep.subr.mxu0 0.0
    %3614 = vmatpush1.xpose.msra.mxu0 0.0
    %3615 = vmatprep.subr.mxu0 0.0
    %3616 = vmatpush1.xpose.msra.mxu0 0.0
    %3617 = vmatprep.subr.mxu0 0.0
    %3618 = vmatpush1.xpose.msra.mxu0 0.0
    %3619 = vmatprep.subr.mxu0 0.0
    %3620 = vmatpush1.xpose.msra.mxu0 0.0
    %3621 = vmatprep.subr.mxu0 0.0
    %3622 = vmatpush1.xpose.msra.mxu0 0.0
    %3623 = vmatprep.subr.mxu0 0.0
    %3624 = vmatpush1.xpose.msra.mxu0 0.0
    %3625 = vmatprep.subr.mxu0 0.0
    %3626 = vmatpush1.xpose.msra.mxu0 0.0
    %3627 = vmatprep.subr.mxu0 0.0
    %3628 = vmatpush1.xpose.msra.mxu0 0.0
    %3629 = vmatprep.subr.mxu0 0.0
    %3630 = vmatpush1.xpose.msra.mxu0 0.0
    %3631 = vmatprep.subr.mxu0 0.0
    %3632 = vmatpush1.xpose.msra.mxu0 0.0
    %3633 = vmatprep.subr.mxu0 0.0
    %3634 = vmatpush1.xpose.msra.mxu0 0.0
    %3635 = vmatprep.subr.mxu0 0.0
    %3636 = vmatpush1.xpose.msra.mxu0 0.0
    %3637 = vmatprep.subr.mxu0 0.0
    %3638 = vmatpush1.xpose.msra.mxu0 0.0
    %3639 = vmatprep.subr.mxu0 0.0
    %3640 = vmatpush1.xpose.msra.mxu0 0.0
    %3641 = vmatprep.subr.mxu0 0.0
    %3642 = vmatpush1.xpose.msra.mxu0 0.0
    %3643 = vmatprep.subr.mxu0 0.0
    %3644 = vmatpush1.xpose.msra.mxu0 0.0
    %3645 = vmatprep.subr.mxu0 0.0
    %3646 = vmatpush1.xpose.msra.mxu0 0.0
    %3647 = vmatprep.subr.mxu0 0.0
    %3648 = vmatpush1.xpose.msra.mxu0 0.0
    %3649 = vmatprep.subr.mxu0 0.0
    %3650 = vmatpush1.xpose.msra.mxu0 0.0
    %3651 = vmatprep.mubr.f32.mxu0 0.0
    %3652 = vmatmul.mubr.f32.gmra.mrb[0].mxu0 %v3583
    %v3653 = vpop.f32.mrb[0].mxu0
    %v3654 = vadd.f32 %v3500, %v3653
    %v3655 = vpop.f32.mrb[0].mxu0
    %3656 = vdwg.mxu0
    %vm3657 = vcmask 57344
    %3658 = vst.msk [vmem:[%s11] sm:$0x1] %vm3657, %v3654
    // Predicated region
    $region62: #{bert_patch_forward.2} parent=1 // pred_check
      _
    $region63: #{bert_patch_forward.2} parent=1 // pred_check_branch
      %3660 = sbr.rel (0) target = $region65
    $region64: #{bert_patch_forward.2} parent=1 // pred_region
      _
    $region65: #{bert_patch_forward.2} parent=1 // pred_fallthru
      _
    // Predicated region
    $region66: #{bert_patch_forward.2} parent=1 // pred_check
      _
    $region67: #{bert_patch_forward.2} parent=1 // pred_check_branch
      %3662 = sbr.rel (0) target = $region69
    $region68: #{bert_patch_forward.2} parent=1 // pred_region
      _
    $region69: #{bert_patch_forward.2} parent=1 // pred_fallthru
      _
    %3663 = vsyncpa [#allocation4], 1
    %3664 = vsyncpa [#allocation6], 1
    %3665 = vsyncpa [#allocation9], 1

</llo_original>
